<compile_context>
chip_gen: v7x
topology: tpu7x:2x2x1
jax: 0.10.0
libtpu: 0.0.40
codegen_flags: <defaults>
</compile_context>

<pallas_src>
import jax
import jax.numpy as jnp
from jax.experimental import pallas as pl
from jax.experimental.pallas import tpu as pltpu


# ----------------------------- Pallas kernel --------------------------------

def decoder_kernel(e_ref, h0_ref, c0_ref, ctx_ref,
                   wih_ref, whh_ref, b_ref,
                   wah_ref, wac_ref, wo_ref, bo_ref,
                   logp_ref, h_out_ref, c_out_ref,
                   o_sc):
    TB, _E = e_ref.shape
    B, Hd = h0_ref.shape
    T = TB // B

    # Loop-invariant operands: load once, keep live across the recurrence.
    ctx = ctx_ref[...]                        # (B, S, H)
    whh = whh_ref[...]                        # (H, 4H)
    wah = wah_ref[...]                        # (H, H)  attn linear, h part
    wac = wac_ref[...]                        # (H, H)  attn linear, context part

    # Hoisted input projection for the whole sequence: one batched MXU matmul
    # instead of T tiny ones inside the recurrence.
    x_gates = (jnp.dot(e_ref[...], wih_ref[...],
                       preferred_element_type=jnp.float32)
               + b_ref[...])                  # (T*B, 4H)

    h = h0_ref[...]
    c = c0_ref[...]
    for t in range(T):                        # fully unrolled; T is small/static
        # ---- LSTMCell (PyTorch gate order i, f, g, o) ----
        gates = x_gates[t * B:(t + 1) * B, :] + jnp.dot(
            h, whh, preferred_element_type=jnp.float32)           # (B, 4H)
        sig = jax.nn.sigmoid(gates)           # full-tile EUP op
        tnh = jnp.tanh(gates)                 # full-tile EUP op
        i_g = sig[:, 0 * Hd:1 * Hd]
        f_g = sig[:, 1 * Hd:2 * Hd]
        g_g = tnh[:, 2 * Hd:3 * Hd]
        o_g = sig[:, 3 * Hd:4 * Hd]
        c = f_g * c + i_g * g_g
        h = o_g * jnp.tanh(c)

        # ---- Dot global attention over context (softmax over S) ----
        scores = jnp.sum(ctx * h[:, None, :], axis=-1)            # (B, S)
        scores = scores - jnp.max(scores, axis=1, keepdims=True)
        w = jnp.exp(scores)
        attn = w * pl.reciprocal(jnp.sum(w, axis=1, keepdims=True),
                                 approx=True)                     # (B, S)
        weighted = jnp.sum(attn[:, :, None] * ctx, axis=1)        # (B, H)
        o_attn = jnp.tanh(
            jnp.dot(h, wah, preferred_element_type=jnp.float32)
            + jnp.dot(weighted, wac, preferred_element_type=jnp.float32))
        o_sc[t * B:(t + 1) * B, :] = o_attn

    # Final recurrent state written exactly once.
    h_out_ref[...] = h
    c_out_ref[...] = c

    # ---- Batched vocab projection + log_softmax over all T*B rows ----
    logits = (jnp.dot(o_sc[...], wo_ref[...],
                      preferred_element_type=jnp.float32)
              + bo_ref[...])                                      # (T*B, V)
    m = jnp.max(logits, axis=-1, keepdims=True)
    shifted = logits - m
    lse = jnp.log(jnp.sum(jnp.exp(shifted), axis=-1, keepdims=True))
    logp_ref[...] = shifted - lse


# ------------------------------ wrapper --------------------------------------

def decoder_forward(x_seq, h0, c0, context, params):
    """Mirrors Decoder.forward(x_seq, h, c, context) (context required here)."""
    emb, w_ih, w_hh, bias, w_attn_t, w_out_t, b_out = params
    T, B = x_seq.shape
    E = emb.shape[1]
    Hd = h0.shape[1]
    S = context.shape[1]
    V = w_out_t.shape[1]

    # glue: embedding gather, flattened time-major to (T*B, E)
    # TODO(synk): the embedding gather stays in plain JAX (data-dependent row
    # gather; not worth a scalar-prefetch Element-spec kernel at this size).
    e_flat = emb[x_seq].reshape(T * B, E)
    # split the attention linear so the kernel avoids a lane-dim concat
    wa_h = w_attn_t[:Hd, :]
    wa_ctx = w_attn_t[Hd:, :]

    grid_spec = pltpu.PrefetchScalarGridSpec(
        num_scalar_prefetch=0,
        grid=(1,),                                        # single invocation
        in_specs=[
            pl.BlockSpec((T * B, E), lambda i: (0, 0)),        # embedded seq
            pl.BlockSpec((B, Hd), lambda i: (0, 0)),           # h0
            pl.BlockSpec((B, Hd), lambda i: (0, 0)),           # c0
            pl.BlockSpec((B, S, Hd), lambda i: (0, 0, 0)),     # context
            pl.BlockSpec((E, 4 * Hd), lambda i: (0, 0)),       # W_ih^T
            pl.BlockSpec((Hd, 4 * Hd), lambda i: (0, 0)),      # W_hh^T
            pl.BlockSpec((1, 4 * Hd), lambda i: (0, 0)),       # bias_ih + bias_hh
            pl.BlockSpec((Hd, Hd), lambda i: (0, 0)),          # attn W^T (h part)
            pl.BlockSpec((Hd, Hd), lambda i: (0, 0)),          # attn W^T (ctx part)
            pl.BlockSpec((Hd, V), lambda i: (0, 0)),           # out linear W^T
            pl.BlockSpec((1, V), lambda i: (0, 0)),            # out bias
        ],
        out_specs=[
            pl.BlockSpec((T * B, V), lambda i: (0, 0)),        # log-probs (flat)
            pl.BlockSpec((B, Hd), lambda i: (0, 0)),           # final h
            pl.BlockSpec((B, Hd), lambda i: (0, 0)),           # final c
        ],
        scratch_shapes=[
            pltpu.VMEM((T * B, Hd), jnp.float32),              # per-step attn outputs
        ],
    )

    out_shapes = (
        jax.ShapeDtypeStruct((T * B, V), jnp.float32),
        jax.ShapeDtypeStruct((B, Hd), jnp.float32),
        jax.ShapeDtypeStruct((B, Hd), jnp.float32),
    )

    logp_flat, h_f, c_f = pl.pallas_call(
        decoder_kernel,
        out_shape=out_shapes,
        grid_spec=grid_spec,
        compiler_params=pltpu.CompilerParams(
            dimension_semantics=("arbitrary",)),
    )(e_flat, h0, c0, context, w_ih, w_hh, bias, wa_h, wa_ctx, w_out_t, b_out)

    return logp_flat.reshape(T, B, V), h_f, c_f


# -------------------------- pure-JAX reference --------------------------------

def decoder_reference(x_seq, h, c, context, params):
    emb, w_ih, w_hh, bias, w_attn_t, w_out_t, b_out = params
    T = x_seq.shape[0]
    Hd = h.shape[1]
    e_seq = emb[x_seq]
    outs = []
    for t in range(T):
        e = e_seq[t]
        gates = e @ w_ih + h @ w_hh + bias[0]
        i_g = jax.nn.sigmoid(gates[:, 0 * Hd:1 * Hd])
        f_g = jax.nn.sigmoid(gates[:, 1 * Hd:2 * Hd])
        g_g = jnp.tanh(gates[:, 2 * Hd:3 * Hd])
        o_g = jax.nn.sigmoid(gates[:, 3 * Hd:4 * Hd])
        c = f_g * c + i_g * g_g
        h = o_g * jnp.tanh(c)
        scores = jnp.einsum('bsh,bh->bs', context, h)
        attn = jax.nn.softmax(scores, axis=1)
        weighted = jnp.einsum('bs,bsh->bh', attn, context)
        outs.append(jnp.tanh(jnp.concatenate([h, weighted], axis=-1) @ w_attn_t))
    o = jnp.stack(outs, 0)
    logits = o @ w_out_t + b_out[0]
    return jax.nn.log_softmax(logits, axis=-1), h, c


# --------------------------------- main ---------------------------------------

if __name__ == "__main__":
    vocab_size, d_embed, d_hidden = 128, 32, 32
    T, B, S_ctx = 8, 8, 8

    key = jax.random.PRNGKey(0)
    keys = jax.random.split(key, 12)

    # deterministic parameter init (weights stored pre-transposed: (in, out))
    emb      = 0.1 * jax.random.normal(keys[0], (vocab_size, d_embed), jnp.float32)
    w_ih     = 0.1 * jax.random.normal(keys[1], (d_embed, 4 * d_hidden), jnp.float32)
    w_hh     = 0.1 * jax.random.normal(keys[2], (d_hidden, 4 * d_hidden), jnp.float32)
    b_ih     = 0.1 * jax.random.normal(keys[3], (4 * d_hidden,), jnp.float32)
    b_hh     = 0.1 * jax.random.normal(keys[4], (4 * d_hidden,), jnp.float32)
    bias     = (b_ih + b_hh).reshape(1, 4 * d_hidden)
    w_attn_t = 0.1 * jax.random.normal(keys[5], (2 * d_hidden, d_hidden), jnp.float32)
    w_out_t  = 0.1 * jax.random.normal(keys[6], (d_hidden, vocab_size), jnp.float32)
    b_out    = 0.1 * jax.random.normal(keys[7], (1, vocab_size), jnp.float32)
    params = (emb, w_ih, w_hh, bias, w_attn_t, w_out_t, b_out)

    # inputs
    x_seq   = jax.random.randint(keys[8], (T, B), 0, vocab_size, jnp.int32)
    h0      = 0.1 * jax.random.normal(keys[9], (B, d_hidden), jnp.float32)
    c0      = 0.1 * jax.random.normal(keys[10], (B, d_hidden), jnp.float32)
    context = 0.1 * jax.random.normal(keys[11], (B, S_ctx, d_hidden), jnp.float32)

    logp, h_f, c_f = decoder_forward(x_seq, h0, c0, context, params)
    jax.block_until_ready((logp, h_f, c_f))

    logp_ref, h_ref, c_ref = decoder_reference(x_seq, h0, c0, context, params)
    assert logp.shape == (T, B, vocab_size)
    # logp tolerance is slightly loose because the attention softmax uses the
    # EUP approximate reciprocal; h/c follow the exact path.
    assert jnp.allclose(logp, logp_ref, atol=2e-3, rtol=2e-3)
    assert jnp.allclose(h_f, h_ref, atol=1e-4, rtol=1e-4)
    assert jnp.allclose(c_f, c_ref, atol=1e-4, rtol=1e-4)

    print("KERNEL_OK")
</pallas_src>

<mosaic_0001>
module attributes {stable_mosaic.version = 11 : i64} {
  func.func @decoder_kernel(%arg0: i32, %arg1: memref<64x32xf32, #tpu.memory_space<vmem>>, %arg2: memref<8x32xf32, #tpu.memory_space<vmem>>, %arg3: memref<8x32xf32, #tpu.memory_space<vmem>>, %arg4: memref<8x8x32xf32, #tpu.memory_space<vmem>>, %arg5: memref<32x128xf32, #tpu.memory_space<vmem>>, %arg6: memref<32x128xf32, #tpu.memory_space<vmem>>, %arg7: memref<1x128xf32, #tpu.memory_space<vmem>>, %arg8: memref<32x32xf32, #tpu.memory_space<vmem>>, %arg9: memref<32x32xf32, #tpu.memory_space<vmem>>, %arg10: memref<32x128xf32, #tpu.memory_space<vmem>>, %arg11: memref<1x128xf32, #tpu.memory_space<vmem>>, %arg12: memref<64x128xf32, #tpu.memory_space<vmem>>, %arg13: memref<8x32xf32, #tpu.memory_space<vmem>>, %arg14: memref<8x32xf32, #tpu.memory_space<vmem>>, %arg15: memref<64x32xf32, #tpu.memory_space<vmem>>) attributes {dimension_semantics = [#tpu.dimension_semantics<arbitrary>], iteration_bounds = array<i64: 1>, scalar_prefetch = 0 : i64, scratch_operands = 1 : i64, tpu.core_type = #tpu.core_type<tc>, window_params = [{pipeline_mode = #tpu.pipeline_mode<synchronous>, transform_indices = @transform_0, window_bounds = array<i64: 64, 32>}, {pipeline_mode = #tpu.pipeline_mode<synchronous>, transform_indices = @transform_1, window_bounds = array<i64: 8, 32>}, {pipeline_mode = #tpu.pipeline_mode<synchronous>, transform_indices = @transform_2, window_bounds = array<i64: 8, 32>}, {pipeline_mode = #tpu.pipeline_mode<synchronous>, transform_indices = @transform_3, window_bounds = array<i64: 8, 8, 32>}, {pipeline_mode = #tpu.pipeline_mode<synchronous>, transform_indices = @transform_4, window_bounds = array<i64: 32, 128>}, {pipeline_mode = #tpu.pipeline_mode<synchronous>, transform_indices = @transform_5, window_bounds = array<i64: 32, 128>}, {pipeline_mode = #tpu.pipeline_mode<synchronous>, transform_indices = @transform_6, window_bounds = array<i64: 1, 128>}, {pipeline_mode = #tpu.pipeline_mode<synchronous>, transform_indices = @transform_7, window_bounds = array<i64: 32, 32>}, {pipeline_mode = #tpu.pipeline_mode<synchronous>, transform_indices = @transform_8, window_bounds = array<i64: 32, 32>}, {pipeline_mode = #tpu.pipeline_mode<synchronous>, transform_indices = @transform_9, window_bounds = array<i64: 32, 128>}, {pipeline_mode = #tpu.pipeline_mode<synchronous>, transform_indices = @transform_10, window_bounds = array<i64: 1, 128>}, {pipeline_mode = #tpu.pipeline_mode<synchronous>, transform_indices = @transform_11, window_bounds = array<i64: 64, 128>}, {pipeline_mode = #tpu.pipeline_mode<synchronous>, transform_indices = @transform_12, window_bounds = array<i64: 8, 32>}, {pipeline_mode = #tpu.pipeline_mode<synchronous>, transform_indices = @transform_13, window_bounds = array<i64: 8, 32>}]} {
    %c0 = arith.constant 0 : index
    %c0_0 = arith.constant 0 : index
    %c0_1 = arith.constant 0 : index
    %0 = vector.load %arg4[%c0, %c0_0, %c0_1] : memref<8x8x32xf32, #tpu.memory_space<vmem>>, vector<8x8x32xf32>
    %c0_2 = arith.constant 0 : index
    %c0_3 = arith.constant 0 : index
    %1 = vector.load %arg6[%c0_2, %c0_3] : memref<32x128xf32, #tpu.memory_space<vmem>>, vector<32x128xf32>
    %c0_4 = arith.constant 0 : index
    %c0_5 = arith.constant 0 : index
    %2 = vector.load %arg8[%c0_4, %c0_5] : memref<32x32xf32, #tpu.memory_space<vmem>>, vector<32x32xf32>
    %c0_6 = arith.constant 0 : index
    %c0_7 = arith.constant 0 : index
    %3 = vector.load %arg9[%c0_6, %c0_7] : memref<32x32xf32, #tpu.memory_space<vmem>>, vector<32x32xf32>
    %c0_8 = arith.constant 0 : index
    %c0_9 = arith.constant 0 : index
    %4 = vector.load %arg1[%c0_8, %c0_9] : memref<64x32xf32, #tpu.memory_space<vmem>>, vector<64x32xf32>
    %c0_10 = arith.constant 0 : index
    %c0_11 = arith.constant 0 : index
    %5 = vector.load %arg5[%c0_10, %c0_11] : memref<32x128xf32, #tpu.memory_space<vmem>>, vector<32x128xf32>
    %cst = arith.constant dense<0.000000e+00> : vector<64x128xf32>
    %6 = tpu.matmul %4, %5, %cst {dimension_numbers = #tpu.dot_dimension_numbers<[1], [0], [0], [1], [0, 0, 1, 1], [], []>} : vector<64x32xf32>, vector<32x128xf32>, vector<64x128xf32> -> vector<64x128xf32>
    %c0_12 = arith.constant 0 : index
    %c0_13 = arith.constant 0 : index
    %7 = vector.load %arg7[%c0_12, %c0_13] : memref<1x128xf32, #tpu.memory_space<vmem>>, vector<1x128xf32>
    %8 = vector.broadcast %7 : vector<1x128xf32> to vector<64x128xf32>
    %9 = arith.addf %6, %8 : vector<64x128xf32>
    %c0_14 = arith.constant 0 : index
    %c0_15 = arith.constant 0 : index
    %10 = vector.load %arg2[%c0_14, %c0_15] : memref<8x32xf32, #tpu.memory_space<vmem>>, vector<8x32xf32>
    %c0_16 = arith.constant 0 : index
    %c0_17 = arith.constant 0 : index
    %11 = vector.load %arg3[%c0_16, %c0_17] : memref<8x32xf32, #tpu.memory_space<vmem>>, vector<8x32xf32>
    %12 = vector.extract_strided_slice %9 {offsets = [0, 0], sizes = [8, 128], strides = [1, 1]} : vector<64x128xf32> to vector<8x128xf32>
    %cst_18 = arith.constant dense<0.000000e+00> : vector<8x128xf32>
    %13 = tpu.matmul %10, %1, %cst_18 {dimension_numbers = #tpu.dot_dimension_numbers<[1], [0], [0], [1], [0, 0, 1, 1], [], []>} : vector<8x32xf32>, vector<32x128xf32>, vector<8x128xf32> -> vector<8x128xf32>
    %14 = arith.addf %12, %13 : vector<8x128xf32>
    %15 = arith.negf %14 : vector<8x128xf32>
    %16 = math.exp %15 : vector<8x128xf32>
    %cst_19 = arith.constant 1.000000e+00 : f32
    %17 = vector.broadcast %cst_19 : f32 to vector<8x128xf32>
    %18 = arith.addf %17, %16 : vector<8x128xf32>
    %19 = arith.divf %17, %18 : vector<8x128xf32>
    %20 = math.tanh %14 : vector<8x128xf32>
    %21 = vector.extract_strided_slice %19 {offsets = [0, 0], sizes = [8, 32], strides = [1, 1]} : vector<8x128xf32> to vector<8x32xf32>
    %22 = vector.extract_strided_slice %19 {offsets = [0, 32], sizes = [8, 32], strides = [1, 1]} : vector<8x128xf32> to vector<8x32xf32>
    %23 = vector.extract_strided_slice %20 {offsets = [0, 64], sizes = [8, 32], strides = [1, 1]} : vector<8x128xf32> to vector<8x32xf32>
    %24 = vector.extract_strided_slice %19 {offsets = [0, 96], sizes = [8, 32], strides = [1, 1]} : vector<8x128xf32> to vector<8x32xf32>
    %25 = arith.mulf %22, %11 : vector<8x32xf32>
    %26 = arith.mulf %21, %23 : vector<8x32xf32>
    %27 = arith.addf %25, %26 : vector<8x32xf32>
    %28 = math.tanh %27 : vector<8x32xf32>
    %29 = arith.mulf %24, %28 : vector<8x32xf32>
    %30 = vector.shape_cast %29 : vector<8x32xf32> to vector<8x1x32xf32>
    %31 = vector.broadcast %30 : vector<8x1x32xf32> to vector<8x8x32xf32>
    %32 = arith.mulf %0, %31 : vector<8x8x32xf32>
    %cst_20 = arith.constant dense<0.000000e+00> : vector<8x8xf32>
    %33 = vector.multi_reduction <add>, %32, %cst_20 [2] : vector<8x8x32xf32> to vector<8x8xf32>
    %cst_21 = arith.constant dense<0xFF800000> : vector<8xf32>
    %34 = vector.multi_reduction <maximumf>, %33, %cst_21 [1] : vector<8x8xf32> to vector<8xf32>
    %35 = vector.shape_cast %34 : vector<8xf32> to vector<8x1xf32>
    %36 = vector.broadcast %35 : vector<8x1xf32> to vector<8x8xf32>
    %37 = arith.subf %33, %36 : vector<8x8xf32>
    %38 = math.exp %37 : vector<8x8xf32>
    %cst_22 = arith.constant dense<0.000000e+00> : vector<8xf32>
    %39 = vector.multi_reduction <add>, %38, %cst_22 [1] : vector<8x8xf32> to vector<8xf32>
    %40 = vector.shape_cast %39 : vector<8xf32> to vector<8x1xf32>
    %41 = tpu.reciprocal %40 {approx = true} : vector<8x1xf32> -> vector<8x1xf32>
    %42 = vector.broadcast %41 : vector<8x1xf32> to vector<8x8xf32>
    %43 = arith.mulf %38, %42 : vector<8x8xf32>
    %44 = vector.shape_cast %43 : vector<8x8xf32> to vector<8x8x1xf32>
    %45 = vector.broadcast %44 : vector<8x8x1xf32> to vector<8x8x32xf32>
    %46 = arith.mulf %45, %0 : vector<8x8x32xf32>
    %cst_23 = arith.constant dense<0.000000e+00> : vector<8x32xf32>
    %47 = vector.multi_reduction <add>, %46, %cst_23 [1] : vector<8x8x32xf32> to vector<8x32xf32>
    %cst_24 = arith.constant dense<0.000000e+00> : vector<8x32xf32>
    %48 = tpu.matmul %29, %2, %cst_24 {dimension_numbers = #tpu.dot_dimension_numbers<[1], [0], [0], [1], [0, 0, 1, 1], [], []>} : vector<8x32xf32>, vector<32x32xf32>, vector<8x32xf32> -> vector<8x32xf32>
    %cst_25 = arith.constant dense<0.000000e+00> : vector<8x32xf32>
    %49 = tpu.matmul %47, %3, %cst_25 {dimension_numbers = #tpu.dot_dimension_numbers<[1], [0], [0], [1], [0, 0, 1, 1], [], []>} : vector<8x32xf32>, vector<32x32xf32>, vector<8x32xf32> -> vector<8x32xf32>
    %50 = arith.addf %48, %49 : vector<8x32xf32>
    %51 = math.tanh %50 : vector<8x32xf32>
    %c0_26 = arith.constant 0 : index
    %c0_27 = arith.constant 0 : index
    %52 = vector.load %arg15[%c0_26, %c0_27] : memref<64x32xf32, #tpu.memory_space<vmem>>, vector<8x32xf32>
    tpu.vector_store %arg15[%c0_26, %c0_27], %51 {strides = array<i32>} : memref<64x32xf32, #tpu.memory_space<vmem>>, vector<8x32xf32>,
    %53 = vector.extract_strided_slice %9 {offsets = [8, 0], sizes = [8, 128], strides = [1, 1]} : vector<64x128xf32> to vector<8x128xf32>
    %cst_28 = arith.constant dense<0.000000e+00> : vector<8x128xf32>
    %54 = tpu.matmul %29, %1, %cst_28 {dimension_numbers = #tpu.dot_dimension_numbers<[1], [0], [0], [1], [0, 0, 1, 1], [], []>} : vector<8x32xf32>, vector<32x128xf32>, vector<8x128xf32> -> vector<8x128xf32>
    %55 = arith.addf %53, %54 : vector<8x128xf32>
    %56 = arith.negf %55 : vector<8x128xf32>
    %57 = math.exp %56 : vector<8x128xf32>
    %cst_29 = arith.constant 1.000000e+00 : f32
    %58 = vector.broadcast %cst_29 : f32 to vector<8x128xf32>
    %59 = arith.addf %58, %57 : vector<8x128xf32>
    %60 = arith.divf %58, %59 : vector<8x128xf32>
    %61 = math.tanh %55 : vector<8x128xf32>
    %62 = vector.extract_strided_slice %60 {offsets = [0, 0], sizes = [8, 32], strides = [1, 1]} : vector<8x128xf32> to vector<8x32xf32>
    %63 = vector.extract_strided_slice %60 {offsets = [0, 32], sizes = [8, 32], strides = [1, 1]} : vector<8x128xf32> to vector<8x32xf32>
    %64 = vector.extract_strided_slice %61 {offsets = [0, 64], sizes = [8, 32], strides = [1, 1]} : vector<8x128xf32> to vector<8x32xf32>
    %65 = vector.extract_strided_slice %60 {offsets = [0, 96], sizes = [8, 32], strides = [1, 1]} : vector<8x128xf32> to vector<8x32xf32>
    %66 = arith.mulf %63, %27 : vector<8x32xf32>
    %67 = arith.mulf %62, %64 : vector<8x32xf32>
    %68 = arith.addf %66, %67 : vector<8x32xf32>
    %69 = math.tanh %68 : vector<8x32xf32>
    %70 = arith.mulf %65, %69 : vector<8x32xf32>
    %71 = vector.shape_cast %70 : vector<8x32xf32> to vector<8x1x32xf32>
    %72 = vector.broadcast %71 : vector<8x1x32xf32> to vector<8x8x32xf32>
    %73 = arith.mulf %0, %72 : vector<8x8x32xf32>
    %cst_30 = arith.constant dense<0.000000e+00> : vector<8x8xf32>
    %74 = vector.multi_reduction <add>, %73, %cst_30 [2] : vector<8x8x32xf32> to vector<8x8xf32>
    %cst_31 = arith.constant dense<0xFF800000> : vector<8xf32>
    %75 = vector.multi_reduction <maximumf>, %74, %cst_31 [1] : vector<8x8xf32> to vector<8xf32>
    %76 = vector.shape_cast %75 : vector<8xf32> to vector<8x1xf32>
    %77 = vector.broadcast %76 : vector<8x1xf32> to vector<8x8xf32>
    %78 = arith.subf %74, %77 : vector<8x8xf32>
    %79 = math.exp %78 : vector<8x8xf32>
    %cst_32 = arith.constant dense<0.000000e+00> : vector<8xf32>
    %80 = vector.multi_reduction <add>, %79, %cst_32 [1] : vector<8x8xf32> to vector<8xf32>
    %81 = vector.shape_cast %80 : vector<8xf32> to vector<8x1xf32>
    %82 = tpu.reciprocal %81 {approx = true} : vector<8x1xf32> -> vector<8x1xf32>
    %83 = vector.broadcast %82 : vector<8x1xf32> to vector<8x8xf32>
    %84 = arith.mulf %79, %83 : vector<8x8xf32>
    %85 = vector.shape_cast %84 : vector<8x8xf32> to vector<8x8x1xf32>
    %86 = vector.broadcast %85 : vector<8x8x1xf32> to vector<8x8x32xf32>
    %87 = arith.mulf %86, %0 : vector<8x8x32xf32>
    %cst_33 = arith.constant dense<0.000000e+00> : vector<8x32xf32>
    %88 = vector.multi_reduction <add>, %87, %cst_33 [1] : vector<8x8x32xf32> to vector<8x32xf32>
    %cst_34 = arith.constant dense<0.000000e+00> : vector<8x32xf32>
    %89 = tpu.matmul %70, %2, %cst_34 {dimension_numbers = #tpu.dot_dimension_numbers<[1], [0], [0], [1], [0, 0, 1, 1], [], []>} : vector<8x32xf32>, vector<32x32xf32>, vector<8x32xf32> -> vector<8x32xf32>
    %cst_35 = arith.constant dense<0.000000e+00> : vector<8x32xf32>
    %90 = tpu.matmul %88, %3, %cst_35 {dimension_numbers = #tpu.dot_dimension_numbers<[1], [0], [0], [1], [0, 0, 1, 1], [], []>} : vector<8x32xf32>, vector<32x32xf32>, vector<8x32xf32> -> vector<8x32xf32>
    %91 = arith.addf %89, %90 : vector<8x32xf32>
    %92 = math.tanh %91 : vector<8x32xf32>
    %c8 = arith.constant 8 : index
    %c0_36 = arith.constant 0 : index
    %93 = vector.load %arg15[%c8, %c0_36] : memref<64x32xf32, #tpu.memory_space<vmem>>, vector<8x32xf32>
    tpu.vector_store %arg15[%c8, %c0_36], %92 {strides = array<i32>} : memref<64x32xf32, #tpu.memory_space<vmem>>, vector<8x32xf32>,
    %94 = vector.extract_strided_slice %9 {offsets = [16, 0], sizes = [8, 128], strides = [1, 1]} : vector<64x128xf32> to vector<8x128xf32>
    %cst_37 = arith.constant dense<0.000000e+00> : vector<8x128xf32>
    %95 = tpu.matmul %70, %1, %cst_37 {dimension_numbers = #tpu.dot_dimension_numbers<[1], [0], [0], [1], [0, 0, 1, 1], [], []>} : vector<8x32xf32>, vector<32x128xf32>, vector<8x128xf32> -> vector<8x128xf32>
    %96 = arith.addf %94, %95 : vector<8x128xf32>
    %97 = arith.negf %96 : vector<8x128xf32>
    %98 = math.exp %97 : vector<8x128xf32>
    %cst_38 = arith.constant 1.000000e+00 : f32
    %99 = vector.broadcast %cst_38 : f32 to vector<8x128xf32>
    %100 = arith.addf %99, %98 : vector<8x128xf32>
    %101 = arith.divf %99, %100 : vector<8x128xf32>
    %102 = math.tanh %96 : vector<8x128xf32>
    %103 = vector.extract_strided_slice %101 {offsets = [0, 0], sizes = [8, 32], strides = [1, 1]} : vector<8x128xf32> to vector<8x32xf32>
    %104 = vector.extract_strided_slice %101 {offsets = [0, 32], sizes = [8, 32], strides = [1, 1]} : vector<8x128xf32> to vector<8x32xf32>
    %105 = vector.extract_strided_slice %102 {offsets = [0, 64], sizes = [8, 32], strides = [1, 1]} : vector<8x128xf32> to vector<8x32xf32>
    %106 = vector.extract_strided_slice %101 {offsets = [0, 96], sizes = [8, 32], strides = [1, 1]} : vector<8x128xf32> to vector<8x32xf32>
    %107 = arith.mulf %104, %68 : vector<8x32xf32>
    %108 = arith.mulf %103, %105 : vector<8x32xf32>
    %109 = arith.addf %107, %108 : vector<8x32xf32>
    %110 = math.tanh %109 : vector<8x32xf32>
    %111 = arith.mulf %106, %110 : vector<8x32xf32>
    %112 = vector.shape_cast %111 : vector<8x32xf32> to vector<8x1x32xf32>
    %113 = vector.broadcast %112 : vector<8x1x32xf32> to vector<8x8x32xf32>
    %114 = arith.mulf %0, %113 : vector<8x8x32xf32>
    %cst_39 = arith.constant dense<0.000000e+00> : vector<8x8xf32>
    %115 = vector.multi_reduction <add>, %114, %cst_39 [2] : vector<8x8x32xf32> to vector<8x8xf32>
    %cst_40 = arith.constant dense<0xFF800000> : vector<8xf32>
    %116 = vector.multi_reduction <maximumf>, %115, %cst_40 [1] : vector<8x8xf32> to vector<8xf32>
    %117 = vector.shape_cast %116 : vector<8xf32> to vector<8x1xf32>
    %118 = vector.broadcast %117 : vector<8x1xf32> to vector<8x8xf32>
    %119 = arith.subf %115, %118 : vector<8x8xf32>
    %120 = math.exp %119 : vector<8x8xf32>
    %cst_41 = arith.constant dense<0.000000e+00> : vector<8xf32>
    %121 = vector.multi_reduction <add>, %120, %cst_41 [1] : vector<8x8xf32> to vector<8xf32>
    %122 = vector.shape_cast %121 : vector<8xf32> to vector<8x1xf32>
    %123 = tpu.reciprocal %122 {approx = true} : vector<8x1xf32> -> vector<8x1xf32>
    %124 = vector.broadcast %123 : vector<8x1xf32> to vector<8x8xf32>
    %125 = arith.mulf %120, %124 : vector<8x8xf32>
    %126 = vector.shape_cast %125 : vector<8x8xf32> to vector<8x8x1xf32>
    %127 = vector.broadcast %126 : vector<8x8x1xf32> to vector<8x8x32xf32>
    %128 = arith.mulf %127, %0 : vector<8x8x32xf32>
    %cst_42 = arith.constant dense<0.000000e+00> : vector<8x32xf32>
    %129 = vector.multi_reduction <add>, %128, %cst_42 [1] : vector<8x8x32xf32> to vector<8x32xf32>
    %cst_43 = arith.constant dense<0.000000e+00> : vector<8x32xf32>
    %130 = tpu.matmul %111, %2, %cst_43 {dimension_numbers = #tpu.dot_dimension_numbers<[1], [0], [0], [1], [0, 0, 1, 1], [], []>} : vector<8x32xf32>, vector<32x32xf32>, vector<8x32xf32> -> vector<8x32xf32>
    %cst_44 = arith.constant dense<0.000000e+00> : vector<8x32xf32>
    %131 = tpu.matmul %129, %3, %cst_44 {dimension_numbers = #tpu.dot_dimension_numbers<[1], [0], [0], [1], [0, 0, 1, 1], [], []>} : vector<8x32xf32>, vector<32x32xf32>, vector<8x32xf32> -> vector<8x32xf32>
    %132 = arith.addf %130, %131 : vector<8x32xf32>
    %133 = math.tanh %132 : vector<8x32xf32>
    %c16 = arith.constant 16 : index
    %c0_45 = arith.constant 0 : index
    %134 = vector.load %arg15[%c16, %c0_45] : memref<64x32xf32, #tpu.memory_space<vmem>>, vector<8x32xf32>
    tpu.vector_store %arg15[%c16, %c0_45], %133 {strides = array<i32>} : memref<64x32xf32, #tpu.memory_space<vmem>>, vector<8x32xf32>,
    %135 = vector.extract_strided_slice %9 {offsets = [24, 0], sizes = [8, 128], strides = [1, 1]} : vector<64x128xf32> to vector<8x128xf32>
    %cst_46 = arith.constant dense<0.000000e+00> : vector<8x128xf32>
    %136 = tpu.matmul %111, %1, %cst_46 {dimension_numbers = #tpu.dot_dimension_numbers<[1], [0], [0], [1], [0, 0, 1, 1], [], []>} : vector<8x32xf32>, vector<32x128xf32>, vector<8x128xf32> -> vector<8x128xf32>
    %137 = arith.addf %135, %136 : vector<8x128xf32>
    %138 = arith.negf %137 : vector<8x128xf32>
    %139 = math.exp %138 : vector<8x128xf32>
    %cst_47 = arith.constant 1.000000e+00 : f32
    %140 = vector.broadcast %cst_47 : f32 to vector<8x128xf32>
    %141 = arith.addf %140, %139 : vector<8x128xf32>
    %142 = arith.divf %140, %141 : vector<8x128xf32>
    %143 = math.tanh %137 : vector<8x128xf32>
    %144 = vector.extract_strided_slice %142 {offsets = [0, 0], sizes = [8, 32], strides = [1, 1]} : vector<8x128xf32> to vector<8x32xf32>
    %145 = vector.extract_strided_slice %142 {offsets = [0, 32], sizes = [8, 32], strides = [1, 1]} : vector<8x128xf32> to vector<8x32xf32>
    %146 = vector.extract_strided_slice %143 {offsets = [0, 64], sizes = [8, 32], strides = [1, 1]} : vector<8x128xf32> to vector<8x32xf32>
    %147 = vector.extract_strided_slice %142 {offsets = [0, 96], sizes = [8, 32], strides = [1, 1]} : vector<8x128xf32> to vector<8x32xf32>
    %148 = arith.mulf %145, %109 : vector<8x32xf32>
    %149 = arith.mulf %144, %146 : vector<8x32xf32>
    %150 = arith.addf %148, %149 : vector<8x32xf32>
    %151 = math.tanh %150 : vector<8x32xf32>
    %152 = arith.mulf %147, %151 : vector<8x32xf32>
    %153 = vector.shape_cast %152 : vector<8x32xf32> to vector<8x1x32xf32>
    %154 = vector.broadcast %153 : vector<8x1x32xf32> to vector<8x8x32xf32>
    %155 = arith.mulf %0, %154 : vector<8x8x32xf32>
    %cst_48 = arith.constant dense<0.000000e+00> : vector<8x8xf32>
    %156 = vector.multi_reduction <add>, %155, %cst_48 [2] : vector<8x8x32xf32> to vector<8x8xf32>
    %cst_49 = arith.constant dense<0xFF800000> : vector<8xf32>
    %157 = vector.multi_reduction <maximumf>, %156, %cst_49 [1] : vector<8x8xf32> to vector<8xf32>
    %158 = vector.shape_cast %157 : vector<8xf32> to vector<8x1xf32>
    %159 = vector.broadcast %158 : vector<8x1xf32> to vector<8x8xf32>
    %160 = arith.subf %156, %159 : vector<8x8xf32>
    %161 = math.exp %160 : vector<8x8xf32>
    %cst_50 = arith.constant dense<0.000000e+00> : vector<8xf32>
    %162 = vector.multi_reduction <add>, %161, %cst_50 [1] : vector<8x8xf32> to vector<8xf32>
    %163 = vector.shape_cast %162 : vector<8xf32> to vector<8x1xf32>
    %164 = tpu.reciprocal %163 {approx = true} : vector<8x1xf32> -> vector<8x1xf32>
    %165 = vector.broadcast %164 : vector<8x1xf32> to vector<8x8xf32>
    %166 = arith.mulf %161, %165 : vector<8x8xf32>
    %167 = vector.shape_cast %166 : vector<8x8xf32> to vector<8x8x1xf32>
    %168 = vector.broadcast %167 : vector<8x8x1xf32> to vector<8x8x32xf32>
    %169 = arith.mulf %168, %0 : vector<8x8x32xf32>
    %cst_51 = arith.constant dense<0.000000e+00> : vector<8x32xf32>
    %170 = vector.multi_reduction <add>, %169, %cst_51 [1] : vector<8x8x32xf32> to vector<8x32xf32>
    %cst_52 = arith.constant dense<0.000000e+00> : vector<8x32xf32>
    %171 = tpu.matmul %152, %2, %cst_52 {dimension_numbers = #tpu.dot_dimension_numbers<[1], [0], [0], [1], [0, 0, 1, 1], [], []>} : vector<8x32xf32>, vector<32x32xf32>, vector<8x32xf32> -> vector<8x32xf32>
    %cst_53 = arith.constant dense<0.000000e+00> : vector<8x32xf32>
    %172 = tpu.matmul %170, %3, %cst_53 {dimension_numbers = #tpu.dot_dimension_numbers<[1], [0], [0], [1], [0, 0, 1, 1], [], []>} : vector<8x32xf32>, vector<32x32xf32>, vector<8x32xf32> -> vector<8x32xf32>
    %173 = arith.addf %171, %172 : vector<8x32xf32>
    %174 = math.tanh %173 : vector<8x32xf32>
    %c24 = arith.constant 24 : index
    %c0_54 = arith.constant 0 : index
    %175 = vector.load %arg15[%c24, %c0_54] : memref<64x32xf32, #tpu.memory_space<vmem>>, vector<8x32xf32>
    tpu.vector_store %arg15[%c24, %c0_54], %174 {strides = array<i32>} : memref<64x32xf32, #tpu.memory_space<vmem>>, vector<8x32xf32>,
    %176 = vector.extract_strided_slice %9 {offsets = [32, 0], sizes = [8, 128], strides = [1, 1]} : vector<64x128xf32> to vector<8x128xf32>
    %cst_55 = arith.constant dense<0.000000e+00> : vector<8x128xf32>
    %177 = tpu.matmul %152, %1, %cst_55 {dimension_numbers = #tpu.dot_dimension_numbers<[1], [0], [0], [1], [0, 0, 1, 1], [], []>} : vector<8x32xf32>, vector<32x128xf32>, vector<8x128xf32> -> vector<8x128xf32>
    %178 = arith.addf %176, %177 : vector<8x128xf32>
    %179 = arith.negf %178 : vector<8x128xf32>
    %180 = math.exp %179 : vector<8x128xf32>
    %cst_56 = arith.constant 1.000000e+00 : f32
    %181 = vector.broadcast %cst_56 : f32 to vector<8x128xf32>
    %182 = arith.addf %181, %180 : vector<8x128xf32>
    %183 = arith.divf %181, %182 : vector<8x128xf32>
    %184 = math.tanh %178 : vector<8x128xf32>
    %185 = vector.extract_strided_slice %183 {offsets = [0, 0], sizes = [8, 32], strides = [1, 1]} : vector<8x128xf32> to vector<8x32xf32>
    %186 = vector.extract_strided_slice %183 {offsets = [0, 32], sizes = [8, 32], strides = [1, 1]} : vector<8x128xf32> to vector<8x32xf32>
    %187 = vector.extract_strided_slice %184 {offsets = [0, 64], sizes = [8, 32], strides = [1, 1]} : vector<8x128xf32> to vector<8x32xf32>
    %188 = vector.extract_strided_slice %183 {offsets = [0, 96], sizes = [8, 32], strides = [1, 1]} : vector<8x128xf32> to vector<8x32xf32>
    %189 = arith.mulf %186, %150 : vector<8x32xf32>
    %190 = arith.mulf %185, %187 : vector<8x32xf32>
    %191 = arith.addf %189, %190 : vector<8x32xf32>
    %192 = math.tanh %191 : vector<8x32xf32>
    %193 = arith.mulf %188, %192 : vector<8x32xf32>
    %194 = vector.shape_cast %193 : vector<8x32xf32> to vector<8x1x32xf32>
    %195 = vector.broadcast %194 : vector<8x1x32xf32> to vector<8x8x32xf32>
    %196 = arith.mulf %0, %195 : vector<8x8x32xf32>
    %cst_57 = arith.constant dense<0.000000e+00> : vector<8x8xf32>
    %197 = vector.multi_reduction <add>, %196, %cst_57 [2] : vector<8x8x32xf32> to vector<8x8xf32>
    %cst_58 = arith.constant dense<0xFF800000> : vector<8xf32>
    %198 = vector.multi_reduction <maximumf>, %197, %cst_58 [1] : vector<8x8xf32> to vector<8xf32>
    %199 = vector.shape_cast %198 : vector<8xf32> to vector<8x1xf32>
    %200 = vector.broadcast %199 : vector<8x1xf32> to vector<8x8xf32>
    %201 = arith.subf %197, %200 : vector<8x8xf32>
    %202 = math.exp %201 : vector<8x8xf32>
    %cst_59 = arith.constant dense<0.000000e+00> : vector<8xf32>
    %203 = vector.multi_reduction <add>, %202, %cst_59 [1] : vector<8x8xf32> to vector<8xf32>
    %204 = vector.shape_cast %203 : vector<8xf32> to vector<8x1xf32>
    %205 = tpu.reciprocal %204 {approx = true} : vector<8x1xf32> -> vector<8x1xf32>
    %206 = vector.broadcast %205 : vector<8x1xf32> to vector<8x8xf32>
    %207 = arith.mulf %202, %206 : vector<8x8xf32>
    %208 = vector.shape_cast %207 : vector<8x8xf32> to vector<8x8x1xf32>
    %209 = vector.broadcast %208 : vector<8x8x1xf32> to vector<8x8x32xf32>
    %210 = arith.mulf %209, %0 : vector<8x8x32xf32>
    %cst_60 = arith.constant dense<0.000000e+00> : vector<8x32xf32>
    %211 = vector.multi_reduction <add>, %210, %cst_60 [1] : vector<8x8x32xf32> to vector<8x32xf32>
    %cst_61 = arith.constant dense<0.000000e+00> : vector<8x32xf32>
    %212 = tpu.matmul %193, %2, %cst_61 {dimension_numbers = #tpu.dot_dimension_numbers<[1], [0], [0], [1], [0, 0, 1, 1], [], []>} : vector<8x32xf32>, vector<32x32xf32>, vector<8x32xf32> -> vector<8x32xf32>
    %cst_62 = arith.constant dense<0.000000e+00> : vector<8x32xf32>
    %213 = tpu.matmul %211, %3, %cst_62 {dimension_numbers = #tpu.dot_dimension_numbers<[1], [0], [0], [1], [0, 0, 1, 1], [], []>} : vector<8x32xf32>, vector<32x32xf32>, vector<8x32xf32> -> vector<8x32xf32>
    %214 = arith.addf %212, %213 : vector<8x32xf32>
    %215 = math.tanh %214 : vector<8x32xf32>
    %c32 = arith.constant 32 : index
    %c0_63 = arith.constant 0 : index
    %216 = vector.load %arg15[%c32, %c0_63] : memref<64x32xf32, #tpu.memory_space<vmem>>, vector<8x32xf32>
    tpu.vector_store %arg15[%c32, %c0_63], %215 {strides = array<i32>} : memref<64x32xf32, #tpu.memory_space<vmem>>, vector<8x32xf32>,
    %217 = vector.extract_strided_slice %9 {offsets = [40, 0], sizes = [8, 128], strides = [1, 1]} : vector<64x128xf32> to vector<8x128xf32>
    %cst_64 = arith.constant dense<0.000000e+00> : vector<8x128xf32>
    %218 = tpu.matmul %193, %1, %cst_64 {dimension_numbers = #tpu.dot_dimension_numbers<[1], [0], [0], [1], [0, 0, 1, 1], [], []>} : vector<8x32xf32>, vector<32x128xf32>, vector<8x128xf32> -> vector<8x128xf32>
    %219 = arith.addf %217, %218 : vector<8x128xf32>
    %220 = arith.negf %219 : vector<8x128xf32>
    %221 = math.exp %220 : vector<8x128xf32>
    %cst_65 = arith.constant 1.000000e+00 : f32
    %222 = vector.broadcast %cst_65 : f32 to vector<8x128xf32>
    %223 = arith.addf %222, %221 : vector<8x128xf32>
    %224 = arith.divf %222, %223 : vector<8x128xf32>
    %225 = math.tanh %219 : vector<8x128xf32>
    %226 = vector.extract_strided_slice %224 {offsets = [0, 0], sizes = [8, 32], strides = [1, 1]} : vector<8x128xf32> to vector<8x32xf32>
    %227 = vector.extract_strided_slice %224 {offsets = [0, 32], sizes = [8, 32], strides = [1, 1]} : vector<8x128xf32> to vector<8x32xf32>
    %228 = vector.extract_strided_slice %225 {offsets = [0, 64], sizes = [8, 32], strides = [1, 1]} : vector<8x128xf32> to vector<8x32xf32>
    %229 = vector.extract_strided_slice %224 {offsets = [0, 96], sizes = [8, 32], strides = [1, 1]} : vector<8x128xf32> to vector<8x32xf32>
    %230 = arith.mulf %227, %191 : vector<8x32xf32>
    %231 = arith.mulf %226, %228 : vector<8x32xf32>
    %232 = arith.addf %230, %231 : vector<8x32xf32>
    %233 = math.tanh %232 : vector<8x32xf32>
    %234 = arith.mulf %229, %233 : vector<8x32xf32>
    %235 = vector.shape_cast %234 : vector<8x32xf32> to vector<8x1x32xf32>
    %236 = vector.broadcast %235 : vector<8x1x32xf32> to vector<8x8x32xf32>
    %237 = arith.mulf %0, %236 : vector<8x8x32xf32>
    %cst_66 = arith.constant dense<0.000000e+00> : vector<8x8xf32>
    %238 = vector.multi_reduction <add>, %237, %cst_66 [2] : vector<8x8x32xf32> to vector<8x8xf32>
    %cst_67 = arith.constant dense<0xFF800000> : vector<8xf32>
    %239 = vector.multi_reduction <maximumf>, %238, %cst_67 [1] : vector<8x8xf32> to vector<8xf32>
    %240 = vector.shape_cast %239 : vector<8xf32> to vector<8x1xf32>
    %241 = vector.broadcast %240 : vector<8x1xf32> to vector<8x8xf32>
    %242 = arith.subf %238, %241 : vector<8x8xf32>
    %243 = math.exp %242 : vector<8x8xf32>
    %cst_68 = arith.constant dense<0.000000e+00> : vector<8xf32>
    %244 = vector.multi_reduction <add>, %243, %cst_68 [1] : vector<8x8xf32> to vector<8xf32>
    %245 = vector.shape_cast %244 : vector<8xf32> to vector<8x1xf32>
    %246 = tpu.reciprocal %245 {approx = true} : vector<8x1xf32> -> vector<8x1xf32>
    %247 = vector.broadcast %246 : vector<8x1xf32> to vector<8x8xf32>
    %248 = arith.mulf %243, %247 : vector<8x8xf32>
    %249 = vector.shape_cast %248 : vector<8x8xf32> to vector<8x8x1xf32>
    %250 = vector.broadcast %249 : vector<8x8x1xf32> to vector<8x8x32xf32>
    %251 = arith.mulf %250, %0 : vector<8x8x32xf32>
    %cst_69 = arith.constant dense<0.000000e+00> : vector<8x32xf32>
    %252 = vector.multi_reduction <add>, %251, %cst_69 [1] : vector<8x8x32xf32> to vector<8x32xf32>
    %cst_70 = arith.constant dense<0.000000e+00> : vector<8x32xf32>
    %253 = tpu.matmul %234, %2, %cst_70 {dimension_numbers = #tpu.dot_dimension_numbers<[1], [0], [0], [1], [0, 0, 1, 1], [], []>} : vector<8x32xf32>, vector<32x32xf32>, vector<8x32xf32> -> vector<8x32xf32>
    %cst_71 = arith.constant dense<0.000000e+00> : vector<8x32xf32>
    %254 = tpu.matmul %252, %3, %cst_71 {dimension_numbers = #tpu.dot_dimension_numbers<[1], [0], [0], [1], [0, 0, 1, 1], [], []>} : vector<8x32xf32>, vector<32x32xf32>, vector<8x32xf32> -> vector<8x32xf32>
    %255 = arith.addf %253, %254 : vector<8x32xf32>
    %256 = math.tanh %255 : vector<8x32xf32>
    %c40 = arith.constant 40 : index
    %c0_72 = arith.constant 0 : index
    %257 = vector.load %arg15[%c40, %c0_72] : memref<64x32xf32, #tpu.memory_space<vmem>>, vector<8x32xf32>
    tpu.vector_store %arg15[%c40, %c0_72], %256 {strides = array<i32>} : memref<64x32xf32, #tpu.memory_space<vmem>>, vector<8x32xf32>,
    %258 = vector.extract_strided_slice %9 {offsets = [48, 0], sizes = [8, 128], strides = [1, 1]} : vector<64x128xf32> to vector<8x128xf32>
    %cst_73 = arith.constant dense<0.000000e+00> : vector<8x128xf32>
    %259 = tpu.matmul %234, %1, %cst_73 {dimension_numbers = #tpu.dot_dimension_numbers<[1], [0], [0], [1], [0, 0, 1, 1], [], []>} : vector<8x32xf32>, vector<32x128xf32>, vector<8x128xf32> -> vector<8x128xf32>
    %260 = arith.addf %258, %259 : vector<8x128xf32>
    %261 = arith.negf %260 : vector<8x128xf32>
    %262 = math.exp %261 : vector<8x128xf32>
    %cst_74 = arith.constant 1.000000e+00 : f32
    %263 = vector.broadcast %cst_74 : f32 to vector<8x128xf32>
    %264 = arith.addf %263, %262 : vector<8x128xf32>
    %265 = arith.divf %263, %264 : vector<8x128xf32>
    %266 = math.tanh %260 : vector<8x128xf32>
    %267 = vector.extract_strided_slice %265 {offsets = [0, 0], sizes = [8, 32], strides = [1, 1]} : vector<8x128xf32> to vector<8x32xf32>
    %268 = vector.extract_strided_slice %265 {offsets = [0, 32], sizes = [8, 32], strides = [1, 1]} : vector<8x128xf32> to vector<8x32xf32>
    %269 = vector.extract_strided_slice %266 {offsets = [0, 64], sizes = [8, 32], strides = [1, 1]} : vector<8x128xf32> to vector<8x32xf32>
    %270 = vector.extract_strided_slice %265 {offsets = [0, 96], sizes = [8, 32], strides = [1, 1]} : vector<8x128xf32> to vector<8x32xf32>
    %271 = arith.mulf %268, %232 : vector<8x32xf32>
    %272 = arith.mulf %267, %269 : vector<8x32xf32>
    %273 = arith.addf %271, %272 : vector<8x32xf32>
    %274 = math.tanh %273 : vector<8x32xf32>
    %275 = arith.mulf %270, %274 : vector<8x32xf32>
    %276 = vector.shape_cast %275 : vector<8x32xf32> to vector<8x1x32xf32>
    %277 = vector.broadcast %276 : vector<8x1x32xf32> to vector<8x8x32xf32>
    %278 = arith.mulf %0, %277 : vector<8x8x32xf32>
    %cst_75 = arith.constant dense<0.000000e+00> : vector<8x8xf32>
    %279 = vector.multi_reduction <add>, %278, %cst_75 [2] : vector<8x8x32xf32> to vector<8x8xf32>
    %cst_76 = arith.constant dense<0xFF800000> : vector<8xf32>
    %280 = vector.multi_reduction <maximumf>, %279, %cst_76 [1] : vector<8x8xf32> to vector<8xf32>
    %281 = vector.shape_cast %280 : vector<8xf32> to vector<8x1xf32>
    %282 = vector.broadcast %281 : vector<8x1xf32> to vector<8x8xf32>
    %283 = arith.subf %279, %282 : vector<8x8xf32>
    %284 = math.exp %283 : vector<8x8xf32>
    %cst_77 = arith.constant dense<0.000000e+00> : vector<8xf32>
    %285 = vector.multi_reduction <add>, %284, %cst_77 [1] : vector<8x8xf32> to vector<8xf32>
    %286 = vector.shape_cast %285 : vector<8xf32> to vector<8x1xf32>
    %287 = tpu.reciprocal %286 {approx = true} : vector<8x1xf32> -> vector<8x1xf32>
    %288 = vector.broadcast %287 : vector<8x1xf32> to vector<8x8xf32>
    %289 = arith.mulf %284, %288 : vector<8x8xf32>
    %290 = vector.shape_cast %289 : vector<8x8xf32> to vector<8x8x1xf32>
    %291 = vector.broadcast %290 : vector<8x8x1xf32> to vector<8x8x32xf32>
    %292 = arith.mulf %291, %0 : vector<8x8x32xf32>
    %cst_78 = arith.constant dense<0.000000e+00> : vector<8x32xf32>
    %293 = vector.multi_reduction <add>, %292, %cst_78 [1] : vector<8x8x32xf32> to vector<8x32xf32>
    %cst_79 = arith.constant dense<0.000000e+00> : vector<8x32xf32>
    %294 = tpu.matmul %275, %2, %cst_79 {dimension_numbers = #tpu.dot_dimension_numbers<[1], [0], [0], [1], [0, 0, 1, 1], [], []>} : vector<8x32xf32>, vector<32x32xf32>, vector<8x32xf32> -> vector<8x32xf32>
    %cst_80 = arith.constant dense<0.000000e+00> : vector<8x32xf32>
    %295 = tpu.matmul %293, %3, %cst_80 {dimension_numbers = #tpu.dot_dimension_numbers<[1], [0], [0], [1], [0, 0, 1, 1], [], []>} : vector<8x32xf32>, vector<32x32xf32>, vector<8x32xf32> -> vector<8x32xf32>
    %296 = arith.addf %294, %295 : vector<8x32xf32>
    %297 = math.tanh %296 : vector<8x32xf32>
    %c48 = arith.constant 48 : index
    %c0_81 = arith.constant 0 : index
    %298 = vector.load %arg15[%c48, %c0_81] : memref<64x32xf32, #tpu.memory_space<vmem>>, vector<8x32xf32>
    tpu.vector_store %arg15[%c48, %c0_81], %297 {strides = array<i32>} : memref<64x32xf32, #tpu.memory_space<vmem>>, vector<8x32xf32>,
    %299 = vector.extract_strided_slice %9 {offsets = [56, 0], sizes = [8, 128], strides = [1, 1]} : vector<64x128xf32> to vector<8x128xf32>
    %cst_82 = arith.constant dense<0.000000e+00> : vector<8x128xf32>
    %300 = tpu.matmul %275, %1, %cst_82 {dimension_numbers = #tpu.dot_dimension_numbers<[1], [0], [0], [1], [0, 0, 1, 1], [], []>} : vector<8x32xf32>, vector<32x128xf32>, vector<8x128xf32> -> vector<8x128xf32>
    %301 = arith.addf %299, %300 : vector<8x128xf32>
    %302 = arith.negf %301 : vector<8x128xf32>
    %303 = math.exp %302 : vector<8x128xf32>
    %cst_83 = arith.constant 1.000000e+00 : f32
    %304 = vector.broadcast %cst_83 : f32 to vector<8x128xf32>
    %305 = arith.addf %304, %303 : vector<8x128xf32>
    %306 = arith.divf %304, %305 : vector<8x128xf32>
    %307 = math.tanh %301 : vector<8x128xf32>
    %308 = vector.extract_strided_slice %306 {offsets = [0, 0], sizes = [8, 32], strides = [1, 1]} : vector<8x128xf32> to vector<8x32xf32>
    %309 = vector.extract_strided_slice %306 {offsets = [0, 32], sizes = [8, 32], strides = [1, 1]} : vector<8x128xf32> to vector<8x32xf32>
    %310 = vector.extract_strided_slice %307 {offsets = [0, 64], sizes = [8, 32], strides = [1, 1]} : vector<8x128xf32> to vector<8x32xf32>
    %311 = vector.extract_strided_slice %306 {offsets = [0, 96], sizes = [8, 32], strides = [1, 1]} : vector<8x128xf32> to vector<8x32xf32>
    %312 = arith.mulf %309, %273 : vector<8x32xf32>
    %313 = arith.mulf %308, %310 : vector<8x32xf32>
    %314 = arith.addf %312, %313 : vector<8x32xf32>
    %315 = math.tanh %314 : vector<8x32xf32>
    %316 = arith.mulf %311, %315 : vector<8x32xf32>
    %317 = vector.shape_cast %316 : vector<8x32xf32> to vector<8x1x32xf32>
    %318 = vector.broadcast %317 : vector<8x1x32xf32> to vector<8x8x32xf32>
    %319 = arith.mulf %0, %318 : vector<8x8x32xf32>
    %cst_84 = arith.constant dense<0.000000e+00> : vector<8x8xf32>
    %320 = vector.multi_reduction <add>, %319, %cst_84 [2] : vector<8x8x32xf32> to vector<8x8xf32>
    %cst_85 = arith.constant dense<0xFF800000> : vector<8xf32>
    %321 = vector.multi_reduction <maximumf>, %320, %cst_85 [1] : vector<8x8xf32> to vector<8xf32>
    %322 = vector.shape_cast %321 : vector<8xf32> to vector<8x1xf32>
    %323 = vector.broadcast %322 : vector<8x1xf32> to vector<8x8xf32>
    %324 = arith.subf %320, %323 : vector<8x8xf32>
    %325 = math.exp %324 : vector<8x8xf32>
    %cst_86 = arith.constant dense<0.000000e+00> : vector<8xf32>
    %326 = vector.multi_reduction <add>, %325, %cst_86 [1] : vector<8x8xf32> to vector<8xf32>
    %327 = vector.shape_cast %326 : vector<8xf32> to vector<8x1xf32>
    %328 = tpu.reciprocal %327 {approx = true} : vector<8x1xf32> -> vector<8x1xf32>
    %329 = vector.broadcast %328 : vector<8x1xf32> to vector<8x8xf32>
    %330 = arith.mulf %325, %329 : vector<8x8xf32>
    %331 = vector.shape_cast %330 : vector<8x8xf32> to vector<8x8x1xf32>
    %332 = vector.broadcast %331 : vector<8x8x1xf32> to vector<8x8x32xf32>
    %333 = arith.mulf %332, %0 : vector<8x8x32xf32>
    %cst_87 = arith.constant dense<0.000000e+00> : vector<8x32xf32>
    %334 = vector.multi_reduction <add>, %333, %cst_87 [1] : vector<8x8x32xf32> to vector<8x32xf32>
    %cst_88 = arith.constant dense<0.000000e+00> : vector<8x32xf32>
    %335 = tpu.matmul %316, %2, %cst_88 {dimension_numbers = #tpu.dot_dimension_numbers<[1], [0], [0], [1], [0, 0, 1, 1], [], []>} : vector<8x32xf32>, vector<32x32xf32>, vector<8x32xf32> -> vector<8x32xf32>
    %cst_89 = arith.constant dense<0.000000e+00> : vector<8x32xf32>
    %336 = tpu.matmul %334, %3, %cst_89 {dimension_numbers = #tpu.dot_dimension_numbers<[1], [0], [0], [1], [0, 0, 1, 1], [], []>} : vector<8x32xf32>, vector<32x32xf32>, vector<8x32xf32> -> vector<8x32xf32>
    %337 = arith.addf %335, %336 : vector<8x32xf32>
    %338 = math.tanh %337 : vector<8x32xf32>
    %c56 = arith.constant 56 : index
    %c0_90 = arith.constant 0 : index
    %339 = vector.load %arg15[%c56, %c0_90] : memref<64x32xf32, #tpu.memory_space<vmem>>, vector<8x32xf32>
    tpu.vector_store %arg15[%c56, %c0_90], %338 {strides = array<i32>} : memref<64x32xf32, #tpu.memory_space<vmem>>, vector<8x32xf32>,
    %c0_91 = arith.constant 0 : index
    %c0_92 = arith.constant 0 : index
    %340 = vector.load %arg13[%c0_91, %c0_92] : memref<8x32xf32, #tpu.memory_space<vmem>>, vector<8x32xf32>
    tpu.vector_store %arg13[%c0_91, %c0_92], %316 {strides = array<i32>} : memref<8x32xf32, #tpu.memory_space<vmem>>, vector<8x32xf32>,
    %c0_93 = arith.constant 0 : index
    %c0_94 = arith.constant 0 : index
    %341 = vector.load %arg14[%c0_93, %c0_94] : memref<8x32xf32, #tpu.memory_space<vmem>>, vector<8x32xf32>
    tpu.vector_store %arg14[%c0_93, %c0_94], %314 {strides = array<i32>} : memref<8x32xf32, #tpu.memory_space<vmem>>, vector<8x32xf32>,
    %c0_95 = arith.constant 0 : index
    %c0_96 = arith.constant 0 : index
    %342 = vector.load %arg15[%c0_95, %c0_96] : memref<64x32xf32, #tpu.memory_space<vmem>>, vector<64x32xf32>
    %c0_97 = arith.constant 0 : index
    %c0_98 = arith.constant 0 : index
    %343 = vector.load %arg10[%c0_97, %c0_98] : memref<32x128xf32, #tpu.memory_space<vmem>>, vector<32x128xf32>
    %cst_99 = arith.constant dense<0.000000e+00> : vector<64x128xf32>
    %344 = tpu.matmul %342, %343, %cst_99 {dimension_numbers = #tpu.dot_dimension_numbers<[1], [0], [0], [1], [0, 0, 1, 1], [], []>} : vector<64x32xf32>, vector<32x128xf32>, vector<64x128xf32> -> vector<64x128xf32>
    %c0_100 = arith.constant 0 : index
    %c0_101 = arith.constant 0 : index
    %345 = vector.load %arg11[%c0_100, %c0_101] : memref<1x128xf32, #tpu.memory_space<vmem>>, vector<1x128xf32>
    %346 = vector.broadcast %345 : vector<1x128xf32> to vector<64x128xf32>
    %347 = arith.addf %344, %346 : vector<64x128xf32>
    %cst_102 = arith.constant dense<0xFF800000> : vector<64xf32>
    %348 = vector.multi_reduction <maximumf>, %347, %cst_102 [1] : vector<64x128xf32> to vector<64xf32>
    %349 = vector.shape_cast %348 : vector<64xf32> to vector<64x1xf32>
    %350 = vector.broadcast %349 : vector<64x1xf32> to vector<64x128xf32>
    %351 = arith.subf %347, %350 : vector<64x128xf32>
    %352 = math.exp %351 : vector<64x128xf32>
    %cst_103 = arith.constant dense<0.000000e+00> : vector<64xf32>
    %353 = vector.multi_reduction <add>, %352, %cst_103 [1] : vector<64x128xf32> to vector<64xf32>
    %354 = vector.shape_cast %353 : vector<64xf32> to vector<64x1xf32>
    %355 = math.log %354 : vector<64x1xf32>
    %356 = vector.broadcast %355 : vector<64x1xf32> to vector<64x128xf32>
    %357 = arith.subf %351, %356 : vector<64x128xf32>
    %c0_104 = arith.constant 0 : index
    %c0_105 = arith.constant 0 : index
    %358 = vector.load %arg12[%c0_104, %c0_105] : memref<64x128xf32, #tpu.memory_space<vmem>>, vector<64x128xf32>
    tpu.vector_store %arg12[%c0_104, %c0_105], %357 {strides = array<i32>} : memref<64x128xf32, #tpu.memory_space<vmem>>, vector<64x128xf32>,
    return
  }
  func.func @transform_0(%arg0: i32) -> (i32, i32) {
    %c0_i32 = arith.constant 0 : i32
    %c0_i32_0 = arith.constant 0 : i32
    %c0_i32_1 = arith.constant 0 : i32
    return %c0_i32, %c0_i32_0 : i32, i32
  }
  func.func @transform_1(%arg0: i32) -> (i32, i32) {
    %c0_i32 = arith.constant 0 : i32
    %c0_i32_0 = arith.constant 0 : i32
    %c0_i32_1 = arith.constant 0 : i32
    return %c0_i32, %c0_i32_0 : i32, i32
  }
  func.func @transform_2(%arg0: i32) -> (i32, i32) {
    %c0_i32 = arith.constant 0 : i32
    %c0_i32_0 = arith.constant 0 : i32
    %c0_i32_1 = arith.constant 0 : i32
    return %c0_i32, %c0_i32_0 : i32, i32
  }
  func.func @transform_3(%arg0: i32) -> (i32, i32, i32) {
    %c0_i32 = arith.constant 0 : i32
    %c0_i32_0 = arith.constant 0 : i32
    %c0_i32_1 = arith.constant 0 : i32
    %c0_i32_2 = arith.constant 0 : i32
    return %c0_i32, %c0_i32_0, %c0_i32_1 : i32, i32, i32
  }
  func.func @transform_4(%arg0: i32) -> (i32, i32) {
    %c0_i32 = arith.constant 0 : i32
    %c0_i32_0 = arith.constant 0 : i32
    %c0_i32_1 = arith.constant 0 : i32
    return %c0_i32, %c0_i32_0 : i32, i32
  }
  func.func @transform_5(%arg0: i32) -> (i32, i32) {
    %c0_i32 = arith.constant 0 : i32
    %c0_i32_0 = arith.constant 0 : i32
    %c0_i32_1 = arith.constant 0 : i32
    return %c0_i32, %c0_i32_0 : i32, i32
  }
  func.func @transform_6(%arg0: i32) -> (i32, i32) {
    %c0_i32 = arith.constant 0 : i32
    %c0_i32_0 = arith.constant 0 : i32
    %c0_i32_1 = arith.constant 0 : i32
    return %c0_i32, %c0_i32_0 : i32, i32
  }
  func.func @transform_7(%arg0: i32) -> (i32, i32) {
    %c0_i32 = arith.constant 0 : i32
    %c0_i32_0 = arith.constant 0 : i32
    %c0_i32_1 = arith.constant 0 : i32
    return %c0_i32, %c0_i32_0 : i32, i32
  }
  func.func @transform_8(%arg0: i32) -> (i32, i32) {
    %c0_i32 = arith.constant 0 : i32
    %c0_i32_0 = arith.constant 0 : i32
    %c0_i32_1 = arith.constant 0 : i32
    return %c0_i32, %c0_i32_0 : i32, i32
  }
  func.func @transform_9(%arg0: i32) -> (i32, i32) {
    %c0_i32 = arith.constant 0 : i32
    %c0_i32_0 = arith.constant 0 : i32
    %c0_i32_1 = arith.constant 0 : i32
    return %c0_i32, %c0_i32_0 : i32, i32
  }
  func.func @transform_10(%arg0: i32) -> (i32, i32) {
    %c0_i32 = arith.constant 0 : i32
    %c0_i32_0 = arith.constant 0 : i32
    %c0_i32_1 = arith.constant 0 : i32
    return %c0_i32, %c0_i32_0 : i32, i32
  }
  func.func @transform_11(%arg0: i32) -> (i32, i32) {
    %c0_i32 = arith.constant 0 : i32
    %c0_i32_0 = arith.constant 0 : i32
    %c0_i32_1 = arith.constant 0 : i32
    return %c0_i32, %c0_i32_0 : i32, i32
  }
  func.func @transform_12(%arg0: i32) -> (i32, i32) {
    %c0_i32 = arith.constant 0 : i32
    %c0_i32_0 = arith.constant 0 : i32
    %c0_i32_1 = arith.constant 0 : i32
    return %c0_i32, %c0_i32_0 : i32, i32
  }
  func.func @transform_13(%arg0: i32) -> (i32, i32) {
    %c0_i32 = arith.constant 0 : i32
    %c0_i32_0 = arith.constant 0 : i32
    %c0_i32_1 = arith.constant 0 : i32
    return %c0_i32, %c0_i32_0 : i32, i32
  }
}

</mosaic_0001>

<llo_original>
// kernel: tpu_custom_call.1
$region0: #{tpu_custom_call.1}
  #allocation0 [shape = 'u32[]', space=smem, size = 0x4, offset = 0x4, fixed_abs, tag = 'smem constant byte address 0x4 - core index']
  #allocation1 [shape = 'u32[144,128]{1,0:T(1,128)}', space=vmem, size = 0x12000, scoped, tag = 'internal scratch']
  #allocation2 [shape = 'f32[64,32]{1,0:T(8,128)}', space=vmem, size = 0x8000, scoped, tag = 'scratch operand']
  %s0 = inlined_call_operand.vmem [shape: f32[64,32], index: 0, kind: input, shape index: {}]
  %s1 = inlined_call_operand.hbm [shape: f32[8,32], index: 1, kind: input, shape index: {}]
  %s2 = inlined_call_operand.hbm [shape: f32[8,32], index: 2, kind: input, shape index: {}]
  %s3 = inlined_call_operand.vmem [shape: f32[8,8,32], index: 3, kind: input, shape index: {}]
  %s4 = inlined_call_operand.vmem [shape: f32[32,128], index: 4, kind: input, shape index: {}]
  %s5 = inlined_call_operand.hbm [shape: f32[32,128], index: 5, kind: input, shape index: {}]
  %s6 = inlined_call_operand.vmem [shape: f32[1,128], index: 6, kind: input, shape index: {}]
  %s7 = inlined_call_operand.hbm [shape: f32[32,32], index: 7, kind: input, shape index: {}]
  %s8 = inlined_call_operand.hbm [shape: f32[32,32], index: 8, kind: input, shape index: {}]
  %s9 = inlined_call_operand.vmem [shape: f32[32,128], index: 9, kind: input, shape index: {}]
  %s10 = inlined_call_operand.vmem [shape: f32[1,128], index: 10, kind: input, shape index: {}]
  %s11 = inlined_call_operand.hbm [shape: f32[64,128], index: 11, kind: output, shape index: {0}]
  %s12 = inlined_call_operand.hbm [shape: f32[8,32], index: 12, kind: output, shape index: {1}]
  %s13 = inlined_call_operand.hbm [shape: f32[8,32], index: 13, kind: output, shape index: {2}]
  %14 = xla_tuple %s11, %s12, %s13
  %s15 = sld [smem:[#allocation0]]
  $region90: #{tpu_custom_call.1} parent=0
    _
  %s17 = ssub.s32 1, %s15
  %s18 = scalar_select 0, %s17, %s15
  $region1: #{tpu_custom_call.1} parent=0
    #allocation3 [shape = 'u8[4096]{0}', space=vmem, size = 0x1000, scoped, tag = 'input window, operand 1, single buffered']
    #allocation4 [shape = 's32[1]{0}', space=sflag, size = 0x4, scoped, tag = 'scoped memory for tpu_custom_call.1']
    #allocation5 [shape = 's32[1]{0}', space=sflag, size = 0x4, scoped, tag = 'scoped memory for tpu_custom_call.1']
    #allocation6 [shape = 'u8[4096]{0}', space=vmem, size = 0x1000, scoped, tag = 'input window, operand 2, single buffered']
    #allocation7 [shape = 's32[1]{0}', space=sflag, size = 0x4, scoped, tag = 'scoped memory for tpu_custom_call.1']
    #allocation8 [shape = 'u8[16384]{0}', space=vmem, size = 0x4000, scoped, tag = 'input window, operand 5, single buffered']
    #allocation9 [shape = 'u8[16384]{0}', space=vmem, size = 0x4000, scoped, tag = 'input window, operand 7, single buffered']
    #allocation10 [shape = 's32[1]{0}', space=sflag, size = 0x4, scoped, tag = 'scoped memory for tpu_custom_call.1']
    #allocation11 [shape = 'u8[16384]{0}', space=vmem, size = 0x4000, scoped, tag = 'input window, operand 8, single buffered']
    #allocation12 [shape = 'u8[32768]{0}', space=vmem, size = 0x8000, scoped, tag = 'output window, operand 0, single buffered']
    #allocation13 [shape = 'u8[4096]{0}', space=vmem, size = 0x1000, scoped, tag = 'output window, operand 1, single buffered']
    #allocation14 [shape = 's32[1]{0}', space=sflag, size = 0x4, scoped, tag = 'scoped memory for tpu_custom_call.1']
    #allocation15 [shape = 'u8[4096]{0}', space=vmem, size = 0x1000, scoped, tag = 'output window, operand 2, single buffered']
    %19 = vsyncpa [#allocation4], 0
    %20 = vsyncpa [#allocation7], 0
    %21 = vsyncpa [#allocation10], 0
    %22 = vsyncpa [#allocation5], 0
    %23 = vsyncpa [#allocation14], 0
    // Predicated region
    $region2: #{tpu_custom_call.1} parent=1 // pred_check
      _
    $region3: #{tpu_custom_call.1} parent=1 // pred_check_branch
      %25 = sbr.rel (0) target = $region5
    $region4: #{tpu_custom_call.1} parent=1 // pred_region
      _
    $region5: #{tpu_custom_call.1} parent=1 // pred_fallthru
      _
    // Predicated region
    $region6: #{tpu_custom_call.1} parent=1 // pred_check
      _
    $region7: #{tpu_custom_call.1} parent=1 // pred_check_branch
      %27 = sbr.rel (0) target = $region9
    $region8: #{tpu_custom_call.1} parent=1 // pred_region
      %s29 = ssub.s32 128, 128
      %30 = vsyncadd [#allocation4], %s29
      %s32 = sshll.u32 [#allocation3], 4
      %s33 = int_to_ptr.vmem [resolvable:$true] %s32
      %35 = dma.hbm_to_vmem [thread:$0]  %s1, 128, %s33, [#allocation4]
    $region9: #{tpu_custom_call.1} parent=1 // pred_fallthru
      _
    // Predicated region
    $region10: #{tpu_custom_call.1} parent=1 // pred_check
      _
    $region11: #{tpu_custom_call.1} parent=1 // pred_check_branch
      %37 = sbr.rel (0) target = $region13
    $region12: #{tpu_custom_call.1} parent=1 // pred_region
      %s39 = ssub.s32 128, 128
      %40 = vsyncadd [#allocation7], %s39
      %s42 = sshll.u32 [#allocation6], 4
      %s43 = int_to_ptr.vmem [resolvable:$true] %s42
      %45 = dma.hbm_to_vmem [thread:$0]  %s2, 128, %s43, [#allocation7]
    $region13: #{tpu_custom_call.1} parent=1 // pred_fallthru
      _
    // Predicated region
    $region14: #{tpu_custom_call.1} parent=1 // pred_check
      _
    $region15: #{tpu_custom_call.1} parent=1 // pred_check_branch
      %47 = sbr.rel (0) target = $region17
    $region16: #{tpu_custom_call.1} parent=1 // pred_region
      _
    $region17: #{tpu_custom_call.1} parent=1 // pred_fallthru
      _
    // Predicated region
    $region18: #{tpu_custom_call.1} parent=1 // pred_check
      _
    $region19: #{tpu_custom_call.1} parent=1 // pred_check_branch
      %49 = sbr.rel (0) target = $region21
    $region20: #{tpu_custom_call.1} parent=1 // pred_region
      _
    $region21: #{tpu_custom_call.1} parent=1 // pred_fallthru
      _
    // Predicated region
    $region22: #{tpu_custom_call.1} parent=1 // pred_check
      _
    $region23: #{tpu_custom_call.1} parent=1 // pred_check_branch
      %51 = sbr.rel (0) target = $region25
    $region24: #{tpu_custom_call.1} parent=1 // pred_region
      %s53 = ssub.s32 512, 512
      %54 = vsyncadd [#allocation7], %s53
      %s55 = sshll.u32 [#allocation8], 4
      %s56 = int_to_ptr.vmem [resolvable:$true] %s55
      %61 = dma.hbm_to_vmem [thread:$0]  %s5, 512, %s56, [#allocation7], 128, 128, 8
    $region25: #{tpu_custom_call.1} parent=1 // pred_fallthru
      _
    // Predicated region
    $region26: #{tpu_custom_call.1} parent=1 // pred_check
      _
    $region27: #{tpu_custom_call.1} parent=1 // pred_check_branch
      %63 = sbr.rel (0) target = $region29
    $region28: #{tpu_custom_call.1} parent=1 // pred_region
      _
    $region29: #{tpu_custom_call.1} parent=1 // pred_fallthru
      _
    // Predicated region
    $region30: #{tpu_custom_call.1} parent=1 // pred_check
      _
    $region31: #{tpu_custom_call.1} parent=1 // pred_check_branch
      %65 = sbr.rel (0) target = $region33
    $region32: #{tpu_custom_call.1} parent=1 // pred_region
      %s67 = ssub.s32 512, 512
      %68 = vsyncadd [#allocation10], %s67
      %s69 = sshll.u32 [#allocation9], 4
      %s70 = int_to_ptr.vmem [resolvable:$true] %s69
      %75 = dma.hbm_to_vmem [thread:$0]  %s7, 512, %s70, [#allocation10], 128, 128, 8
    $region33: #{tpu_custom_call.1} parent=1 // pred_fallthru
      _
    // Predicated region
    $region34: #{tpu_custom_call.1} parent=1 // pred_check
      _
    $region35: #{tpu_custom_call.1} parent=1 // pred_check_branch
      %77 = sbr.rel (0) target = $region37
    $region36: #{tpu_custom_call.1} parent=1 // pred_region
      %s79 = ssub.s32 512, 512
      %80 = vsyncadd [#allocation10], %s79
      %s81 = sshll.u32 [#allocation11], 4
      %s82 = int_to_ptr.vmem [resolvable:$true] %s81
      %87 = dma.hbm_to_vmem [thread:$0]  %s8, 512, %s82, [#allocation10], 128, 128, 8
    $region37: #{tpu_custom_call.1} parent=1 // pred_fallthru
      _
    // Predicated region
    $region38: #{tpu_custom_call.1} parent=1 // pred_check
      _
    $region39: #{tpu_custom_call.1} parent=1 // pred_check_branch
      %89 = sbr.rel (0) target = $region41
    $region40: #{tpu_custom_call.1} parent=1 // pred_region
      _
    $region41: #{tpu_custom_call.1} parent=1 // pred_fallthru
      _
    // Predicated region
    $region42: #{tpu_custom_call.1} parent=1 // pred_check
      _
    $region43: #{tpu_custom_call.1} parent=1 // pred_check_branch
      %91 = sbr.rel (0) target = $region45
    $region44: #{tpu_custom_call.1} parent=1 // pred_region
      _
    $region45: #{tpu_custom_call.1} parent=1 // pred_fallthru
      _
    // Predicated region
    $region46: #{tpu_custom_call.1} parent=1 // pred_check
      _
    $region47: #{tpu_custom_call.1} parent=1 // pred_check_branch
      %93 = sbr.rel (0) target = $region49
    $region48: #{tpu_custom_call.1} parent=1 // pred_region
      %94 = dma.done [#allocation4], 128
    $region49: #{tpu_custom_call.1} parent=1 // pred_fallthru
      _
    // Predicated region
    $region50: #{tpu_custom_call.1} parent=1 // pred_check
      _
    $region51: #{tpu_custom_call.1} parent=1 // pred_check_branch
      %96 = sbr.rel (0) target = $region53
    $region52: #{tpu_custom_call.1} parent=1 // pred_region
      %97 = dma.done [#allocation7], 128
    $region53: #{tpu_custom_call.1} parent=1 // pred_fallthru
      _
    // Predicated region
    $region54: #{tpu_custom_call.1} parent=1 // pred_check
      _
    $region55: #{tpu_custom_call.1} parent=1 // pred_check_branch
      %99 = sbr.rel (0) target = $region57
    $region56: #{tpu_custom_call.1} parent=1 // pred_region
      %100 = dma.done [#allocation7], 512
    $region57: #{tpu_custom_call.1} parent=1 // pred_fallthru
      _
    // Predicated region
    $region58: #{tpu_custom_call.1} parent=1 // pred_check
      _
    $region59: #{tpu_custom_call.1} parent=1 // pred_check_branch
      %102 = sbr.rel (0) target = $region61
    $region60: #{tpu_custom_call.1} parent=1 // pred_region
      %103 = dma.done [#allocation10], 512
    $region61: #{tpu_custom_call.1} parent=1 // pred_fallthru
      _
    // Predicated region
    $region62: #{tpu_custom_call.1} parent=1 // pred_check
      _
    $region63: #{tpu_custom_call.1} parent=1 // pred_check_branch
      %105 = sbr.rel (0) target = $region65
    $region64: #{tpu_custom_call.1} parent=1 // pred_region
      %106 = dma.done [#allocation10], 512
    $region65: #{tpu_custom_call.1} parent=1 // pred_fallthru
      _
    %v107 = vld [vmem:[%s3] sm:$0xff]
    %v108 = vld [vmem:[%s3 + $0x8] sm:$0xff]
    %v109 = vld [vmem:[%s3 + $0x10] sm:$0xff]
    %v110 = vld [vmem:[%s3 + $0x18] sm:$0xff]
    %v111 = vld [vmem:[%s3 + $0x20] sm:$0xff]
    %v112 = vld [vmem:[%s3 + $0x28] sm:$0xff]
    %v113 = vld [vmem:[%s3 + $0x30] sm:$0xff]
    %v114 = vld [vmem:[%s3 + $0x38] sm:$0xff]
    %v115 = vld [vmem:[#allocation8] sm:$0xff]
    %v116 = vld [vmem:[#allocation8 + $0x8] sm:$0xff]
    %v117 = vld [vmem:[#allocation8 + $0x10] sm:$0xff]
    %v118 = vld [vmem:[#allocation8 + $0x18] sm:$0xff]
    %v119 = vld [vmem:[#allocation9] sm:$0xff]
    %v120 = vld [vmem:[#allocation9 + $0x8] sm:$0xff]
    %v121 = vld [vmem:[#allocation9 + $0x10] sm:$0xff]
    %v122 = vld [vmem:[#allocation9 + $0x18] sm:$0xff]
    %v123 = vld [vmem:[#allocation11] sm:$0xff]
    %v124 = vld [vmem:[#allocation11 + $0x8] sm:$0xff]
    %v125 = vld [vmem:[#allocation11 + $0x10] sm:$0xff]
    %v126 = vld [vmem:[#allocation11 + $0x18] sm:$0xff]
    %v127 = vld [vmem:[%s0] sm:$0xff]
    %v128 = vld [vmem:[%s0 + $0x8] sm:$0xff]
    %v129 = vld [vmem:[%s0 + $0x10] sm:$0xff]
    %v130 = vld [vmem:[%s0 + $0x18] sm:$0xff]
    %v131 = vld [vmem:[%s0 + $0x20] sm:$0xff]
    %v132 = vld [vmem:[%s0 + $0x28] sm:$0xff]
    %v133 = vld [vmem:[%s0 + $0x30] sm:$0xff]
    %v134 = vld [vmem:[%s0 + $0x38] sm:$0xff]
    %v135 = vld [vmem:[%s4] sm:$0xff]
    %v136 = vld [vmem:[%s4 + $0x8] sm:$0xff]
    %v137 = vld [vmem:[%s4 + $0x10] sm:$0xff]
    %v138 = vld [vmem:[%s4 + $0x18] sm:$0xff]
    %v139 = vld [vmem:[%s6] sm:$0x1]
    %v141 = vlaneseq
    %v142 = vshrl.u32 %v141, 7
    %v143 = vsub.s32 0, %v142
    %v144 = vrot.slane %v139, %v143
    %vm146 = vcmask 261120
    %v148 = vsel %vm146, %v127, 0
    %v151 = vsel %vm146, %v128, 0
    %v154 = vsel %vm146, %v129, 0
    %v157 = vsel %vm146, %v130, 0
    %v160 = vsel %vm146, %v131, 0
    %v163 = vsel %vm146, %v132, 0
    %v166 = vsel %vm146, %v133, 0
    %v169 = vsel %vm146, %v134, 0
    %171 = vmatprep.subr.mxu0 0.0
    %172 = vmatpush1.msra.mxu0 %v135
    %173 = vmatprep.subr.mxu0 0.0
    %174 = vmatpush1.msra.mxu0 %v136
    %175 = vmatprep.subr.mxu0 0.0
    %176 = vmatpush1.msra.mxu0 %v137
    %177 = vmatprep.subr.mxu0 0.0
    %178 = vmatpush1.msra.mxu0 %v138
    %179 = vmatprep.subr.mxu0 0.0
    %180 = vmatpush1.msra.mxu0 0.0
    %181 = vmatprep.subr.mxu0 0.0
    %182 = vmatpush1.msra.mxu0 0.0
    %183 = vmatprep.subr.mxu0 0.0
    %184 = vmatpush1.msra.mxu0 0.0
    %185 = vmatprep.subr.mxu0 0.0
    %186 = vmatpush1.msra.mxu0 0.0
    %187 = vmatprep.subr.mxu0 0.0
    %188 = vmatpush1.msra.mxu0 0.0
    %189 = vmatprep.subr.mxu0 0.0
    %190 = vmatpush1.msra.mxu0 0.0
    %191 = vmatprep.subr.mxu0 0.0
    %192 = vmatpush1.msra.mxu0 0.0
    %193 = vmatprep.subr.mxu0 0.0
    %194 = vmatpush1.msra.mxu0 0.0
    %195 = vmatprep.subr.mxu0 0.0
    %196 = vmatpush1.msra.mxu0 0.0
    %197 = vmatprep.subr.mxu0 0.0
    %198 = vmatpush1.msra.mxu0 0.0
    %199 = vmatprep.subr.mxu0 0.0
    %200 = vmatpush1.msra.mxu0 0.0
    %201 = vmatprep.subr.mxu0 0.0
    %202 = vmatpush1.msra.mxu0 0.0
    %203 = vmatprep.subr.mxu0 0.0
    %204 = vmatpush1.msra.mxu0 0.0
    %205 = vmatprep.subr.mxu0 0.0
    %206 = vmatpush1.msra.mxu0 0.0
    %207 = vmatprep.subr.mxu0 0.0
    %208 = vmatpush1.msra.mxu0 0.0
    %209 = vmatprep.subr.mxu0 0.0
    %210 = vmatpush1.msra.mxu0 0.0
    %211 = vmatprep.subr.mxu0 0.0
    %212 = vmatpush1.msra.mxu0 0.0
    %213 = vmatprep.subr.mxu0 0.0
    %214 = vmatpush1.msra.mxu0 0.0
    %215 = vmatprep.subr.mxu0 0.0
    %216 = vmatpush1.msra.mxu0 0.0
    %217 = vmatprep.subr.mxu0 0.0
    %218 = vmatpush1.msra.mxu0 0.0
    %219 = vmatprep.subr.mxu0 0.0
    %220 = vmatpush1.msra.mxu0 0.0
    %221 = vmatprep.subr.mxu0 0.0
    %222 = vmatpush1.msra.mxu0 0.0
    %223 = vmatprep.subr.mxu0 0.0
    %224 = vmatpush1.msra.mxu0 0.0
    %225 = vmatprep.subr.mxu0 0.0
    %226 = vmatpush1.msra.mxu0 0.0
    %227 = vmatprep.subr.mxu0 0.0
    %228 = vmatpush1.msra.mxu0 0.0
    %229 = vmatprep.subr.mxu0 0.0
    %230 = vmatpush1.msra.mxu0 0.0
    %231 = vmatprep.subr.mxu0 0.0
    %232 = vmatpush1.msra.mxu0 0.0
    %233 = vmatprep.subr.mxu0 0.0
    %234 = vmatpush1.msra.mxu0 0.0
    %235 = vmatprep.mubr.f32.mxu0 0.0
    %236 = vmatmul.mubr.f32.gmra.mrb[0].mxu0 %v148
    %v237 = vpop.f32.mrb[0].mxu0
    %v238 = vadd.f32 %v144, %v237
    %v239 = vpop.f32.mrb[0].mxu0
    %240 = vmatprep.mubr.f32.mxu0 0.0
    %241 = vmatmul.mubr.f32.gmra.mrb[0].mxu0 %v151
    %v242 = vpop.f32.mrb[0].mxu0
    %v243 = vadd.f32 %v144, %v242
    %v244 = vpop.f32.mrb[0].mxu0
    %245 = vmatprep.mubr.f32.mxu0 0.0
    %246 = vmatmul.mubr.f32.gmra.mrb[0].mxu0 %v154
    %v247 = vpop.f32.mrb[0].mxu0
    %v248 = vadd.f32 %v144, %v247
    %v249 = vpop.f32.mrb[0].mxu0
    %250 = vmatprep.mubr.f32.mxu0 0.0
    %251 = vmatmul.mubr.f32.gmra.mrb[0].mxu0 %v157
    %v252 = vpop.f32.mrb[0].mxu0
    %v253 = vadd.f32 %v144, %v252
    %v254 = vpop.f32.mrb[0].mxu0
    %255 = vmatprep.mubr.f32.mxu0 0.0
    %256 = vmatmul.mubr.f32.gmra.mrb[0].mxu0 %v160
    %v257 = vpop.f32.mrb[0].mxu0
    %v258 = vadd.f32 %v144, %v257
    %v259 = vpop.f32.mrb[0].mxu0
    %260 = vmatprep.mubr.f32.mxu0 0.0
    %261 = vmatmul.mubr.f32.gmra.mrb[0].mxu0 %v163
    %v262 = vpop.f32.mrb[0].mxu0
    %v263 = vadd.f32 %v144, %v262
    %v264 = vpop.f32.mrb[0].mxu0
    %265 = vmatprep.mubr.f32.mxu0 0.0
    %266 = vmatmul.mubr.f32.gmra.mrb[0].mxu0 %v166
    %v267 = vpop.f32.mrb[0].mxu0
    %v268 = vadd.f32 %v144, %v267
    %v269 = vpop.f32.mrb[0].mxu0
    %270 = vmatprep.mubr.f32.mxu0 0.0
    %271 = vmatmul.mubr.f32.gmra.mrb[0].mxu0 %v169
    %v272 = vpop.f32.mrb[0].mxu0
    %v273 = vadd.f32 %v144, %v272
    %v274 = vpop.f32.mrb[0].mxu0
    %275 = vdwg.mxu0
    %v276 = vld [vmem:[#allocation3] sm:$0xff]
    %v277 = vld [vmem:[#allocation6] sm:$0xff]
    %v279 = vsel %vm146, %v276, 0
    %281 = vmatprep.subr.mxu0 0.0
    %282 = vmatpush1.msra.mxu0 %v115
    %283 = vmatprep.subr.mxu0 0.0
    %284 = vmatpush1.msra.mxu0 %v116
    %285 = vmatprep.subr.mxu0 0.0
    %286 = vmatpush1.msra.mxu0 %v117
    %287 = vmatprep.subr.mxu0 0.0
    %288 = vmatpush1.msra.mxu0 %v118
    %289 = vmatprep.subr.mxu0 0.0
    %290 = vmatpush1.msra.mxu0 0.0
    %291 = vmatprep.subr.mxu0 0.0
    %292 = vmatpush1.msra.mxu0 0.0
    %293 = vmatprep.subr.mxu0 0.0
    %294 = vmatpush1.msra.mxu0 0.0
    %295 = vmatprep.subr.mxu0 0.0
    %296 = vmatpush1.msra.mxu0 0.0
    %297 = vmatprep.subr.mxu0 0.0
    %298 = vmatpush1.msra.mxu0 0.0
    %299 = vmatprep.subr.mxu0 0.0
    %300 = vmatpush1.msra.mxu0 0.0
    %301 = vmatprep.subr.mxu0 0.0
    %302 = vmatpush1.msra.mxu0 0.0
    %303 = vmatprep.subr.mxu0 0.0
    %304 = vmatpush1.msra.mxu0 0.0
    %305 = vmatprep.subr.mxu0 0.0
    %306 = vmatpush1.msra.mxu0 0.0
    %307 = vmatprep.subr.mxu0 0.0
    %308 = vmatpush1.msra.mxu0 0.0
    %309 = vmatprep.subr.mxu0 0.0
    %310 = vmatpush1.msra.mxu0 0.0
    %311 = vmatprep.subr.mxu0 0.0
    %312 = vmatpush1.msra.mxu0 0.0
    %313 = vmatprep.subr.mxu0 0.0
    %314 = vmatpush1.msra.mxu0 0.0
    %315 = vmatprep.subr.mxu0 0.0
    %316 = vmatpush1.msra.mxu0 0.0
    %317 = vmatprep.subr.mxu0 0.0
    %318 = vmatpush1.msra.mxu0 0.0
    %319 = vmatprep.subr.mxu0 0.0
    %320 = vmatpush1.msra.mxu0 0.0
    %321 = vmatprep.subr.mxu0 0.0
    %322 = vmatpush1.msra.mxu0 0.0
    %323 = vmatprep.subr.mxu0 0.0
    %324 = vmatpush1.msra.mxu0 0.0
    %325 = vmatprep.subr.mxu0 0.0
    %326 = vmatpush1.msra.mxu0 0.0
    %327 = vmatprep.subr.mxu0 0.0
    %328 = vmatpush1.msra.mxu0 0.0
    %329 = vmatprep.subr.mxu0 0.0
    %330 = vmatpush1.msra.mxu0 0.0
    %331 = vmatprep.subr.mxu0 0.0
    %332 = vmatpush1.msra.mxu0 0.0
    %333 = vmatprep.subr.mxu0 0.0
    %334 = vmatpush1.msra.mxu0 0.0
    %335 = vmatprep.subr.mxu0 0.0
    %336 = vmatpush1.msra.mxu0 0.0
    %337 = vmatprep.subr.mxu0 0.0
    %338 = vmatpush1.msra.mxu0 0.0
    %339 = vmatprep.subr.mxu0 0.0
    %340 = vmatpush1.msra.mxu0 0.0
    %341 = vmatprep.subr.mxu0 0.0
    %342 = vmatpush1.msra.mxu0 0.0
    %343 = vmatprep.subr.mxu0 0.0
    %344 = vmatpush1.msra.mxu0 0.0
    %345 = vmatprep.mubr.f32.mxu0 0.0
    %346 = vmatmul.mubr.f32.gmra.mrb[0].mxu0 %v279
    %v347 = vpop.f32.mrb[0].mxu0
    %v348 = vadd.f32 0.0, %v347
    %v349 = vpop.f32.mrb[0].mxu0
    %350 = vdwg.mxu0
    %v351 = vadd.f32 %v238, %v348
    %v352 = vxor.u32 %v351, 2147483648
    %v353 = vmul.f32 %v352, 1.442695
    %v354 = vpow.pop %v353
    %v355 = vadd.f32 %v354, 1.0
    %v356 = vrcp.pop %v355
    %v357 = vmul.f32 1.0, %v356
    %v358 = vtanh.pop %v351
    %360 = vrot.lane.b32.xlu0 %v277, 32
    %v361 = vpop.permute.xlu0 %360
    %v363 = vmul.f32 %v357, %v361
    %365 = vrot.lane.b32.xlu0 %v358, 64
    %v366 = vpop.permute.xlu0 %365
    %v368 = vmul.f32 %v357, %v366
    %370 = vrot.lane.b32.xlu0 %v368, 32
    %v371 = vpop.permute.xlu0 %370
    %v373 = vadd.f32 %v363, %v371
    %v374 = vtanh.pop %v373
    %376 = vrot.lane.b32.xlu0 %v374, 64
    %v377 = vpop.permute.xlu0 %376
    %v379 = vmul.f32 %v357, %v377
    %v381 = vcombine.high %v379, %v379
    %v383 = vunpack.c.l.s4 1966171168
    %v384 = vunpack.c.0.s8 %v383
    %v385 = vlaneseq
    %v386 = vshrl.u32 %v385, 7
    %v387 = vsub.s32 %v384, %v386
    %v388 = vrot.slane %v379, %v387
    %v390 = vunpack.c.l.s4 1966171168
    %v391 = vunpack.c.0.s8 %v390
    %v392 = vlaneseq
    %v393 = vshrl.u32 %v392, 7
    %v394 = vsub.s32 %v391, %v393
    %v395 = vrot.slane %v381, %v394
    %v396 = vcombine.high %v388, %v388
    %v397 = vcombine.high %v395, %v395
    %v399 = vunpack.c.l.s4 1966171168
    %v400 = vunpack.c.0.s8 %v399
    %v401 = vlaneseq
    %v402 = vshrl.u32 %v401, 7
    %v403 = vsub.s32 %v400, %v402
    %v404 = vrot.slane %v388, %v403
    %v406 = vunpack.c.l.s4 1966171168
    %v407 = vunpack.c.0.s8 %v406
    %v408 = vlaneseq
    %v409 = vshrl.u32 %v408, 7
    %v410 = vsub.s32 %v407, %v409
    %v411 = vrot.slane %v395, %v410
    %v413 = vunpack.c.l.s4 1966171168
    %v414 = vunpack.c.0.s8 %v413
    %v415 = vlaneseq
    %v416 = vshrl.u32 %v415, 7
    %v417 = vsub.s32 %v414, %v416
    %v418 = vrot.slane %v396, %v417
    %v420 = vunpack.c.l.s4 1966171168
    %v421 = vunpack.c.0.s8 %v420
    %v422 = vlaneseq
    %v423 = vshrl.u32 %v422, 7
    %v424 = vsub.s32 %v421, %v423
    %v425 = vrot.slane %v397, %v424
    %v426 = vcombine.high %v404, %v404
    %v427 = vcombine.high %v411, %v411
    %v428 = vcombine.high %v418, %v418
    %v429 = vcombine.high %v425, %v425
    %v430 = vlaneseq
    %v431 = vshrl.u32 %v430, 7
    %v432 = vsub.s32 0, %v431
    %v433 = vrot.slane %v404, %v432
    %v434 = vlaneseq
    %v435 = vshrl.u32 %v434, 7
    %v436 = vsub.s32 0, %v435
    %v437 = vrot.slane %v418, %v436
    %v438 = vlaneseq
    %v439 = vshrl.u32 %v438, 7
    %v440 = vsub.s32 0, %v439
    %v441 = vrot.slane %v426, %v440
    %v442 = vlaneseq
    %v443 = vshrl.u32 %v442, 7
    %v444 = vsub.s32 0, %v443
    %v445 = vrot.slane %v428, %v444
    %v446 = vlaneseq
    %v447 = vshrl.u32 %v446, 7
    %v448 = vsub.s32 0, %v447
    %v449 = vrot.slane %v411, %v448
    %v450 = vlaneseq
    %v451 = vshrl.u32 %v450, 7
    %v452 = vsub.s32 0, %v451
    %v453 = vrot.slane %v425, %v452
    %v454 = vlaneseq
    %v455 = vshrl.u32 %v454, 7
    %v456 = vsub.s32 0, %v455
    %v457 = vrot.slane %v427, %v456
    %v458 = vlaneseq
    %v459 = vshrl.u32 %v458, 7
    %v460 = vsub.s32 0, %v459
    %v461 = vrot.slane %v429, %v460
    %462 = vrot.lane.b32.xlu0 %v433, 32
    %v463 = vpop.permute.xlu0 %462
    %464 = vrot.lane.b32.xlu0 %v437, 32
    %v465 = vpop.permute.xlu0 %464
    %466 = vrot.lane.b32.xlu0 %v441, 32
    %v467 = vpop.permute.xlu0 %466
    %468 = vrot.lane.b32.xlu0 %v445, 32
    %v469 = vpop.permute.xlu0 %468
    %470 = vrot.lane.b32.xlu0 %v449, 32
    %v471 = vpop.permute.xlu0 %470
    %472 = vrot.lane.b32.xlu0 %v453, 32
    %v473 = vpop.permute.xlu0 %472
    %474 = vrot.lane.b32.xlu0 %v457, 32
    %v475 = vpop.permute.xlu0 %474
    %476 = vrot.lane.b32.xlu0 %v461, 32
    %v477 = vpop.permute.xlu0 %476
    %v486 = vmul.f32 %v107, %v463
    %v487 = vmul.f32 %v108, %v465
    %v488 = vmul.f32 %v109, %v467
    %v489 = vmul.f32 %v110, %v469
    %v490 = vmul.f32 %v111, %v471
    %v491 = vmul.f32 %v112, %v473
    %v492 = vmul.f32 %v113, %v475
    %v493 = vmul.f32 %v114, %v477
    %v494 = vsel %vm146, %v486, 0.0
    %495 = vadd.xlane.f32.xlu0 %v494
    %v496 = vpop.xlane.xlu0 %495
    %v497 = vsel %vm146, %v487, 0.0
    %498 = vadd.xlane.f32.xlu0 %v497
    %v499 = vpop.xlane.xlu0 %498
    %v500 = vsel %vm146, %v488, 0.0
    %501 = vadd.xlane.f32.xlu0 %v500
    %v502 = vpop.xlane.xlu0 %501
    %v503 = vsel %vm146, %v489, 0.0
    %504 = vadd.xlane.f32.xlu0 %v503
    %v505 = vpop.xlane.xlu0 %504
    %v506 = vsel %vm146, %v490, 0.0
    %507 = vadd.xlane.f32.xlu0 %v506
    %v508 = vpop.xlane.xlu0 %507
    %v509 = vsel %vm146, %v491, 0.0
    %510 = vadd.xlane.f32.xlu0 %v509
    %v511 = vpop.xlane.xlu0 %510
    %v512 = vsel %vm146, %v492, 0.0
    %513 = vadd.xlane.f32.xlu0 %v512
    %v514 = vpop.xlane.xlu0 %513
    %v515 = vsel %vm146, %v493, 0.0
    %516 = vadd.xlane.f32.xlu0 %v515
    %v517 = vpop.xlane.xlu0 %516
    %v526 = vlaneseq
    %v527 = vand.u32 %v526, 127
    %v528 = vlaneseq
    %v529 = vshrl.u32 %v528, 7
    %v530 = vsub.s32 %v527, %v529
    %v531 = vrot.slane %v496, %v530
    %v532 = vlaneseq
    %v533 = vshrl.u32 %v532, 7
    %v534 = vsub.s32 %v527, %v533
    %v535 = vrot.slane %v499, %v534
    %v536 = vlaneseq
    %v537 = vshrl.u32 %v536, 7
    %v538 = vsub.s32 %v527, %v537
    %v539 = vrot.slane %v502, %v538
    %v540 = vlaneseq
    %v541 = vshrl.u32 %v540, 7
    %v542 = vsub.s32 %v527, %v541
    %v543 = vrot.slane %v505, %v542
    %v544 = vlaneseq
    %v545 = vshrl.u32 %v544, 7
    %v546 = vsub.s32 %v527, %v545
    %v547 = vrot.slane %v508, %v546
    %v548 = vlaneseq
    %v549 = vshrl.u32 %v548, 7
    %v550 = vsub.s32 %v527, %v549
    %v551 = vrot.slane %v511, %v550
    %v552 = vlaneseq
    %v553 = vshrl.u32 %v552, 7
    %v554 = vsub.s32 %v527, %v553
    %v555 = vrot.slane %v514, %v554
    %v556 = vlaneseq
    %v557 = vshrl.u32 %v556, 7
    %v558 = vsub.s32 %v527, %v557
    %v559 = vrot.slane %v517, %v558
    %vm560 = vcmask 1041409
    %v561 = vsel %vm560, %v535, %v531
    %vm562 = vcmask 1042434
    %v563 = vsel %vm562, %v539, %v561
    %vm564 = vcmask 1043459
    %v565 = vsel %vm564, %v543, %v563
    %vm566 = vcmask 1044484
    %v567 = vsel %vm566, %v547, %v565
    %vm568 = vcmask 1045509
    %v569 = vsel %vm568, %v551, %v567
    %vm570 = vcmask 1046534
    %v571 = vsel %vm570, %v555, %v569
    %vm572 = vcmask 1047559
    %v573 = vsel %vm572, %v559, %v571
    %vm575 = vcmask 64512
    %v576 = vsel %vm575, %v573, -inf
    %577 = vmax.xlane.f32.xlu0 %v576
    %v578 = vpop.xlane.xlu0 %577
    %v580 = vlaneseq
    %v581 = vshrl.u32 %v580, 7
    %v582 = vsub.s32 0, %v581
    %v583 = vrot.slane %v578, %v582
    %v584 = vlaneseq
    %v585 = vshrl.u32 %v584, 7
    %v586 = vsub.s32 1, %v585
    %v587 = vrot.slane %v578, %v586
    %v588 = vlaneseq
    %v589 = vshrl.u32 %v588, 7
    %v590 = vsub.s32 2, %v589
    %v591 = vrot.slane %v578, %v590
    %v592 = vlaneseq
    %v593 = vshrl.u32 %v592, 7
    %v594 = vsub.s32 3, %v593
    %v595 = vrot.slane %v578, %v594
    %v596 = vlaneseq
    %v597 = vshrl.u32 %v596, 7
    %v598 = vsub.s32 4, %v597
    %v599 = vrot.slane %v578, %v598
    %v600 = vlaneseq
    %v601 = vshrl.u32 %v600, 7
    %v602 = vsub.s32 5, %v601
    %v603 = vrot.slane %v578, %v602
    %v604 = vlaneseq
    %v605 = vshrl.u32 %v604, 7
    %v606 = vsub.s32 6, %v605
    %v607 = vrot.slane %v578, %v606
    %v608 = vlaneseq
    %v609 = vshrl.u32 %v608, 7
    %v610 = vsub.s32 7, %v609
    %v611 = vrot.slane %v578, %v610
    %v620 = vsub.f32 %v496, %v583
    %v621 = vsub.f32 %v499, %v587
    %v622 = vsub.f32 %v502, %v591
    %v623 = vsub.f32 %v505, %v595
    %v624 = vsub.f32 %v508, %v599
    %v625 = vsub.f32 %v511, %v603
    %v626 = vsub.f32 %v514, %v607
    %v627 = vsub.f32 %v517, %v611
    %v628 = vmul.f32 %v620, 1.442695
    %v629 = vpow.pop %v628
    %v630 = vmul.f32 %v621, 1.442695
    %v631 = vpow.pop %v630
    %v632 = vmul.f32 %v622, 1.442695
    %v633 = vpow.pop %v632
    %v634 = vmul.f32 %v623, 1.442695
    %v635 = vpow.pop %v634
    %v636 = vmul.f32 %v624, 1.442695
    %v637 = vpow.pop %v636
    %v638 = vmul.f32 %v625, 1.442695
    %v639 = vpow.pop %v638
    %v640 = vmul.f32 %v626, 1.442695
    %v641 = vpow.pop %v640
    %v642 = vmul.f32 %v627, 1.442695
    %v643 = vpow.pop %v642
    %652 = vset.pattern.permute.xlu0 0
    %653 = vperm.xlu0 %652, %v629
    %v654 = vpop.permute.xlu0 %653
    %655 = vset.pattern.permute.xlu0 0
    %656 = vperm.xlu0 %655, %v631
    %v657 = vpop.permute.xlu0 %656
    %658 = vset.pattern.permute.xlu0 0
    %659 = vperm.xlu0 %658, %v633
    %v660 = vpop.permute.xlu0 %659
    %661 = vset.pattern.permute.xlu0 0
    %662 = vperm.xlu0 %661, %v635
    %v663 = vpop.permute.xlu0 %662
    %664 = vset.pattern.permute.xlu0 0
    %665 = vperm.xlu0 %664, %v637
    %v666 = vpop.permute.xlu0 %665
    %667 = vset.pattern.permute.xlu0 0
    %668 = vperm.xlu0 %667, %v639
    %v669 = vpop.permute.xlu0 %668
    %670 = vset.pattern.permute.xlu0 0
    %671 = vperm.xlu0 %670, %v641
    %v672 = vpop.permute.xlu0 %671
    %673 = vset.pattern.permute.xlu0 0
    %674 = vperm.xlu0 %673, %v643
    %v675 = vpop.permute.xlu0 %674
    %v676 = vlaneseq
    %v677 = vshrl.u32 %v676, 7
    %v678 = vsub.s32 %v527, %v677
    %v679 = vrot.slane %v654, %v678
    %v680 = vlaneseq
    %v681 = vshrl.u32 %v680, 7
    %v682 = vsub.s32 %v527, %v681
    %v683 = vrot.slane %v657, %v682
    %v684 = vlaneseq
    %v685 = vshrl.u32 %v684, 7
    %v686 = vsub.s32 %v527, %v685
    %v687 = vrot.slane %v660, %v686
    %v688 = vlaneseq
    %v689 = vshrl.u32 %v688, 7
    %v690 = vsub.s32 %v527, %v689
    %v691 = vrot.slane %v663, %v690
    %v692 = vlaneseq
    %v693 = vshrl.u32 %v692, 7
    %v694 = vsub.s32 %v527, %v693
    %v695 = vrot.slane %v666, %v694
    %v696 = vlaneseq
    %v697 = vshrl.u32 %v696, 7
    %v698 = vsub.s32 %v527, %v697
    %v699 = vrot.slane %v669, %v698
    %v700 = vlaneseq
    %v701 = vshrl.u32 %v700, 7
    %v702 = vsub.s32 %v527, %v701
    %v703 = vrot.slane %v672, %v702
    %v704 = vlaneseq
    %v705 = vshrl.u32 %v704, 7
    %v706 = vsub.s32 %v527, %v705
    %v707 = vrot.slane %v675, %v706
    %v708 = vsel %vm560, %v683, %v679
    %v709 = vsel %vm562, %v687, %v708
    %v710 = vsel %vm564, %v691, %v709
    %v711 = vsel %vm566, %v695, %v710
    %v712 = vsel %vm568, %v699, %v711
    %v713 = vsel %vm570, %v703, %v712
    %v714 = vsel %vm572, %v707, %v713
    %v716 = vsel %vm575, %v714, 0.0
    %717 = vadd.xlane.f32.xlu0 %v716
    %v718 = vpop.xlane.xlu0 %717
    %v719 = vrcp.pop %v718
    %v721 = vlaneseq
    %v722 = vshrl.u32 %v721, 7
    %v723 = vsub.s32 0, %v722
    %v724 = vrot.slane %v719, %v723
    %v725 = vlaneseq
    %v726 = vshrl.u32 %v725, 7
    %v727 = vsub.s32 1, %v726
    %v728 = vrot.slane %v719, %v727
    %v729 = vlaneseq
    %v730 = vshrl.u32 %v729, 7
    %v731 = vsub.s32 2, %v730
    %v732 = vrot.slane %v719, %v731
    %v733 = vlaneseq
    %v734 = vshrl.u32 %v733, 7
    %v735 = vsub.s32 3, %v734
    %v736 = vrot.slane %v719, %v735
    %v737 = vlaneseq
    %v738 = vshrl.u32 %v737, 7
    %v739 = vsub.s32 4, %v738
    %v740 = vrot.slane %v719, %v739
    %v741 = vlaneseq
    %v742 = vshrl.u32 %v741, 7
    %v743 = vsub.s32 5, %v742
    %v744 = vrot.slane %v719, %v743
    %v745 = vlaneseq
    %v746 = vshrl.u32 %v745, 7
    %v747 = vsub.s32 6, %v746
    %v748 = vrot.slane %v719, %v747
    %v749 = vlaneseq
    %v750 = vshrl.u32 %v749, 7
    %v751 = vsub.s32 7, %v750
    %v752 = vrot.slane %v719, %v751
    %v761 = vmul.f32 %v629, %v724
    %v762 = vmul.f32 %v631, %v728
    %v763 = vmul.f32 %v633, %v732
    %v764 = vmul.f32 %v635, %v736
    %v765 = vmul.f32 %v637, %v740
    %v766 = vmul.f32 %v639, %v744
    %v767 = vmul.f32 %v641, %v748
    %v768 = vmul.f32 %v643, %v752
    %770 = vset.pattern.permute.xlu0 0
    %771 = vperm.xlu0 %770, %v761
    %v772 = vpop.permute.xlu0 %771
    %775 = vset.pattern.permute.xlu0 0
    %776 = vperm.xlu0 %775, %v762
    %v777 = vpop.permute.xlu0 %776
    %780 = vset.pattern.permute.xlu0 0
    %781 = vperm.xlu0 %780, %v763
    %v782 = vpop.permute.xlu0 %781
    %785 = vset.pattern.permute.xlu0 0
    %786 = vperm.xlu0 %785, %v764
    %v787 = vpop.permute.xlu0 %786
    %790 = vset.pattern.permute.xlu0 0
    %791 = vperm.xlu0 %790, %v765
    %v792 = vpop.permute.xlu0 %791
    %795 = vset.pattern.permute.xlu0 0
    %796 = vperm.xlu0 %795, %v766
    %v797 = vpop.permute.xlu0 %796
    %800 = vset.pattern.permute.xlu0 0
    %801 = vperm.xlu0 %800, %v767
    %v802 = vpop.permute.xlu0 %801
    %805 = vset.pattern.permute.xlu0 0
    %806 = vperm.xlu0 %805, %v768
    %v807 = vpop.permute.xlu0 %806
    %v809 = vmul.f32 %v772, %v107
    %v810 = vmul.f32 %v777, %v108
    %v811 = vmul.f32 %v782, %v109
    %v812 = vmul.f32 %v787, %v110
    %v813 = vmul.f32 %v792, %v111
    %v814 = vmul.f32 %v797, %v112
    %v815 = vmul.f32 %v802, %v113
    %v816 = vmul.f32 %v807, %v114
    %v817 = vsel %vm146, %v809, 0.0
    %v818 = vrot.slane %v817, 4
    %v819 = vadd.f32 %v817, %v818
    %v820 = vrot.slane %v819, 2
    %v821 = vadd.f32 %v819, %v820
    %v822 = vrot.slane %v821, 1
    %v823 = vadd.f32 %v821, %v822
    %v824 = vsel %vm146, %v810, 0.0
    %v825 = vrot.slane %v824, 4
    %v826 = vadd.f32 %v824, %v825
    %v827 = vrot.slane %v826, 2
    %v828 = vadd.f32 %v826, %v827
    %v829 = vrot.slane %v828, 1
    %v830 = vadd.f32 %v828, %v829
    %v831 = vsel %vm146, %v811, 0.0
    %v832 = vrot.slane %v831, 4
    %v833 = vadd.f32 %v831, %v832
    %v834 = vrot.slane %v833, 2
    %v835 = vadd.f32 %v833, %v834
    %v836 = vrot.slane %v835, 1
    %v837 = vadd.f32 %v835, %v836
    %v838 = vsel %vm146, %v812, 0.0
    %v839 = vrot.slane %v838, 4
    %v840 = vadd.f32 %v838, %v839
    %v841 = vrot.slane %v840, 2
    %v842 = vadd.f32 %v840, %v841
    %v843 = vrot.slane %v842, 1
    %v844 = vadd.f32 %v842, %v843
    %v845 = vsel %vm146, %v813, 0.0
    %v846 = vrot.slane %v845, 4
    %v847 = vadd.f32 %v845, %v846
    %v848 = vrot.slane %v847, 2
    %v849 = vadd.f32 %v847, %v848
    %v850 = vrot.slane %v849, 1
    %v851 = vadd.f32 %v849, %v850
    %v852 = vsel %vm146, %v814, 0.0
    %v853 = vrot.slane %v852, 4
    %v854 = vadd.f32 %v852, %v853
    %v855 = vrot.slane %v854, 2
    %v856 = vadd.f32 %v854, %v855
    %v857 = vrot.slane %v856, 1
    %v858 = vadd.f32 %v856, %v857
    %v859 = vsel %vm146, %v815, 0.0
    %v860 = vrot.slane %v859, 4
    %v861 = vadd.f32 %v859, %v860
    %v862 = vrot.slane %v861, 2
    %v863 = vadd.f32 %v861, %v862
    %v864 = vrot.slane %v863, 1
    %v865 = vadd.f32 %v863, %v864
    %v866 = vsel %vm146, %v816, 0.0
    %v867 = vrot.slane %v866, 4
    %v868 = vadd.f32 %v866, %v867
    %v869 = vrot.slane %v868, 2
    %v870 = vadd.f32 %v868, %v869
    %v871 = vrot.slane %v870, 1
    %v872 = vadd.f32 %v870, %v871
    %v881 = vsel %vm560, %v830, %v823
    %v882 = vsel %vm562, %v837, %v881
    %v883 = vsel %vm564, %v844, %v882
    %v884 = vsel %vm566, %v851, %v883
    %v885 = vsel %vm568, %v858, %v884
    %v886 = vsel %vm570, %v865, %v885
    %v887 = vsel %vm572, %v872, %v886
    %v888 = vsel %vm146, %v887, 0
    %890 = vmatprep.subr.mxu0 0.0
    %891 = vmatpush1.msra.mxu0 %v123
    %892 = vmatprep.subr.mxu0 0.0
    %893 = vmatpush1.msra.mxu0 %v124
    %894 = vmatprep.subr.mxu0 0.0
    %895 = vmatpush1.msra.mxu0 %v125
    %896 = vmatprep.subr.mxu0 0.0
    %897 = vmatpush1.msra.mxu0 %v126
    %898 = vmatprep.subr.mxu0 0.0
    %899 = vmatpush1.msra.mxu0 0.0
    %900 = vmatprep.subr.mxu0 0.0
    %901 = vmatpush1.msra.mxu0 0.0
    %902 = vmatprep.subr.mxu0 0.0
    %903 = vmatpush1.msra.mxu0 0.0
    %904 = vmatprep.subr.mxu0 0.0
    %905 = vmatpush1.msra.mxu0 0.0
    %906 = vmatprep.subr.mxu0 0.0
    %907 = vmatpush1.msra.mxu0 0.0
    %908 = vmatprep.subr.mxu0 0.0
    %909 = vmatpush1.msra.mxu0 0.0
    %910 = vmatprep.subr.mxu0 0.0
    %911 = vmatpush1.msra.mxu0 0.0
    %912 = vmatprep.subr.mxu0 0.0
    %913 = vmatpush1.msra.mxu0 0.0
    %914 = vmatprep.subr.mxu0 0.0
    %915 = vmatpush1.msra.mxu0 0.0
    %916 = vmatprep.subr.mxu0 0.0
    %917 = vmatpush1.msra.mxu0 0.0
    %918 = vmatprep.subr.mxu0 0.0
    %919 = vmatpush1.msra.mxu0 0.0
    %920 = vmatprep.subr.mxu0 0.0
    %921 = vmatpush1.msra.mxu0 0.0
    %922 = vmatprep.subr.mxu0 0.0
    %923 = vmatpush1.msra.mxu0 0.0
    %924 = vmatprep.subr.mxu0 0.0
    %925 = vmatpush1.msra.mxu0 0.0
    %926 = vmatprep.subr.mxu0 0.0
    %927 = vmatpush1.msra.mxu0 0.0
    %928 = vmatprep.subr.mxu0 0.0
    %929 = vmatpush1.msra.mxu0 0.0
    %930 = vmatprep.subr.mxu0 0.0
    %931 = vmatpush1.msra.mxu0 0.0
    %932 = vmatprep.subr.mxu0 0.0
    %933 = vmatpush1.msra.mxu0 0.0
    %934 = vmatprep.subr.mxu0 0.0
    %935 = vmatpush1.msra.mxu0 0.0
    %936 = vmatprep.subr.mxu0 0.0
    %937 = vmatpush1.msra.mxu0 0.0
    %938 = vmatprep.subr.mxu0 0.0
    %939 = vmatpush1.msra.mxu0 0.0
    %940 = vmatprep.subr.mxu0 0.0
    %941 = vmatpush1.msra.mxu0 0.0
    %942 = vmatprep.subr.mxu0 0.0
    %943 = vmatpush1.msra.mxu0 0.0
    %944 = vmatprep.subr.mxu0 0.0
    %945 = vmatpush1.msra.mxu0 0.0
    %946 = vmatprep.subr.mxu0 0.0
    %947 = vmatpush1.msra.mxu0 0.0
    %948 = vmatprep.subr.mxu0 0.0
    %949 = vmatpush1.msra.mxu0 0.0
    %950 = vmatprep.subr.mxu0 0.0
    %951 = vmatpush1.msra.mxu0 0.0
    %952 = vmatprep.subr.mxu0 0.0
    %953 = vmatpush1.msra.mxu0 0.0
    %954 = vmatprep.mubr.f32.mxu0 0.0
    %955 = vmatmul.mubr.f32.gmra.mrb[0].mxu0 %v888
    %v956 = vpop.f32.mrb[0].mxu0
    %v957 = vadd.f32 0.0, %v956
    %v958 = vpop.f32.mrb[0].mxu0
    %959 = vdwg.mxu0
    %960 = vrot.lane.b32.xlu0 %v379, 32
    %v961 = vpop.permute.xlu0 %960
    %v962 = vsel %vm146, %v961, 0
    %964 = vmatprep.subr.mxu0 0.0
    %965 = vmatpush1.msra.mxu0 %v119
    %966 = vmatprep.subr.mxu0 0.0
    %967 = vmatpush1.msra.mxu0 %v120
    %968 = vmatprep.subr.mxu0 0.0
    %969 = vmatpush1.msra.mxu0 %v121
    %970 = vmatprep.subr.mxu0 0.0
    %971 = vmatpush1.msra.mxu0 %v122
    %972 = vmatprep.subr.mxu0 0.0
    %973 = vmatpush1.msra.mxu0 0.0
    %974 = vmatprep.subr.mxu0 0.0
    %975 = vmatpush1.msra.mxu0 0.0
    %976 = vmatprep.subr.mxu0 0.0
    %977 = vmatpush1.msra.mxu0 0.0
    %978 = vmatprep.subr.mxu0 0.0
    %979 = vmatpush1.msra.mxu0 0.0
    %980 = vmatprep.subr.mxu0 0.0
    %981 = vmatpush1.msra.mxu0 0.0
    %982 = vmatprep.subr.mxu0 0.0
    %983 = vmatpush1.msra.mxu0 0.0
    %984 = vmatprep.subr.mxu0 0.0
    %985 = vmatpush1.msra.mxu0 0.0
    %986 = vmatprep.subr.mxu0 0.0
    %987 = vmatpush1.msra.mxu0 0.0
    %988 = vmatprep.subr.mxu0 0.0
    %989 = vmatpush1.msra.mxu0 0.0
    %990 = vmatprep.subr.mxu0 0.0
    %991 = vmatpush1.msra.mxu0 0.0
    %992 = vmatprep.subr.mxu0 0.0
    %993 = vmatpush1.msra.mxu0 0.0
    %994 = vmatprep.subr.mxu0 0.0
    %995 = vmatpush1.msra.mxu0 0.0
    %996 = vmatprep.subr.mxu0 0.0
    %997 = vmatpush1.msra.mxu0 0.0
    %998 = vmatprep.subr.mxu0 0.0
    %999 = vmatpush1.msra.mxu0 0.0
    %1000 = vmatprep.subr.mxu0 0.0
    %1001 = vmatpush1.msra.mxu0 0.0
    %1002 = vmatprep.subr.mxu0 0.0
    %1003 = vmatpush1.msra.mxu0 0.0
    %1004 = vmatprep.subr.mxu0 0.0
    %1005 = vmatpush1.msra.mxu0 0.0
    %1006 = vmatprep.subr.mxu0 0.0
    %1007 = vmatpush1.msra.mxu0 0.0
    %1008 = vmatprep.subr.mxu0 0.0
    %1009 = vmatpush1.msra.mxu0 0.0
    %1010 = vmatprep.subr.mxu0 0.0
    %1011 = vmatpush1.msra.mxu0 0.0
    %1012 = vmatprep.subr.mxu0 0.0
    %1013 = vmatpush1.msra.mxu0 0.0
    %1014 = vmatprep.subr.mxu0 0.0
    %1015 = vmatpush1.msra.mxu0 0.0
    %1016 = vmatprep.subr.mxu0 0.0
    %1017 = vmatpush1.msra.mxu0 0.0
    %1018 = vmatprep.subr.mxu0 0.0
    %1019 = vmatpush1.msra.mxu0 0.0
    %1020 = vmatprep.subr.mxu0 0.0
    %1021 = vmatpush1.msra.mxu0 0.0
    %1022 = vmatprep.subr.mxu0 0.0
    %1023 = vmatpush1.msra.mxu0 0.0
    %1024 = vmatprep.subr.mxu0 0.0
    %1025 = vmatpush1.msra.mxu0 0.0
    %1026 = vmatprep.subr.mxu0 0.0
    %1027 = vmatpush1.msra.mxu0 0.0
    %1028 = vmatprep.mubr.f32.mxu0 0.0
    %1029 = vmatmul.mubr.f32.gmra.mrb[0].mxu0 %v962
    %v1030 = vpop.f32.mrb[0].mxu0
    %v1031 = vadd.f32 %v957, %v1030
    %v1032 = vpop.f32.mrb[0].mxu0
    %1033 = vdwg.mxu0
    %v1034 = vtanh.pop %v1031
    %1035 = vst.msk [vmem:[#allocation2] sm:$0xff] %vm146, %v1034
    %1036 = vmatprep.subr.mxu0 0.0
    %1037 = vmatpush1.msra.mxu0 %v115
    %1038 = vmatprep.subr.mxu0 0.0
    %1039 = vmatpush1.msra.mxu0 %v116
    %1040 = vmatprep.subr.mxu0 0.0
    %1041 = vmatpush1.msra.mxu0 %v117
    %1042 = vmatprep.subr.mxu0 0.0
    %1043 = vmatpush1.msra.mxu0 %v118
    %1044 = vmatprep.subr.mxu0 0.0
    %1045 = vmatpush1.msra.mxu0 0.0
    %1046 = vmatprep.subr.mxu0 0.0
    %1047 = vmatpush1.msra.mxu0 0.0
    %1048 = vmatprep.subr.mxu0 0.0
    %1049 = vmatpush1.msra.mxu0 0.0
    %1050 = vmatprep.subr.mxu0 0.0
    %1051 = vmatpush1.msra.mxu0 0.0
    %1052 = vmatprep.subr.mxu0 0.0
    %1053 = vmatpush1.msra.mxu0 0.0
    %1054 = vmatprep.subr.mxu0 0.0
    %1055 = vmatpush1.msra.mxu0 0.0
    %1056 = vmatprep.subr.mxu0 0.0
    %1057 = vmatpush1.msra.mxu0 0.0
    %1058 = vmatprep.subr.mxu0 0.0
    %1059 = vmatpush1.msra.mxu0 0.0
    %1060 = vmatprep.subr.mxu0 0.0
    %1061 = vmatpush1.msra.mxu0 0.0
    %1062 = vmatprep.subr.mxu0 0.0
    %1063 = vmatpush1.msra.mxu0 0.0
    %1064 = vmatprep.subr.mxu0 0.0
    %1065 = vmatpush1.msra.mxu0 0.0
    %1066 = vmatprep.subr.mxu0 0.0
    %1067 = vmatpush1.msra.mxu0 0.0
    %1068 = vmatprep.subr.mxu0 0.0
    %1069 = vmatpush1.msra.mxu0 0.0
    %1070 = vmatprep.subr.mxu0 0.0
    %1071 = vmatpush1.msra.mxu0 0.0
    %1072 = vmatprep.subr.mxu0 0.0
    %1073 = vmatpush1.msra.mxu0 0.0
    %1074 = vmatprep.subr.mxu0 0.0
    %1075 = vmatpush1.msra.mxu0 0.0
    %1076 = vmatprep.subr.mxu0 0.0
    %1077 = vmatpush1.msra.mxu0 0.0
    %1078 = vmatprep.subr.mxu0 0.0
    %1079 = vmatpush1.msra.mxu0 0.0
    %1080 = vmatprep.subr.mxu0 0.0
    %1081 = vmatpush1.msra.mxu0 0.0
    %1082 = vmatprep.subr.mxu0 0.0
    %1083 = vmatpush1.msra.mxu0 0.0
    %1084 = vmatprep.subr.mxu0 0.0
    %1085 = vmatpush1.msra.mxu0 0.0
    %1086 = vmatprep.subr.mxu0 0.0
    %1087 = vmatpush1.msra.mxu0 0.0
    %1088 = vmatprep.subr.mxu0 0.0
    %1089 = vmatpush1.msra.mxu0 0.0
    %1090 = vmatprep.subr.mxu0 0.0
    %1091 = vmatpush1.msra.mxu0 0.0
    %1092 = vmatprep.subr.mxu0 0.0
    %1093 = vmatpush1.msra.mxu0 0.0
    %1094 = vmatprep.subr.mxu0 0.0
    %1095 = vmatpush1.msra.mxu0 0.0
    %1096 = vmatprep.subr.mxu0 0.0
    %1097 = vmatpush1.msra.mxu0 0.0
    %1098 = vmatprep.subr.mxu0 0.0
    %1099 = vmatpush1.msra.mxu0 0.0
    %1100 = vmatprep.mubr.f32.mxu0 0.0
    %1101 = vmatmul.mubr.f32.gmra.mrb[0].mxu0 %v962
    %v1102 = vpop.f32.mrb[0].mxu0
    %v1103 = vadd.f32 0.0, %v1102
    %v1104 = vpop.f32.mrb[0].mxu0
    %1105 = vdwg.mxu0
    %v1106 = vadd.f32 %v243, %v1103
    %v1107 = vxor.u32 %v1106, 2147483648
    %v1108 = vmul.f32 %v1107, 1.442695
    %v1109 = vpow.pop %v1108
    %v1110 = vadd.f32 %v1109, 1.0
    %v1111 = vrcp.pop %v1110
    %v1112 = vmul.f32 1.0, %v1111
    %v1113 = vtanh.pop %v1106
    %v1114 = vmul.f32 %v1112, %v373
    %1116 = vrot.lane.b32.xlu0 %v1113, 64
    %v1117 = vpop.permute.xlu0 %1116
    %v1119 = vmul.f32 %v1112, %v1117
    %1121 = vrot.lane.b32.xlu0 %v1119, 32
    %v1122 = vpop.permute.xlu0 %1121
    %v1124 = vadd.f32 %v1114, %v1122
    %v1125 = vtanh.pop %v1124
    %1127 = vrot.lane.b32.xlu0 %v1125, 64
    %v1128 = vpop.permute.xlu0 %1127
    %v1130 = vmul.f32 %v1112, %v1128
    %v1132 = vcombine.high %v1130, %v1130
    %v1134 = vunpack.c.l.s4 1966171168
    %v1135 = vunpack.c.0.s8 %v1134
    %v1136 = vlaneseq
    %v1137 = vshrl.u32 %v1136, 7
    %v1138 = vsub.s32 %v1135, %v1137
    %v1139 = vrot.slane %v1130, %v1138
    %v1141 = vunpack.c.l.s4 1966171168
    %v1142 = vunpack.c.0.s8 %v1141
    %v1143 = vlaneseq
    %v1144 = vshrl.u32 %v1143, 7
    %v1145 = vsub.s32 %v1142, %v1144
    %v1146 = vrot.slane %v1132, %v1145
    %v1147 = vcombine.high %v1139, %v1139
    %v1148 = vcombine.high %v1146, %v1146
    %v1150 = vunpack.c.l.s4 1966171168
    %v1151 = vunpack.c.0.s8 %v1150
    %v1152 = vlaneseq
    %v1153 = vshrl.u32 %v1152, 7
    %v1154 = vsub.s32 %v1151, %v1153
    %v1155 = vrot.slane %v1139, %v1154
    %v1157 = vunpack.c.l.s4 1966171168
    %v1158 = vunpack.c.0.s8 %v1157
    %v1159 = vlaneseq
    %v1160 = vshrl.u32 %v1159, 7
    %v1161 = vsub.s32 %v1158, %v1160
    %v1162 = vrot.slane %v1146, %v1161
    %v1164 = vunpack.c.l.s4 1966171168
    %v1165 = vunpack.c.0.s8 %v1164
    %v1166 = vlaneseq
    %v1167 = vshrl.u32 %v1166, 7
    %v1168 = vsub.s32 %v1165, %v1167
    %v1169 = vrot.slane %v1147, %v1168
    %v1171 = vunpack.c.l.s4 1966171168
    %v1172 = vunpack.c.0.s8 %v1171
    %v1173 = vlaneseq
    %v1174 = vshrl.u32 %v1173, 7
    %v1175 = vsub.s32 %v1172, %v1174
    %v1176 = vrot.slane %v1148, %v1175
    %v1177 = vcombine.high %v1155, %v1155
    %v1178 = vcombine.high %v1162, %v1162
    %v1179 = vcombine.high %v1169, %v1169
    %v1180 = vcombine.high %v1176, %v1176
    %v1181 = vlaneseq
    %v1182 = vshrl.u32 %v1181, 7
    %v1183 = vsub.s32 0, %v1182
    %v1184 = vrot.slane %v1155, %v1183
    %v1185 = vlaneseq
    %v1186 = vshrl.u32 %v1185, 7
    %v1187 = vsub.s32 0, %v1186
    %v1188 = vrot.slane %v1169, %v1187
    %v1189 = vlaneseq
    %v1190 = vshrl.u32 %v1189, 7
    %v1191 = vsub.s32 0, %v1190
    %v1192 = vrot.slane %v1177, %v1191
    %v1193 = vlaneseq
    %v1194 = vshrl.u32 %v1193, 7
    %v1195 = vsub.s32 0, %v1194
    %v1196 = vrot.slane %v1179, %v1195
    %v1197 = vlaneseq
    %v1198 = vshrl.u32 %v1197, 7
    %v1199 = vsub.s32 0, %v1198
    %v1200 = vrot.slane %v1162, %v1199
    %v1201 = vlaneseq
    %v1202 = vshrl.u32 %v1201, 7
    %v1203 = vsub.s32 0, %v1202
    %v1204 = vrot.slane %v1176, %v1203
    %v1205 = vlaneseq
    %v1206 = vshrl.u32 %v1205, 7
    %v1207 = vsub.s32 0, %v1206
    %v1208 = vrot.slane %v1178, %v1207
    %v1209 = vlaneseq
    %v1210 = vshrl.u32 %v1209, 7
    %v1211 = vsub.s32 0, %v1210
    %v1212 = vrot.slane %v1180, %v1211
    %1213 = vrot.lane.b32.xlu0 %v1184, 32
    %v1214 = vpop.permute.xlu0 %1213
    %1215 = vrot.lane.b32.xlu0 %v1188, 32
    %v1216 = vpop.permute.xlu0 %1215
    %1217 = vrot.lane.b32.xlu0 %v1192, 32
    %v1218 = vpop.permute.xlu0 %1217
    %1219 = vrot.lane.b32.xlu0 %v1196, 32
    %v1220 = vpop.permute.xlu0 %1219
    %1221 = vrot.lane.b32.xlu0 %v1200, 32
    %v1222 = vpop.permute.xlu0 %1221
    %1223 = vrot.lane.b32.xlu0 %v1204, 32
    %v1224 = vpop.permute.xlu0 %1223
    %1225 = vrot.lane.b32.xlu0 %v1208, 32
    %v1226 = vpop.permute.xlu0 %1225
    %1227 = vrot.lane.b32.xlu0 %v1212, 32
    %v1228 = vpop.permute.xlu0 %1227
    %v1237 = vmul.f32 %v107, %v1214
    %v1238 = vmul.f32 %v108, %v1216
    %v1239 = vmul.f32 %v109, %v1218
    %v1240 = vmul.f32 %v110, %v1220
    %v1241 = vmul.f32 %v111, %v1222
    %v1242 = vmul.f32 %v112, %v1224
    %v1243 = vmul.f32 %v113, %v1226
    %v1244 = vmul.f32 %v114, %v1228
    %v1245 = vsel %vm146, %v1237, 0.0
    %1246 = vadd.xlane.f32.xlu0 %v1245
    %v1247 = vpop.xlane.xlu0 %1246
    %v1248 = vsel %vm146, %v1238, 0.0
    %1249 = vadd.xlane.f32.xlu0 %v1248
    %v1250 = vpop.xlane.xlu0 %1249
    %v1251 = vsel %vm146, %v1239, 0.0
    %1252 = vadd.xlane.f32.xlu0 %v1251
    %v1253 = vpop.xlane.xlu0 %1252
    %v1254 = vsel %vm146, %v1240, 0.0
    %1255 = vadd.xlane.f32.xlu0 %v1254
    %v1256 = vpop.xlane.xlu0 %1255
    %v1257 = vsel %vm146, %v1241, 0.0
    %1258 = vadd.xlane.f32.xlu0 %v1257
    %v1259 = vpop.xlane.xlu0 %1258
    %v1260 = vsel %vm146, %v1242, 0.0
    %1261 = vadd.xlane.f32.xlu0 %v1260
    %v1262 = vpop.xlane.xlu0 %1261
    %v1263 = vsel %vm146, %v1243, 0.0
    %1264 = vadd.xlane.f32.xlu0 %v1263
    %v1265 = vpop.xlane.xlu0 %1264
    %v1266 = vsel %vm146, %v1244, 0.0
    %1267 = vadd.xlane.f32.xlu0 %v1266
    %v1268 = vpop.xlane.xlu0 %1267
    %v1277 = vlaneseq
    %v1278 = vshrl.u32 %v1277, 7
    %v1279 = vsub.s32 %v527, %v1278
    %v1280 = vrot.slane %v1247, %v1279
    %v1281 = vlaneseq
    %v1282 = vshrl.u32 %v1281, 7
    %v1283 = vsub.s32 %v527, %v1282
    %v1284 = vrot.slane %v1250, %v1283
    %v1285 = vlaneseq
    %v1286 = vshrl.u32 %v1285, 7
    %v1287 = vsub.s32 %v527, %v1286
    %v1288 = vrot.slane %v1253, %v1287
    %v1289 = vlaneseq
    %v1290 = vshrl.u32 %v1289, 7
    %v1291 = vsub.s32 %v527, %v1290
    %v1292 = vrot.slane %v1256, %v1291
    %v1293 = vlaneseq
    %v1294 = vshrl.u32 %v1293, 7
    %v1295 = vsub.s32 %v527, %v1294
    %v1296 = vrot.slane %v1259, %v1295
    %v1297 = vlaneseq
    %v1298 = vshrl.u32 %v1297, 7
    %v1299 = vsub.s32 %v527, %v1298
    %v1300 = vrot.slane %v1262, %v1299
    %v1301 = vlaneseq
    %v1302 = vshrl.u32 %v1301, 7
    %v1303 = vsub.s32 %v527, %v1302
    %v1304 = vrot.slane %v1265, %v1303
    %v1305 = vlaneseq
    %v1306 = vshrl.u32 %v1305, 7
    %v1307 = vsub.s32 %v527, %v1306
    %v1308 = vrot.slane %v1268, %v1307
    %v1309 = vsel %vm560, %v1284, %v1280
    %v1310 = vsel %vm562, %v1288, %v1309
    %v1311 = vsel %vm564, %v1292, %v1310
    %v1312 = vsel %vm566, %v1296, %v1311
    %v1313 = vsel %vm568, %v1300, %v1312
    %v1314 = vsel %vm570, %v1304, %v1313
    %v1315 = vsel %vm572, %v1308, %v1314
    %v1317 = vsel %vm575, %v1315, -inf
    %1318 = vmax.xlane.f32.xlu0 %v1317
    %v1319 = vpop.xlane.xlu0 %1318
    %v1321 = vlaneseq
    %v1322 = vshrl.u32 %v1321, 7
    %v1323 = vsub.s32 0, %v1322
    %v1324 = vrot.slane %v1319, %v1323
    %v1325 = vlaneseq
    %v1326 = vshrl.u32 %v1325, 7
    %v1327 = vsub.s32 1, %v1326
    %v1328 = vrot.slane %v1319, %v1327
    %v1329 = vlaneseq
    %v1330 = vshrl.u32 %v1329, 7
    %v1331 = vsub.s32 2, %v1330
    %v1332 = vrot.slane %v1319, %v1331
    %v1333 = vlaneseq
    %v1334 = vshrl.u32 %v1333, 7
    %v1335 = vsub.s32 3, %v1334
    %v1336 = vrot.slane %v1319, %v1335
    %v1337 = vlaneseq
    %v1338 = vshrl.u32 %v1337, 7
    %v1339 = vsub.s32 4, %v1338
    %v1340 = vrot.slane %v1319, %v1339
    %v1341 = vlaneseq
    %v1342 = vshrl.u32 %v1341, 7
    %v1343 = vsub.s32 5, %v1342
    %v1344 = vrot.slane %v1319, %v1343
    %v1345 = vlaneseq
    %v1346 = vshrl.u32 %v1345, 7
    %v1347 = vsub.s32 6, %v1346
    %v1348 = vrot.slane %v1319, %v1347
    %v1349 = vlaneseq
    %v1350 = vshrl.u32 %v1349, 7
    %v1351 = vsub.s32 7, %v1350
    %v1352 = vrot.slane %v1319, %v1351
    %v1361 = vsub.f32 %v1247, %v1324
    %v1362 = vsub.f32 %v1250, %v1328
    %v1363 = vsub.f32 %v1253, %v1332
    %v1364 = vsub.f32 %v1256, %v1336
    %v1365 = vsub.f32 %v1259, %v1340
    %v1366 = vsub.f32 %v1262, %v1344
    %v1367 = vsub.f32 %v1265, %v1348
    %v1368 = vsub.f32 %v1268, %v1352
    %v1369 = vmul.f32 %v1361, 1.442695
    %v1370 = vpow.pop %v1369
    %v1371 = vmul.f32 %v1362, 1.442695
    %v1372 = vpow.pop %v1371
    %v1373 = vmul.f32 %v1363, 1.442695
    %v1374 = vpow.pop %v1373
    %v1375 = vmul.f32 %v1364, 1.442695
    %v1376 = vpow.pop %v1375
    %v1377 = vmul.f32 %v1365, 1.442695
    %v1378 = vpow.pop %v1377
    %v1379 = vmul.f32 %v1366, 1.442695
    %v1380 = vpow.pop %v1379
    %v1381 = vmul.f32 %v1367, 1.442695
    %v1382 = vpow.pop %v1381
    %v1383 = vmul.f32 %v1368, 1.442695
    %v1384 = vpow.pop %v1383
    %1393 = vset.pattern.permute.xlu0 0
    %1394 = vperm.xlu0 %1393, %v1370
    %v1395 = vpop.permute.xlu0 %1394
    %1396 = vset.pattern.permute.xlu0 0
    %1397 = vperm.xlu0 %1396, %v1372
    %v1398 = vpop.permute.xlu0 %1397
    %1399 = vset.pattern.permute.xlu0 0
    %1400 = vperm.xlu0 %1399, %v1374
    %v1401 = vpop.permute.xlu0 %1400
    %1402 = vset.pattern.permute.xlu0 0
    %1403 = vperm.xlu0 %1402, %v1376
    %v1404 = vpop.permute.xlu0 %1403
    %1405 = vset.pattern.permute.xlu0 0
    %1406 = vperm.xlu0 %1405, %v1378
    %v1407 = vpop.permute.xlu0 %1406
    %1408 = vset.pattern.permute.xlu0 0
    %1409 = vperm.xlu0 %1408, %v1380
    %v1410 = vpop.permute.xlu0 %1409
    %1411 = vset.pattern.permute.xlu0 0
    %1412 = vperm.xlu0 %1411, %v1382
    %v1413 = vpop.permute.xlu0 %1412
    %1414 = vset.pattern.permute.xlu0 0
    %1415 = vperm.xlu0 %1414, %v1384
    %v1416 = vpop.permute.xlu0 %1415
    %v1417 = vlaneseq
    %v1418 = vshrl.u32 %v1417, 7
    %v1419 = vsub.s32 %v527, %v1418
    %v1420 = vrot.slane %v1395, %v1419
    %v1421 = vlaneseq
    %v1422 = vshrl.u32 %v1421, 7
    %v1423 = vsub.s32 %v527, %v1422
    %v1424 = vrot.slane %v1398, %v1423
    %v1425 = vlaneseq
    %v1426 = vshrl.u32 %v1425, 7
    %v1427 = vsub.s32 %v527, %v1426
    %v1428 = vrot.slane %v1401, %v1427
    %v1429 = vlaneseq
    %v1430 = vshrl.u32 %v1429, 7
    %v1431 = vsub.s32 %v527, %v1430
    %v1432 = vrot.slane %v1404, %v1431
    %v1433 = vlaneseq
    %v1434 = vshrl.u32 %v1433, 7
    %v1435 = vsub.s32 %v527, %v1434
    %v1436 = vrot.slane %v1407, %v1435
    %v1437 = vlaneseq
    %v1438 = vshrl.u32 %v1437, 7
    %v1439 = vsub.s32 %v527, %v1438
    %v1440 = vrot.slane %v1410, %v1439
    %v1441 = vlaneseq
    %v1442 = vshrl.u32 %v1441, 7
    %v1443 = vsub.s32 %v527, %v1442
    %v1444 = vrot.slane %v1413, %v1443
    %v1445 = vlaneseq
    %v1446 = vshrl.u32 %v1445, 7
    %v1447 = vsub.s32 %v527, %v1446
    %v1448 = vrot.slane %v1416, %v1447
    %v1449 = vsel %vm560, %v1424, %v1420
    %v1450 = vsel %vm562, %v1428, %v1449
    %v1451 = vsel %vm564, %v1432, %v1450
    %v1452 = vsel %vm566, %v1436, %v1451
    %v1453 = vsel %vm568, %v1440, %v1452
    %v1454 = vsel %vm570, %v1444, %v1453
    %v1455 = vsel %vm572, %v1448, %v1454
    %v1457 = vsel %vm575, %v1455, 0.0
    %1458 = vadd.xlane.f32.xlu0 %v1457
    %v1459 = vpop.xlane.xlu0 %1458
    %v1460 = vrcp.pop %v1459
    %v1462 = vlaneseq
    %v1463 = vshrl.u32 %v1462, 7
    %v1464 = vsub.s32 0, %v1463
    %v1465 = vrot.slane %v1460, %v1464
    %v1466 = vlaneseq
    %v1467 = vshrl.u32 %v1466, 7
    %v1468 = vsub.s32 1, %v1467
    %v1469 = vrot.slane %v1460, %v1468
    %v1470 = vlaneseq
    %v1471 = vshrl.u32 %v1470, 7
    %v1472 = vsub.s32 2, %v1471
    %v1473 = vrot.slane %v1460, %v1472
    %v1474 = vlaneseq
    %v1475 = vshrl.u32 %v1474, 7
    %v1476 = vsub.s32 3, %v1475
    %v1477 = vrot.slane %v1460, %v1476
    %v1478 = vlaneseq
    %v1479 = vshrl.u32 %v1478, 7
    %v1480 = vsub.s32 4, %v1479
    %v1481 = vrot.slane %v1460, %v1480
    %v1482 = vlaneseq
    %v1483 = vshrl.u32 %v1482, 7
    %v1484 = vsub.s32 5, %v1483
    %v1485 = vrot.slane %v1460, %v1484
    %v1486 = vlaneseq
    %v1487 = vshrl.u32 %v1486, 7
    %v1488 = vsub.s32 6, %v1487
    %v1489 = vrot.slane %v1460, %v1488
    %v1490 = vlaneseq
    %v1491 = vshrl.u32 %v1490, 7
    %v1492 = vsub.s32 7, %v1491
    %v1493 = vrot.slane %v1460, %v1492
    %v1502 = vmul.f32 %v1370, %v1465
    %v1503 = vmul.f32 %v1372, %v1469
    %v1504 = vmul.f32 %v1374, %v1473
    %v1505 = vmul.f32 %v1376, %v1477
    %v1506 = vmul.f32 %v1378, %v1481
    %v1507 = vmul.f32 %v1380, %v1485
    %v1508 = vmul.f32 %v1382, %v1489
    %v1509 = vmul.f32 %v1384, %v1493
    %1511 = vset.pattern.permute.xlu0 0
    %1512 = vperm.xlu0 %1511, %v1502
    %v1513 = vpop.permute.xlu0 %1512
    %1516 = vset.pattern.permute.xlu0 0
    %1517 = vperm.xlu0 %1516, %v1503
    %v1518 = vpop.permute.xlu0 %1517
    %1521 = vset.pattern.permute.xlu0 0
    %1522 = vperm.xlu0 %1521, %v1504
    %v1523 = vpop.permute.xlu0 %1522
    %1526 = vset.pattern.permute.xlu0 0
    %1527 = vperm.xlu0 %1526, %v1505
    %v1528 = vpop.permute.xlu0 %1527
    %1531 = vset.pattern.permute.xlu0 0
    %1532 = vperm.xlu0 %1531, %v1506
    %v1533 = vpop.permute.xlu0 %1532
    %1536 = vset.pattern.permute.xlu0 0
    %1537 = vperm.xlu0 %1536, %v1507
    %v1538 = vpop.permute.xlu0 %1537
    %1541 = vset.pattern.permute.xlu0 0
    %1542 = vperm.xlu0 %1541, %v1508
    %v1543 = vpop.permute.xlu0 %1542
    %1546 = vset.pattern.permute.xlu0 0
    %1547 = vperm.xlu0 %1546, %v1509
    %v1548 = vpop.permute.xlu0 %1547
    %v1550 = vmul.f32 %v1513, %v107
    %v1551 = vmul.f32 %v1518, %v108
    %v1552 = vmul.f32 %v1523, %v109
    %v1553 = vmul.f32 %v1528, %v110
    %v1554 = vmul.f32 %v1533, %v111
    %v1555 = vmul.f32 %v1538, %v112
    %v1556 = vmul.f32 %v1543, %v113
    %v1557 = vmul.f32 %v1548, %v114
    %v1558 = vsel %vm146, %v1550, 0.0
    %v1559 = vrot.slane %v1558, 4
    %v1560 = vadd.f32 %v1558, %v1559
    %v1561 = vrot.slane %v1560, 2
    %v1562 = vadd.f32 %v1560, %v1561
    %v1563 = vrot.slane %v1562, 1
    %v1564 = vadd.f32 %v1562, %v1563
    %v1565 = vsel %vm146, %v1551, 0.0
    %v1566 = vrot.slane %v1565, 4
    %v1567 = vadd.f32 %v1565, %v1566
    %v1568 = vrot.slane %v1567, 2
    %v1569 = vadd.f32 %v1567, %v1568
    %v1570 = vrot.slane %v1569, 1
    %v1571 = vadd.f32 %v1569, %v1570
    %v1572 = vsel %vm146, %v1552, 0.0
    %v1573 = vrot.slane %v1572, 4
    %v1574 = vadd.f32 %v1572, %v1573
    %v1575 = vrot.slane %v1574, 2
    %v1576 = vadd.f32 %v1574, %v1575
    %v1577 = vrot.slane %v1576, 1
    %v1578 = vadd.f32 %v1576, %v1577
    %v1579 = vsel %vm146, %v1553, 0.0
    %v1580 = vrot.slane %v1579, 4
    %v1581 = vadd.f32 %v1579, %v1580
    %v1582 = vrot.slane %v1581, 2
    %v1583 = vadd.f32 %v1581, %v1582
    %v1584 = vrot.slane %v1583, 1
    %v1585 = vadd.f32 %v1583, %v1584
    %v1586 = vsel %vm146, %v1554, 0.0
    %v1587 = vrot.slane %v1586, 4
    %v1588 = vadd.f32 %v1586, %v1587
    %v1589 = vrot.slane %v1588, 2
    %v1590 = vadd.f32 %v1588, %v1589
    %v1591 = vrot.slane %v1590, 1
    %v1592 = vadd.f32 %v1590, %v1591
    %v1593 = vsel %vm146, %v1555, 0.0
    %v1594 = vrot.slane %v1593, 4
    %v1595 = vadd.f32 %v1593, %v1594
    %v1596 = vrot.slane %v1595, 2
    %v1597 = vadd.f32 %v1595, %v1596
    %v1598 = vrot.slane %v1597, 1
    %v1599 = vadd.f32 %v1597, %v1598
    %v1600 = vsel %vm146, %v1556, 0.0
    %v1601 = vrot.slane %v1600, 4
    %v1602 = vadd.f32 %v1600, %v1601
    %v1603 = vrot.slane %v1602, 2
    %v1604 = vadd.f32 %v1602, %v1603
    %v1605 = vrot.slane %v1604, 1
    %v1606 = vadd.f32 %v1604, %v1605
    %v1607 = vsel %vm146, %v1557, 0.0
    %v1608 = vrot.slane %v1607, 4
    %v1609 = vadd.f32 %v1607, %v1608
    %v1610 = vrot.slane %v1609, 2
    %v1611 = vadd.f32 %v1609, %v1610
    %v1612 = vrot.slane %v1611, 1
    %v1613 = vadd.f32 %v1611, %v1612
    %v1622 = vsel %vm560, %v1571, %v1564
    %v1623 = vsel %vm562, %v1578, %v1622
    %v1624 = vsel %vm564, %v1585, %v1623
    %v1625 = vsel %vm566, %v1592, %v1624
    %v1626 = vsel %vm568, %v1599, %v1625
    %v1627 = vsel %vm570, %v1606, %v1626
    %v1628 = vsel %vm572, %v1613, %v1627
    %v1629 = vsel %vm146, %v1628, 0
    %1631 = vmatprep.subr.mxu0 0.0
    %1632 = vmatpush1.msra.mxu0 %v123
    %1633 = vmatprep.subr.mxu0 0.0
    %1634 = vmatpush1.msra.mxu0 %v124
    %1635 = vmatprep.subr.mxu0 0.0
    %1636 = vmatpush1.msra.mxu0 %v125
    %1637 = vmatprep.subr.mxu0 0.0
    %1638 = vmatpush1.msra.mxu0 %v126
    %1639 = vmatprep.subr.mxu0 0.0
    %1640 = vmatpush1.msra.mxu0 0.0
    %1641 = vmatprep.subr.mxu0 0.0
    %1642 = vmatpush1.msra.mxu0 0.0
    %1643 = vmatprep.subr.mxu0 0.0
    %1644 = vmatpush1.msra.mxu0 0.0
    %1645 = vmatprep.subr.mxu0 0.0
    %1646 = vmatpush1.msra.mxu0 0.0
    %1647 = vmatprep.subr.mxu0 0.0
    %1648 = vmatpush1.msra.mxu0 0.0
    %1649 = vmatprep.subr.mxu0 0.0
    %1650 = vmatpush1.msra.mxu0 0.0
    %1651 = vmatprep.subr.mxu0 0.0
    %1652 = vmatpush1.msra.mxu0 0.0
    %1653 = vmatprep.subr.mxu0 0.0
    %1654 = vmatpush1.msra.mxu0 0.0
    %1655 = vmatprep.subr.mxu0 0.0
    %1656 = vmatpush1.msra.mxu0 0.0
    %1657 = vmatprep.subr.mxu0 0.0
    %1658 = vmatpush1.msra.mxu0 0.0
    %1659 = vmatprep.subr.mxu0 0.0
    %1660 = vmatpush1.msra.mxu0 0.0
    %1661 = vmatprep.subr.mxu0 0.0
    %1662 = vmatpush1.msra.mxu0 0.0
    %1663 = vmatprep.subr.mxu0 0.0
    %1664 = vmatpush1.msra.mxu0 0.0
    %1665 = vmatprep.subr.mxu0 0.0
    %1666 = vmatpush1.msra.mxu0 0.0
    %1667 = vmatprep.subr.mxu0 0.0
    %1668 = vmatpush1.msra.mxu0 0.0
    %1669 = vmatprep.subr.mxu0 0.0
    %1670 = vmatpush1.msra.mxu0 0.0
    %1671 = vmatprep.subr.mxu0 0.0
    %1672 = vmatpush1.msra.mxu0 0.0
    %1673 = vmatprep.subr.mxu0 0.0
    %1674 = vmatpush1.msra.mxu0 0.0
    %1675 = vmatprep.subr.mxu0 0.0
    %1676 = vmatpush1.msra.mxu0 0.0
    %1677 = vmatprep.subr.mxu0 0.0
    %1678 = vmatpush1.msra.mxu0 0.0
    %1679 = vmatprep.subr.mxu0 0.0
    %1680 = vmatpush1.msra.mxu0 0.0
    %1681 = vmatprep.subr.mxu0 0.0
    %1682 = vmatpush1.msra.mxu0 0.0
    %1683 = vmatprep.subr.mxu0 0.0
    %1684 = vmatpush1.msra.mxu0 0.0
    %1685 = vmatprep.subr.mxu0 0.0
    %1686 = vmatpush1.msra.mxu0 0.0
    %1687 = vmatprep.subr.mxu0 0.0
    %1688 = vmatpush1.msra.mxu0 0.0
    %1689 = vmatprep.subr.mxu0 0.0
    %1690 = vmatpush1.msra.mxu0 0.0
    %1691 = vmatprep.subr.mxu0 0.0
    %1692 = vmatpush1.msra.mxu0 0.0
    %1693 = vmatprep.subr.mxu0 0.0
    %1694 = vmatpush1.msra.mxu0 0.0
    %1695 = vmatprep.mubr.f32.mxu0 0.0
    %1696 = vmatmul.mubr.f32.gmra.mrb[0].mxu0 %v1629
    %v1697 = vpop.f32.mrb[0].mxu0
    %v1698 = vadd.f32 0.0, %v1697
    %v1699 = vpop.f32.mrb[0].mxu0
    %1700 = vdwg.mxu0
    %1701 = vrot.lane.b32.xlu0 %v1130, 32
    %v1702 = vpop.permute.xlu0 %1701
    %v1703 = vsel %vm146, %v1702, 0
    %1705 = vmatprep.subr.mxu0 0.0
    %1706 = vmatpush1.msra.mxu0 %v119
    %1707 = vmatprep.subr.mxu0 0.0
    %1708 = vmatpush1.msra.mxu0 %v120
    %1709 = vmatprep.subr.mxu0 0.0
    %1710 = vmatpush1.msra.mxu0 %v121
    %1711 = vmatprep.subr.mxu0 0.0
    %1712 = vmatpush1.msra.mxu0 %v122
    %1713 = vmatprep.subr.mxu0 0.0
    %1714 = vmatpush1.msra.mxu0 0.0
    %1715 = vmatprep.subr.mxu0 0.0
    %1716 = vmatpush1.msra.mxu0 0.0
    %1717 = vmatprep.subr.mxu0 0.0
    %1718 = vmatpush1.msra.mxu0 0.0
    %1719 = vmatprep.subr.mxu0 0.0
    %1720 = vmatpush1.msra.mxu0 0.0
    %1721 = vmatprep.subr.mxu0 0.0
    %1722 = vmatpush1.msra.mxu0 0.0
    %1723 = vmatprep.subr.mxu0 0.0
    %1724 = vmatpush1.msra.mxu0 0.0
    %1725 = vmatprep.subr.mxu0 0.0
    %1726 = vmatpush1.msra.mxu0 0.0
    %1727 = vmatprep.subr.mxu0 0.0
    %1728 = vmatpush1.msra.mxu0 0.0
    %1729 = vmatprep.subr.mxu0 0.0
    %1730 = vmatpush1.msra.mxu0 0.0
    %1731 = vmatprep.subr.mxu0 0.0
    %1732 = vmatpush1.msra.mxu0 0.0
    %1733 = vmatprep.subr.mxu0 0.0
    %1734 = vmatpush1.msra.mxu0 0.0
    %1735 = vmatprep.subr.mxu0 0.0
    %1736 = vmatpush1.msra.mxu0 0.0
    %1737 = vmatprep.subr.mxu0 0.0
    %1738 = vmatpush1.msra.mxu0 0.0
    %1739 = vmatprep.subr.mxu0 0.0
    %1740 = vmatpush1.msra.mxu0 0.0
    %1741 = vmatprep.subr.mxu0 0.0
    %1742 = vmatpush1.msra.mxu0 0.0
    %1743 = vmatprep.subr.mxu0 0.0
    %1744 = vmatpush1.msra.mxu0 0.0
    %1745 = vmatprep.subr.mxu0 0.0
    %1746 = vmatpush1.msra.mxu0 0.0
    %1747 = vmatprep.subr.mxu0 0.0
    %1748 = vmatpush1.msra.mxu0 0.0
    %1749 = vmatprep.subr.mxu0 0.0
    %1750 = vmatpush1.msra.mxu0 0.0
    %1751 = vmatprep.subr.mxu0 0.0
    %1752 = vmatpush1.msra.mxu0 0.0
    %1753 = vmatprep.subr.mxu0 0.0
    %1754 = vmatpush1.msra.mxu0 0.0
    %1755 = vmatprep.subr.mxu0 0.0
    %1756 = vmatpush1.msra.mxu0 0.0
    %1757 = vmatprep.subr.mxu0 0.0
    %1758 = vmatpush1.msra.mxu0 0.0
    %1759 = vmatprep.subr.mxu0 0.0
    %1760 = vmatpush1.msra.mxu0 0.0
    %1761 = vmatprep.subr.mxu0 0.0
    %1762 = vmatpush1.msra.mxu0 0.0
    %1763 = vmatprep.subr.mxu0 0.0
    %1764 = vmatpush1.msra.mxu0 0.0
    %1765 = vmatprep.subr.mxu0 0.0
    %1766 = vmatpush1.msra.mxu0 0.0
    %1767 = vmatprep.subr.mxu0 0.0
    %1768 = vmatpush1.msra.mxu0 0.0
    %1769 = vmatprep.mubr.f32.mxu0 0.0
    %1770 = vmatmul.mubr.f32.gmra.mrb[0].mxu0 %v1703
    %v1771 = vpop.f32.mrb[0].mxu0
    %v1772 = vadd.f32 %v1698, %v1771
    %v1773 = vpop.f32.mrb[0].mxu0
    %1774 = vdwg.mxu0
    %v1775 = vtanh.pop %v1772
    %1776 = vst.msk [vmem:[#allocation2 + $0x8] sm:$0xff] %vm146, %v1775
    %1777 = vmatprep.subr.mxu0 0.0
    %1778 = vmatpush1.msra.mxu0 %v115
    %1779 = vmatprep.subr.mxu0 0.0
    %1780 = vmatpush1.msra.mxu0 %v116
    %1781 = vmatprep.subr.mxu0 0.0
    %1782 = vmatpush1.msra.mxu0 %v117
    %1783 = vmatprep.subr.mxu0 0.0
    %1784 = vmatpush1.msra.mxu0 %v118
    %1785 = vmatprep.subr.mxu0 0.0
    %1786 = vmatpush1.msra.mxu0 0.0
    %1787 = vmatprep.subr.mxu0 0.0
    %1788 = vmatpush1.msra.mxu0 0.0
    %1789 = vmatprep.subr.mxu0 0.0
    %1790 = vmatpush1.msra.mxu0 0.0
    %1791 = vmatprep.subr.mxu0 0.0
    %1792 = vmatpush1.msra.mxu0 0.0
    %1793 = vmatprep.subr.mxu0 0.0
    %1794 = vmatpush1.msra.mxu0 0.0
    %1795 = vmatprep.subr.mxu0 0.0
    %1796 = vmatpush1.msra.mxu0 0.0
    %1797 = vmatprep.subr.mxu0 0.0
    %1798 = vmatpush1.msra.mxu0 0.0
    %1799 = vmatprep.subr.mxu0 0.0
    %1800 = vmatpush1.msra.mxu0 0.0
    %1801 = vmatprep.subr.mxu0 0.0
    %1802 = vmatpush1.msra.mxu0 0.0
    %1803 = vmatprep.subr.mxu0 0.0
    %1804 = vmatpush1.msra.mxu0 0.0
    %1805 = vmatprep.subr.mxu0 0.0
    %1806 = vmatpush1.msra.mxu0 0.0
    %1807 = vmatprep.subr.mxu0 0.0
    %1808 = vmatpush1.msra.mxu0 0.0
    %1809 = vmatprep.subr.mxu0 0.0
    %1810 = vmatpush1.msra.mxu0 0.0
    %1811 = vmatprep.subr.mxu0 0.0
    %1812 = vmatpush1.msra.mxu0 0.0
    %1813 = vmatprep.subr.mxu0 0.0
    %1814 = vmatpush1.msra.mxu0 0.0
    %1815 = vmatprep.subr.mxu0 0.0
    %1816 = vmatpush1.msra.mxu0 0.0
    %1817 = vmatprep.subr.mxu0 0.0
    %1818 = vmatpush1.msra.mxu0 0.0
    %1819 = vmatprep.subr.mxu0 0.0
    %1820 = vmatpush1.msra.mxu0 0.0
    %1821 = vmatprep.subr.mxu0 0.0
    %1822 = vmatpush1.msra.mxu0 0.0
    %1823 = vmatprep.subr.mxu0 0.0
    %1824 = vmatpush1.msra.mxu0 0.0
    %1825 = vmatprep.subr.mxu0 0.0
    %1826 = vmatpush1.msra.mxu0 0.0
    %1827 = vmatprep.subr.mxu0 0.0
    %1828 = vmatpush1.msra.mxu0 0.0
    %1829 = vmatprep.subr.mxu0 0.0
    %1830 = vmatpush1.msra.mxu0 0.0
    %1831 = vmatprep.subr.mxu0 0.0
    %1832 = vmatpush1.msra.mxu0 0.0
    %1833 = vmatprep.subr.mxu0 0.0
    %1834 = vmatpush1.msra.mxu0 0.0
    %1835 = vmatprep.subr.mxu0 0.0
    %1836 = vmatpush1.msra.mxu0 0.0
    %1837 = vmatprep.subr.mxu0 0.0
    %1838 = vmatpush1.msra.mxu0 0.0
    %1839 = vmatprep.subr.mxu0 0.0
    %1840 = vmatpush1.msra.mxu0 0.0
    %1841 = vmatprep.mubr.f32.mxu0 0.0
    %1842 = vmatmul.mubr.f32.gmra.mrb[0].mxu0 %v1703
    %v1843 = vpop.f32.mrb[0].mxu0
    %v1844 = vadd.f32 0.0, %v1843
    %v1845 = vpop.f32.mrb[0].mxu0
    %1846 = vdwg.mxu0
    %v1847 = vadd.f32 %v248, %v1844
    %v1848 = vxor.u32 %v1847, 2147483648
    %v1849 = vmul.f32 %v1848, 1.442695
    %v1850 = vpow.pop %v1849
    %v1851 = vadd.f32 %v1850, 1.0
    %v1852 = vrcp.pop %v1851
    %v1853 = vmul.f32 1.0, %v1852
    %v1854 = vtanh.pop %v1847
    %v1855 = vmul.f32 %v1853, %v1124
    %1857 = vrot.lane.b32.xlu0 %v1854, 64
    %v1858 = vpop.permute.xlu0 %1857
    %v1860 = vmul.f32 %v1853, %v1858
    %1862 = vrot.lane.b32.xlu0 %v1860, 32
    %v1863 = vpop.permute.xlu0 %1862
    %v1865 = vadd.f32 %v1855, %v1863
    %v1866 = vtanh.pop %v1865
    %1868 = vrot.lane.b32.xlu0 %v1866, 64
    %v1869 = vpop.permute.xlu0 %1868
    %v1871 = vmul.f32 %v1853, %v1869
    %v1873 = vcombine.high %v1871, %v1871
    %v1875 = vunpack.c.l.s4 1966171168
    %v1876 = vunpack.c.0.s8 %v1875
    %v1877 = vlaneseq
    %v1878 = vshrl.u32 %v1877, 7
    %v1879 = vsub.s32 %v1876, %v1878
    %v1880 = vrot.slane %v1871, %v1879
    %v1882 = vunpack.c.l.s4 1966171168
    %v1883 = vunpack.c.0.s8 %v1882
    %v1884 = vlaneseq
    %v1885 = vshrl.u32 %v1884, 7
    %v1886 = vsub.s32 %v1883, %v1885
    %v1887 = vrot.slane %v1873, %v1886
    %v1888 = vcombine.high %v1880, %v1880
    %v1889 = vcombine.high %v1887, %v1887
    %v1891 = vunpack.c.l.s4 1966171168
    %v1892 = vunpack.c.0.s8 %v1891
    %v1893 = vlaneseq
    %v1894 = vshrl.u32 %v1893, 7
    %v1895 = vsub.s32 %v1892, %v1894
    %v1896 = vrot.slane %v1880, %v1895
    %v1898 = vunpack.c.l.s4 1966171168
    %v1899 = vunpack.c.0.s8 %v1898
    %v1900 = vlaneseq
    %v1901 = vshrl.u32 %v1900, 7
    %v1902 = vsub.s32 %v1899, %v1901
    %v1903 = vrot.slane %v1887, %v1902
    %v1905 = vunpack.c.l.s4 1966171168
    %v1906 = vunpack.c.0.s8 %v1905
    %v1907 = vlaneseq
    %v1908 = vshrl.u32 %v1907, 7
    %v1909 = vsub.s32 %v1906, %v1908
    %v1910 = vrot.slane %v1888, %v1909
    %v1912 = vunpack.c.l.s4 1966171168
    %v1913 = vunpack.c.0.s8 %v1912
    %v1914 = vlaneseq
    %v1915 = vshrl.u32 %v1914, 7
    %v1916 = vsub.s32 %v1913, %v1915
    %v1917 = vrot.slane %v1889, %v1916
    %v1918 = vcombine.high %v1896, %v1896
    %v1919 = vcombine.high %v1903, %v1903
    %v1920 = vcombine.high %v1910, %v1910
    %v1921 = vcombine.high %v1917, %v1917
    %v1922 = vlaneseq
    %v1923 = vshrl.u32 %v1922, 7
    %v1924 = vsub.s32 0, %v1923
    %v1925 = vrot.slane %v1896, %v1924
    %v1926 = vlaneseq
    %v1927 = vshrl.u32 %v1926, 7
    %v1928 = vsub.s32 0, %v1927
    %v1929 = vrot.slane %v1910, %v1928
    %v1930 = vlaneseq
    %v1931 = vshrl.u32 %v1930, 7
    %v1932 = vsub.s32 0, %v1931
    %v1933 = vrot.slane %v1918, %v1932
    %v1934 = vlaneseq
    %v1935 = vshrl.u32 %v1934, 7
    %v1936 = vsub.s32 0, %v1935
    %v1937 = vrot.slane %v1920, %v1936
    %v1938 = vlaneseq
    %v1939 = vshrl.u32 %v1938, 7
    %v1940 = vsub.s32 0, %v1939
    %v1941 = vrot.slane %v1903, %v1940
    %v1942 = vlaneseq
    %v1943 = vshrl.u32 %v1942, 7
    %v1944 = vsub.s32 0, %v1943
    %v1945 = vrot.slane %v1917, %v1944
    %v1946 = vlaneseq
    %v1947 = vshrl.u32 %v1946, 7
    %v1948 = vsub.s32 0, %v1947
    %v1949 = vrot.slane %v1919, %v1948
    %v1950 = vlaneseq
    %v1951 = vshrl.u32 %v1950, 7
    %v1952 = vsub.s32 0, %v1951
    %v1953 = vrot.slane %v1921, %v1952
    %1954 = vrot.lane.b32.xlu0 %v1925, 32
    %v1955 = vpop.permute.xlu0 %1954
    %1956 = vrot.lane.b32.xlu0 %v1929, 32
    %v1957 = vpop.permute.xlu0 %1956
    %1958 = vrot.lane.b32.xlu0 %v1933, 32
    %v1959 = vpop.permute.xlu0 %1958
    %1960 = vrot.lane.b32.xlu0 %v1937, 32
    %v1961 = vpop.permute.xlu0 %1960
    %1962 = vrot.lane.b32.xlu0 %v1941, 32
    %v1963 = vpop.permute.xlu0 %1962
    %1964 = vrot.lane.b32.xlu0 %v1945, 32
    %v1965 = vpop.permute.xlu0 %1964
    %1966 = vrot.lane.b32.xlu0 %v1949, 32
    %v1967 = vpop.permute.xlu0 %1966
    %1968 = vrot.lane.b32.xlu0 %v1953, 32
    %v1969 = vpop.permute.xlu0 %1968
    %v1978 = vmul.f32 %v107, %v1955
    %v1979 = vmul.f32 %v108, %v1957
    %v1980 = vmul.f32 %v109, %v1959
    %v1981 = vmul.f32 %v110, %v1961
    %v1982 = vmul.f32 %v111, %v1963
    %v1983 = vmul.f32 %v112, %v1965
    %v1984 = vmul.f32 %v113, %v1967
    %v1985 = vmul.f32 %v114, %v1969
    %v1986 = vsel %vm146, %v1978, 0.0
    %1987 = vadd.xlane.f32.xlu0 %v1986
    %v1988 = vpop.xlane.xlu0 %1987
    %v1989 = vsel %vm146, %v1979, 0.0
    %1990 = vadd.xlane.f32.xlu0 %v1989
    %v1991 = vpop.xlane.xlu0 %1990
    %v1992 = vsel %vm146, %v1980, 0.0
    %1993 = vadd.xlane.f32.xlu0 %v1992
    %v1994 = vpop.xlane.xlu0 %1993
    %v1995 = vsel %vm146, %v1981, 0.0
    %1996 = vadd.xlane.f32.xlu0 %v1995
    %v1997 = vpop.xlane.xlu0 %1996
    %v1998 = vsel %vm146, %v1982, 0.0
    %1999 = vadd.xlane.f32.xlu0 %v1998
    %v2000 = vpop.xlane.xlu0 %1999
    %v2001 = vsel %vm146, %v1983, 0.0
    %2002 = vadd.xlane.f32.xlu0 %v2001
    %v2003 = vpop.xlane.xlu0 %2002
    %v2004 = vsel %vm146, %v1984, 0.0
    %2005 = vadd.xlane.f32.xlu0 %v2004
    %v2006 = vpop.xlane.xlu0 %2005
    %v2007 = vsel %vm146, %v1985, 0.0
    %2008 = vadd.xlane.f32.xlu0 %v2007
    %v2009 = vpop.xlane.xlu0 %2008
    %v2018 = vlaneseq
    %v2019 = vshrl.u32 %v2018, 7
    %v2020 = vsub.s32 %v527, %v2019
    %v2021 = vrot.slane %v1988, %v2020
    %v2022 = vlaneseq
    %v2023 = vshrl.u32 %v2022, 7
    %v2024 = vsub.s32 %v527, %v2023
    %v2025 = vrot.slane %v1991, %v2024
    %v2026 = vlaneseq
    %v2027 = vshrl.u32 %v2026, 7
    %v2028 = vsub.s32 %v527, %v2027
    %v2029 = vrot.slane %v1994, %v2028
    %v2030 = vlaneseq
    %v2031 = vshrl.u32 %v2030, 7
    %v2032 = vsub.s32 %v527, %v2031
    %v2033 = vrot.slane %v1997, %v2032
    %v2034 = vlaneseq
    %v2035 = vshrl.u32 %v2034, 7
    %v2036 = vsub.s32 %v527, %v2035
    %v2037 = vrot.slane %v2000, %v2036
    %v2038 = vlaneseq
    %v2039 = vshrl.u32 %v2038, 7
    %v2040 = vsub.s32 %v527, %v2039
    %v2041 = vrot.slane %v2003, %v2040
    %v2042 = vlaneseq
    %v2043 = vshrl.u32 %v2042, 7
    %v2044 = vsub.s32 %v527, %v2043
    %v2045 = vrot.slane %v2006, %v2044
    %v2046 = vlaneseq
    %v2047 = vshrl.u32 %v2046, 7
    %v2048 = vsub.s32 %v527, %v2047
    %v2049 = vrot.slane %v2009, %v2048
    %v2050 = vsel %vm560, %v2025, %v2021
    %v2051 = vsel %vm562, %v2029, %v2050
    %v2052 = vsel %vm564, %v2033, %v2051
    %v2053 = vsel %vm566, %v2037, %v2052
    %v2054 = vsel %vm568, %v2041, %v2053
    %v2055 = vsel %vm570, %v2045, %v2054
    %v2056 = vsel %vm572, %v2049, %v2055
    %v2058 = vsel %vm575, %v2056, -inf
    %2059 = vmax.xlane.f32.xlu0 %v2058
    %v2060 = vpop.xlane.xlu0 %2059
    %v2062 = vlaneseq
    %v2063 = vshrl.u32 %v2062, 7
    %v2064 = vsub.s32 0, %v2063
    %v2065 = vrot.slane %v2060, %v2064
    %v2066 = vlaneseq
    %v2067 = vshrl.u32 %v2066, 7
    %v2068 = vsub.s32 1, %v2067
    %v2069 = vrot.slane %v2060, %v2068
    %v2070 = vlaneseq
    %v2071 = vshrl.u32 %v2070, 7
    %v2072 = vsub.s32 2, %v2071
    %v2073 = vrot.slane %v2060, %v2072
    %v2074 = vlaneseq
    %v2075 = vshrl.u32 %v2074, 7
    %v2076 = vsub.s32 3, %v2075
    %v2077 = vrot.slane %v2060, %v2076
    %v2078 = vlaneseq
    %v2079 = vshrl.u32 %v2078, 7
    %v2080 = vsub.s32 4, %v2079
    %v2081 = vrot.slane %v2060, %v2080
    %v2082 = vlaneseq
    %v2083 = vshrl.u32 %v2082, 7
    %v2084 = vsub.s32 5, %v2083
    %v2085 = vrot.slane %v2060, %v2084
    %v2086 = vlaneseq
    %v2087 = vshrl.u32 %v2086, 7
    %v2088 = vsub.s32 6, %v2087
    %v2089 = vrot.slane %v2060, %v2088
    %v2090 = vlaneseq
    %v2091 = vshrl.u32 %v2090, 7
    %v2092 = vsub.s32 7, %v2091
    %v2093 = vrot.slane %v2060, %v2092
    %v2102 = vsub.f32 %v1988, %v2065
    %v2103 = vsub.f32 %v1991, %v2069
    %v2104 = vsub.f32 %v1994, %v2073
    %v2105 = vsub.f32 %v1997, %v2077
    %v2106 = vsub.f32 %v2000, %v2081
    %v2107 = vsub.f32 %v2003, %v2085
    %v2108 = vsub.f32 %v2006, %v2089
    %v2109 = vsub.f32 %v2009, %v2093
    %v2110 = vmul.f32 %v2102, 1.442695
    %v2111 = vpow.pop %v2110
    %v2112 = vmul.f32 %v2103, 1.442695
    %v2113 = vpow.pop %v2112
    %v2114 = vmul.f32 %v2104, 1.442695
    %v2115 = vpow.pop %v2114
    %v2116 = vmul.f32 %v2105, 1.442695
    %v2117 = vpow.pop %v2116
    %v2118 = vmul.f32 %v2106, 1.442695
    %v2119 = vpow.pop %v2118
    %v2120 = vmul.f32 %v2107, 1.442695
    %v2121 = vpow.pop %v2120
    %v2122 = vmul.f32 %v2108, 1.442695
    %v2123 = vpow.pop %v2122
    %v2124 = vmul.f32 %v2109, 1.442695
    %v2125 = vpow.pop %v2124
    %2134 = vset.pattern.permute.xlu0 0
    %2135 = vperm.xlu0 %2134, %v2111
    %v2136 = vpop.permute.xlu0 %2135
    %2137 = vset.pattern.permute.xlu0 0
    %2138 = vperm.xlu0 %2137, %v2113
    %v2139 = vpop.permute.xlu0 %2138
    %2140 = vset.pattern.permute.xlu0 0
    %2141 = vperm.xlu0 %2140, %v2115
    %v2142 = vpop.permute.xlu0 %2141
    %2143 = vset.pattern.permute.xlu0 0
    %2144 = vperm.xlu0 %2143, %v2117
    %v2145 = vpop.permute.xlu0 %2144
    %2146 = vset.pattern.permute.xlu0 0
    %2147 = vperm.xlu0 %2146, %v2119
    %v2148 = vpop.permute.xlu0 %2147
    %2149 = vset.pattern.permute.xlu0 0
    %2150 = vperm.xlu0 %2149, %v2121
    %v2151 = vpop.permute.xlu0 %2150
    %2152 = vset.pattern.permute.xlu0 0
    %2153 = vperm.xlu0 %2152, %v2123
    %v2154 = vpop.permute.xlu0 %2153
    %2155 = vset.pattern.permute.xlu0 0
    %2156 = vperm.xlu0 %2155, %v2125
    %v2157 = vpop.permute.xlu0 %2156
    %v2158 = vlaneseq
    %v2159 = vshrl.u32 %v2158, 7
    %v2160 = vsub.s32 %v527, %v2159
    %v2161 = vrot.slane %v2136, %v2160
    %v2162 = vlaneseq
    %v2163 = vshrl.u32 %v2162, 7
    %v2164 = vsub.s32 %v527, %v2163
    %v2165 = vrot.slane %v2139, %v2164
    %v2166 = vlaneseq
    %v2167 = vshrl.u32 %v2166, 7
    %v2168 = vsub.s32 %v527, %v2167
    %v2169 = vrot.slane %v2142, %v2168
    %v2170 = vlaneseq
    %v2171 = vshrl.u32 %v2170, 7
    %v2172 = vsub.s32 %v527, %v2171
    %v2173 = vrot.slane %v2145, %v2172
    %v2174 = vlaneseq
    %v2175 = vshrl.u32 %v2174, 7
    %v2176 = vsub.s32 %v527, %v2175
    %v2177 = vrot.slane %v2148, %v2176
    %v2178 = vlaneseq
    %v2179 = vshrl.u32 %v2178, 7
    %v2180 = vsub.s32 %v527, %v2179
    %v2181 = vrot.slane %v2151, %v2180
    %v2182 = vlaneseq
    %v2183 = vshrl.u32 %v2182, 7
    %v2184 = vsub.s32 %v527, %v2183
    %v2185 = vrot.slane %v2154, %v2184
    %v2186 = vlaneseq
    %v2187 = vshrl.u32 %v2186, 7
    %v2188 = vsub.s32 %v527, %v2187
    %v2189 = vrot.slane %v2157, %v2188
    %v2190 = vsel %vm560, %v2165, %v2161
    %v2191 = vsel %vm562, %v2169, %v2190
    %v2192 = vsel %vm564, %v2173, %v2191
    %v2193 = vsel %vm566, %v2177, %v2192
    %v2194 = vsel %vm568, %v2181, %v2193
    %v2195 = vsel %vm570, %v2185, %v2194
    %v2196 = vsel %vm572, %v2189, %v2195
    %v2198 = vsel %vm575, %v2196, 0.0
    %2199 = vadd.xlane.f32.xlu0 %v2198
    %v2200 = vpop.xlane.xlu0 %2199
    %v2201 = vrcp.pop %v2200
    %v2203 = vlaneseq
    %v2204 = vshrl.u32 %v2203, 7
    %v2205 = vsub.s32 0, %v2204
    %v2206 = vrot.slane %v2201, %v2205
    %v2207 = vlaneseq
    %v2208 = vshrl.u32 %v2207, 7
    %v2209 = vsub.s32 1, %v2208
    %v2210 = vrot.slane %v2201, %v2209
    %v2211 = vlaneseq
    %v2212 = vshrl.u32 %v2211, 7
    %v2213 = vsub.s32 2, %v2212
    %v2214 = vrot.slane %v2201, %v2213
    %v2215 = vlaneseq
    %v2216 = vshrl.u32 %v2215, 7
    %v2217 = vsub.s32 3, %v2216
    %v2218 = vrot.slane %v2201, %v2217
    %v2219 = vlaneseq
    %v2220 = vshrl.u32 %v2219, 7
    %v2221 = vsub.s32 4, %v2220
    %v2222 = vrot.slane %v2201, %v2221
    %v2223 = vlaneseq
    %v2224 = vshrl.u32 %v2223, 7
    %v2225 = vsub.s32 5, %v2224
    %v2226 = vrot.slane %v2201, %v2225
    %v2227 = vlaneseq
    %v2228 = vshrl.u32 %v2227, 7
    %v2229 = vsub.s32 6, %v2228
    %v2230 = vrot.slane %v2201, %v2229
    %v2231 = vlaneseq
    %v2232 = vshrl.u32 %v2231, 7
    %v2233 = vsub.s32 7, %v2232
    %v2234 = vrot.slane %v2201, %v2233
    %v2243 = vmul.f32 %v2111, %v2206
    %v2244 = vmul.f32 %v2113, %v2210
    %v2245 = vmul.f32 %v2115, %v2214
    %v2246 = vmul.f32 %v2117, %v2218
    %v2247 = vmul.f32 %v2119, %v2222
    %v2248 = vmul.f32 %v2121, %v2226
    %v2249 = vmul.f32 %v2123, %v2230
    %v2250 = vmul.f32 %v2125, %v2234
    %2252 = vset.pattern.permute.xlu0 0
    %2253 = vperm.xlu0 %2252, %v2243
    %v2254 = vpop.permute.xlu0 %2253
    %2257 = vset.pattern.permute.xlu0 0
    %2258 = vperm.xlu0 %2257, %v2244
    %v2259 = vpop.permute.xlu0 %2258
    %2262 = vset.pattern.permute.xlu0 0
    %2263 = vperm.xlu0 %2262, %v2245
    %v2264 = vpop.permute.xlu0 %2263
    %2267 = vset.pattern.permute.xlu0 0
    %2268 = vperm.xlu0 %2267, %v2246
    %v2269 = vpop.permute.xlu0 %2268
    %2272 = vset.pattern.permute.xlu0 0
    %2273 = vperm.xlu0 %2272, %v2247
    %v2274 = vpop.permute.xlu0 %2273
    %2277 = vset.pattern.permute.xlu0 0
    %2278 = vperm.xlu0 %2277, %v2248
    %v2279 = vpop.permute.xlu0 %2278
    %2282 = vset.pattern.permute.xlu0 0
    %2283 = vperm.xlu0 %2282, %v2249
    %v2284 = vpop.permute.xlu0 %2283
    %2287 = vset.pattern.permute.xlu0 0
    %2288 = vperm.xlu0 %2287, %v2250
    %v2289 = vpop.permute.xlu0 %2288
    %v2291 = vmul.f32 %v2254, %v107
    %v2292 = vmul.f32 %v2259, %v108
    %v2293 = vmul.f32 %v2264, %v109
    %v2294 = vmul.f32 %v2269, %v110
    %v2295 = vmul.f32 %v2274, %v111
    %v2296 = vmul.f32 %v2279, %v112
    %v2297 = vmul.f32 %v2284, %v113
    %v2298 = vmul.f32 %v2289, %v114
    %v2299 = vsel %vm146, %v2291, 0.0
    %v2300 = vrot.slane %v2299, 4
    %v2301 = vadd.f32 %v2299, %v2300
    %v2302 = vrot.slane %v2301, 2
    %v2303 = vadd.f32 %v2301, %v2302
    %v2304 = vrot.slane %v2303, 1
    %v2305 = vadd.f32 %v2303, %v2304
    %v2306 = vsel %vm146, %v2292, 0.0
    %v2307 = vrot.slane %v2306, 4
    %v2308 = vadd.f32 %v2306, %v2307
    %v2309 = vrot.slane %v2308, 2
    %v2310 = vadd.f32 %v2308, %v2309
    %v2311 = vrot.slane %v2310, 1
    %v2312 = vadd.f32 %v2310, %v2311
    %v2313 = vsel %vm146, %v2293, 0.0
    %v2314 = vrot.slane %v2313, 4
    %v2315 = vadd.f32 %v2313, %v2314
    %v2316 = vrot.slane %v2315, 2
    %v2317 = vadd.f32 %v2315, %v2316
    %v2318 = vrot.slane %v2317, 1
    %v2319 = vadd.f32 %v2317, %v2318
    %v2320 = vsel %vm146, %v2294, 0.0
    %v2321 = vrot.slane %v2320, 4
    %v2322 = vadd.f32 %v2320, %v2321
    %v2323 = vrot.slane %v2322, 2
    %v2324 = vadd.f32 %v2322, %v2323
    %v2325 = vrot.slane %v2324, 1
    %v2326 = vadd.f32 %v2324, %v2325
    %v2327 = vsel %vm146, %v2295, 0.0
    %v2328 = vrot.slane %v2327, 4
    %v2329 = vadd.f32 %v2327, %v2328
    %v2330 = vrot.slane %v2329, 2
    %v2331 = vadd.f32 %v2329, %v2330
    %v2332 = vrot.slane %v2331, 1
    %v2333 = vadd.f32 %v2331, %v2332
    %v2334 = vsel %vm146, %v2296, 0.0
    %v2335 = vrot.slane %v2334, 4
    %v2336 = vadd.f32 %v2334, %v2335
    %v2337 = vrot.slane %v2336, 2
    %v2338 = vadd.f32 %v2336, %v2337
    %v2339 = vrot.slane %v2338, 1
    %v2340 = vadd.f32 %v2338, %v2339
    %v2341 = vsel %vm146, %v2297, 0.0
    %v2342 = vrot.slane %v2341, 4
    %v2343 = vadd.f32 %v2341, %v2342
    %v2344 = vrot.slane %v2343, 2
    %v2345 = vadd.f32 %v2343, %v2344
    %v2346 = vrot.slane %v2345, 1
    %v2347 = vadd.f32 %v2345, %v2346
    %v2348 = vsel %vm146, %v2298, 0.0
    %v2349 = vrot.slane %v2348, 4
    %v2350 = vadd.f32 %v2348, %v2349
    %v2351 = vrot.slane %v2350, 2
    %v2352 = vadd.f32 %v2350, %v2351
    %v2353 = vrot.slane %v2352, 1
    %v2354 = vadd.f32 %v2352, %v2353
    %v2363 = vsel %vm560, %v2312, %v2305
    %v2364 = vsel %vm562, %v2319, %v2363
    %v2365 = vsel %vm564, %v2326, %v2364
    %v2366 = vsel %vm566, %v2333, %v2365
    %v2367 = vsel %vm568, %v2340, %v2366
    %v2368 = vsel %vm570, %v2347, %v2367
    %v2369 = vsel %vm572, %v2354, %v2368
    %v2370 = vsel %vm146, %v2369, 0
    %2372 = vmatprep.subr.mxu0 0.0
    %2373 = vmatpush1.msra.mxu0 %v123
    %2374 = vmatprep.subr.mxu0 0.0
    %2375 = vmatpush1.msra.mxu0 %v124
    %2376 = vmatprep.subr.mxu0 0.0
    %2377 = vmatpush1.msra.mxu0 %v125
    %2378 = vmatprep.subr.mxu0 0.0
    %2379 = vmatpush1.msra.mxu0 %v126
    %2380 = vmatprep.subr.mxu0 0.0
    %2381 = vmatpush1.msra.mxu0 0.0
    %2382 = vmatprep.subr.mxu0 0.0
    %2383 = vmatpush1.msra.mxu0 0.0
    %2384 = vmatprep.subr.mxu0 0.0
    %2385 = vmatpush1.msra.mxu0 0.0
    %2386 = vmatprep.subr.mxu0 0.0
    %2387 = vmatpush1.msra.mxu0 0.0
    %2388 = vmatprep.subr.mxu0 0.0
    %2389 = vmatpush1.msra.mxu0 0.0
    %2390 = vmatprep.subr.mxu0 0.0
    %2391 = vmatpush1.msra.mxu0 0.0
    %2392 = vmatprep.subr.mxu0 0.0
    %2393 = vmatpush1.msra.mxu0 0.0
    %2394 = vmatprep.subr.mxu0 0.0
    %2395 = vmatpush1.msra.mxu0 0.0
    %2396 = vmatprep.subr.mxu0 0.0
    %2397 = vmatpush1.msra.mxu0 0.0
    %2398 = vmatprep.subr.mxu0 0.0
    %2399 = vmatpush1.msra.mxu0 0.0
    %2400 = vmatprep.subr.mxu0 0.0
    %2401 = vmatpush1.msra.mxu0 0.0
    %2402 = vmatprep.subr.mxu0 0.0
    %2403 = vmatpush1.msra.mxu0 0.0
    %2404 = vmatprep.subr.mxu0 0.0
    %2405 = vmatpush1.msra.mxu0 0.0
    %2406 = vmatprep.subr.mxu0 0.0
    %2407 = vmatpush1.msra.mxu0 0.0
    %2408 = vmatprep.subr.mxu0 0.0
    %2409 = vmatpush1.msra.mxu0 0.0
    %2410 = vmatprep.subr.mxu0 0.0
    %2411 = vmatpush1.msra.mxu0 0.0
    %2412 = vmatprep.subr.mxu0 0.0
    %2413 = vmatpush1.msra.mxu0 0.0
    %2414 = vmatprep.subr.mxu0 0.0
    %2415 = vmatpush1.msra.mxu0 0.0
    %2416 = vmatprep.subr.mxu0 0.0
    %2417 = vmatpush1.msra.mxu0 0.0
    %2418 = vmatprep.subr.mxu0 0.0
    %2419 = vmatpush1.msra.mxu0 0.0
    %2420 = vmatprep.subr.mxu0 0.0
    %2421 = vmatpush1.msra.mxu0 0.0
    %2422 = vmatprep.subr.mxu0 0.0
    %2423 = vmatpush1.msra.mxu0 0.0
    %2424 = vmatprep.subr.mxu0 0.0
    %2425 = vmatpush1.msra.mxu0 0.0
    %2426 = vmatprep.subr.mxu0 0.0
    %2427 = vmatpush1.msra.mxu0 0.0
    %2428 = vmatprep.subr.mxu0 0.0
    %2429 = vmatpush1.msra.mxu0 0.0
    %2430 = vmatprep.subr.mxu0 0.0
    %2431 = vmatpush1.msra.mxu0 0.0
    %2432 = vmatprep.subr.mxu0 0.0
    %2433 = vmatpush1.msra.mxu0 0.0
    %2434 = vmatprep.subr.mxu0 0.0
    %2435 = vmatpush1.msra.mxu0 0.0
    %2436 = vmatprep.mubr.f32.mxu0 0.0
    %2437 = vmatmul.mubr.f32.gmra.mrb[0].mxu0 %v2370
    %v2438 = vpop.f32.mrb[0].mxu0
    %v2439 = vadd.f32 0.0, %v2438
    %v2440 = vpop.f32.mrb[0].mxu0
    %2441 = vdwg.mxu0
    %2442 = vrot.lane.b32.xlu0 %v1871, 32
    %v2443 = vpop.permute.xlu0 %2442
    %v2444 = vsel %vm146, %v2443, 0
    %2446 = vmatprep.subr.mxu0 0.0
    %2447 = vmatpush1.msra.mxu0 %v119
    %2448 = vmatprep.subr.mxu0 0.0
    %2449 = vmatpush1.msra.mxu0 %v120
    %2450 = vmatprep.subr.mxu0 0.0
    %2451 = vmatpush1.msra.mxu0 %v121
    %2452 = vmatprep.subr.mxu0 0.0
    %2453 = vmatpush1.msra.mxu0 %v122
    %2454 = vmatprep.subr.mxu0 0.0
    %2455 = vmatpush1.msra.mxu0 0.0
    %2456 = vmatprep.subr.mxu0 0.0
    %2457 = vmatpush1.msra.mxu0 0.0
    %2458 = vmatprep.subr.mxu0 0.0
    %2459 = vmatpush1.msra.mxu0 0.0
    %2460 = vmatprep.subr.mxu0 0.0
    %2461 = vmatpush1.msra.mxu0 0.0
    %2462 = vmatprep.subr.mxu0 0.0
    %2463 = vmatpush1.msra.mxu0 0.0
    %2464 = vmatprep.subr.mxu0 0.0
    %2465 = vmatpush1.msra.mxu0 0.0
    %2466 = vmatprep.subr.mxu0 0.0
    %2467 = vmatpush1.msra.mxu0 0.0
    %2468 = vmatprep.subr.mxu0 0.0
    %2469 = vmatpush1.msra.mxu0 0.0
    %2470 = vmatprep.subr.mxu0 0.0
    %2471 = vmatpush1.msra.mxu0 0.0
    %2472 = vmatprep.subr.mxu0 0.0
    %2473 = vmatpush1.msra.mxu0 0.0
    %2474 = vmatprep.subr.mxu0 0.0
    %2475 = vmatpush1.msra.mxu0 0.0
    %2476 = vmatprep.subr.mxu0 0.0
    %2477 = vmatpush1.msra.mxu0 0.0
    %2478 = vmatprep.subr.mxu0 0.0
    %2479 = vmatpush1.msra.mxu0 0.0
    %2480 = vmatprep.subr.mxu0 0.0
    %2481 = vmatpush1.msra.mxu0 0.0
    %2482 = vmatprep.subr.mxu0 0.0
    %2483 = vmatpush1.msra.mxu0 0.0
    %2484 = vmatprep.subr.mxu0 0.0
    %2485 = vmatpush1.msra.mxu0 0.0
    %2486 = vmatprep.subr.mxu0 0.0
    %2487 = vmatpush1.msra.mxu0 0.0
    %2488 = vmatprep.subr.mxu0 0.0
    %2489 = vmatpush1.msra.mxu0 0.0
    %2490 = vmatprep.subr.mxu0 0.0
    %2491 = vmatpush1.msra.mxu0 0.0
    %2492 = vmatprep.subr.mxu0 0.0
    %2493 = vmatpush1.msra.mxu0 0.0
    %2494 = vmatprep.subr.mxu0 0.0
    %2495 = vmatpush1.msra.mxu0 0.0
    %2496 = vmatprep.subr.mxu0 0.0
    %2497 = vmatpush1.msra.mxu0 0.0
    %2498 = vmatprep.subr.mxu0 0.0
    %2499 = vmatpush1.msra.mxu0 0.0
    %2500 = vmatprep.subr.mxu0 0.0
    %2501 = vmatpush1.msra.mxu0 0.0
    %2502 = vmatprep.subr.mxu0 0.0
    %2503 = vmatpush1.msra.mxu0 0.0
    %2504 = vmatprep.subr.mxu0 0.0
    %2505 = vmatpush1.msra.mxu0 0.0
    %2506 = vmatprep.subr.mxu0 0.0
    %2507 = vmatpush1.msra.mxu0 0.0
    %2508 = vmatprep.subr.mxu0 0.0
    %2509 = vmatpush1.msra.mxu0 0.0
    %2510 = vmatprep.mubr.f32.mxu0 0.0
    %2511 = vmatmul.mubr.f32.gmra.mrb[0].mxu0 %v2444
    %v2512 = vpop.f32.mrb[0].mxu0
    %v2513 = vadd.f32 %v2439, %v2512
    %v2514 = vpop.f32.mrb[0].mxu0
    %2515 = vdwg.mxu0
    %v2516 = vtanh.pop %v2513
    %2517 = vst.msk [vmem:[#allocation2 + $0x10] sm:$0xff] %vm146, %v2516
    %2518 = vmatprep.subr.mxu0 0.0
    %2519 = vmatpush1.msra.mxu0 %v115
    %2520 = vmatprep.subr.mxu0 0.0
    %2521 = vmatpush1.msra.mxu0 %v116
    %2522 = vmatprep.subr.mxu0 0.0
    %2523 = vmatpush1.msra.mxu0 %v117
    %2524 = vmatprep.subr.mxu0 0.0
    %2525 = vmatpush1.msra.mxu0 %v118
    %2526 = vmatprep.subr.mxu0 0.0
    %2527 = vmatpush1.msra.mxu0 0.0
    %2528 = vmatprep.subr.mxu0 0.0
    %2529 = vmatpush1.msra.mxu0 0.0
    %2530 = vmatprep.subr.mxu0 0.0
    %2531 = vmatpush1.msra.mxu0 0.0
    %2532 = vmatprep.subr.mxu0 0.0
    %2533 = vmatpush1.msra.mxu0 0.0
    %2534 = vmatprep.subr.mxu0 0.0
    %2535 = vmatpush1.msra.mxu0 0.0
    %2536 = vmatprep.subr.mxu0 0.0
    %2537 = vmatpush1.msra.mxu0 0.0
    %2538 = vmatprep.subr.mxu0 0.0
    %2539 = vmatpush1.msra.mxu0 0.0
    %2540 = vmatprep.subr.mxu0 0.0
    %2541 = vmatpush1.msra.mxu0 0.0
    %2542 = vmatprep.subr.mxu0 0.0
    %2543 = vmatpush1.msra.mxu0 0.0
    %2544 = vmatprep.subr.mxu0 0.0
    %2545 = vmatpush1.msra.mxu0 0.0
    %2546 = vmatprep.subr.mxu0 0.0
    %2547 = vmatpush1.msra.mxu0 0.0
    %2548 = vmatprep.subr.mxu0 0.0
    %2549 = vmatpush1.msra.mxu0 0.0
    %2550 = vmatprep.subr.mxu0 0.0
    %2551 = vmatpush1.msra.mxu0 0.0
    %2552 = vmatprep.subr.mxu0 0.0
    %2553 = vmatpush1.msra.mxu0 0.0
    %2554 = vmatprep.subr.mxu0 0.0
    %2555 = vmatpush1.msra.mxu0 0.0
    %2556 = vmatprep.subr.mxu0 0.0
    %2557 = vmatpush1.msra.mxu0 0.0
    %2558 = vmatprep.subr.mxu0 0.0
    %2559 = vmatpush1.msra.mxu0 0.0
    %2560 = vmatprep.subr.mxu0 0.0
    %2561 = vmatpush1.msra.mxu0 0.0
    %2562 = vmatprep.subr.mxu0 0.0
    %2563 = vmatpush1.msra.mxu0 0.0
    %2564 = vmatprep.subr.mxu0 0.0
    %2565 = vmatpush1.msra.mxu0 0.0
    %2566 = vmatprep.subr.mxu0 0.0
    %2567 = vmatpush1.msra.mxu0 0.0
    %2568 = vmatprep.subr.mxu0 0.0
    %2569 = vmatpush1.msra.mxu0 0.0
    %2570 = vmatprep.subr.mxu0 0.0
    %2571 = vmatpush1.msra.mxu0 0.0
    %2572 = vmatprep.subr.mxu0 0.0
    %2573 = vmatpush1.msra.mxu0 0.0
    %2574 = vmatprep.subr.mxu0 0.0
    %2575 = vmatpush1.msra.mxu0 0.0
    %2576 = vmatprep.subr.mxu0 0.0
    %2577 = vmatpush1.msra.mxu0 0.0
    %2578 = vmatprep.subr.mxu0 0.0
    %2579 = vmatpush1.msra.mxu0 0.0
    %2580 = vmatprep.subr.mxu0 0.0
    %2581 = vmatpush1.msra.mxu0 0.0
    %2582 = vmatprep.mubr.f32.mxu0 0.0
    %2583 = vmatmul.mubr.f32.gmra.mrb[0].mxu0 %v2444
    %v2584 = vpop.f32.mrb[0].mxu0
    %v2585 = vadd.f32 0.0, %v2584
    %v2586 = vpop.f32.mrb[0].mxu0
    %2587 = vdwg.mxu0
    %v2588 = vadd.f32 %v253, %v2585
    %v2589 = vxor.u32 %v2588, 2147483648
    %v2590 = vmul.f32 %v2589, 1.442695
    %v2591 = vpow.pop %v2590
    %v2592 = vadd.f32 %v2591, 1.0
    %v2593 = vrcp.pop %v2592
    %v2594 = vmul.f32 1.0, %v2593
    %v2595 = vtanh.pop %v2588
    %v2596 = vmul.f32 %v2594, %v1865
    %2598 = vrot.lane.b32.xlu0 %v2595, 64
    %v2599 = vpop.permute.xlu0 %2598
    %v2601 = vmul.f32 %v2594, %v2599
    %2603 = vrot.lane.b32.xlu0 %v2601, 32
    %v2604 = vpop.permute.xlu0 %2603
    %v2606 = vadd.f32 %v2596, %v2604
    %v2607 = vtanh.pop %v2606
    %2609 = vrot.lane.b32.xlu0 %v2607, 64
    %v2610 = vpop.permute.xlu0 %2609
    %v2612 = vmul.f32 %v2594, %v2610
    %v2614 = vcombine.high %v2612, %v2612
    %v2616 = vunpack.c.l.s4 1966171168
    %v2617 = vunpack.c.0.s8 %v2616
    %v2618 = vlaneseq
    %v2619 = vshrl.u32 %v2618, 7
    %v2620 = vsub.s32 %v2617, %v2619
    %v2621 = vrot.slane %v2612, %v2620
    %v2623 = vunpack.c.l.s4 1966171168
    %v2624 = vunpack.c.0.s8 %v2623
    %v2625 = vlaneseq
    %v2626 = vshrl.u32 %v2625, 7
    %v2627 = vsub.s32 %v2624, %v2626
    %v2628 = vrot.slane %v2614, %v2627
    %v2629 = vcombine.high %v2621, %v2621
    %v2630 = vcombine.high %v2628, %v2628
    %v2632 = vunpack.c.l.s4 1966171168
    %v2633 = vunpack.c.0.s8 %v2632
    %v2634 = vlaneseq
    %v2635 = vshrl.u32 %v2634, 7
    %v2636 = vsub.s32 %v2633, %v2635
    %v2637 = vrot.slane %v2621, %v2636
    %v2639 = vunpack.c.l.s4 1966171168
    %v2640 = vunpack.c.0.s8 %v2639
    %v2641 = vlaneseq
    %v2642 = vshrl.u32 %v2641, 7
    %v2643 = vsub.s32 %v2640, %v2642
    %v2644 = vrot.slane %v2628, %v2643
    %v2646 = vunpack.c.l.s4 1966171168
    %v2647 = vunpack.c.0.s8 %v2646
    %v2648 = vlaneseq
    %v2649 = vshrl.u32 %v2648, 7
    %v2650 = vsub.s32 %v2647, %v2649
    %v2651 = vrot.slane %v2629, %v2650
    %v2653 = vunpack.c.l.s4 1966171168
    %v2654 = vunpack.c.0.s8 %v2653
    %v2655 = vlaneseq
    %v2656 = vshrl.u32 %v2655, 7
    %v2657 = vsub.s32 %v2654, %v2656
    %v2658 = vrot.slane %v2630, %v2657
    %v2659 = vcombine.high %v2637, %v2637
    %v2660 = vcombine.high %v2644, %v2644
    %v2661 = vcombine.high %v2651, %v2651
    %v2662 = vcombine.high %v2658, %v2658
    %v2663 = vlaneseq
    %v2664 = vshrl.u32 %v2663, 7
    %v2665 = vsub.s32 0, %v2664
    %v2666 = vrot.slane %v2637, %v2665
    %v2667 = vlaneseq
    %v2668 = vshrl.u32 %v2667, 7
    %v2669 = vsub.s32 0, %v2668
    %v2670 = vrot.slane %v2651, %v2669
    %v2671 = vlaneseq
    %v2672 = vshrl.u32 %v2671, 7
    %v2673 = vsub.s32 0, %v2672
    %v2674 = vrot.slane %v2659, %v2673
    %v2675 = vlaneseq
    %v2676 = vshrl.u32 %v2675, 7
    %v2677 = vsub.s32 0, %v2676
    %v2678 = vrot.slane %v2661, %v2677
    %v2679 = vlaneseq
    %v2680 = vshrl.u32 %v2679, 7
    %v2681 = vsub.s32 0, %v2680
    %v2682 = vrot.slane %v2644, %v2681
    %v2683 = vlaneseq
    %v2684 = vshrl.u32 %v2683, 7
    %v2685 = vsub.s32 0, %v2684
    %v2686 = vrot.slane %v2658, %v2685
    %v2687 = vlaneseq
    %v2688 = vshrl.u32 %v2687, 7
    %v2689 = vsub.s32 0, %v2688
    %v2690 = vrot.slane %v2660, %v2689
    %v2691 = vlaneseq
    %v2692 = vshrl.u32 %v2691, 7
    %v2693 = vsub.s32 0, %v2692
    %v2694 = vrot.slane %v2662, %v2693
    %2695 = vrot.lane.b32.xlu0 %v2666, 32
    %v2696 = vpop.permute.xlu0 %2695
    %2697 = vrot.lane.b32.xlu0 %v2670, 32
    %v2698 = vpop.permute.xlu0 %2697
    %2699 = vrot.lane.b32.xlu0 %v2674, 32
    %v2700 = vpop.permute.xlu0 %2699
    %2701 = vrot.lane.b32.xlu0 %v2678, 32
    %v2702 = vpop.permute.xlu0 %2701
    %2703 = vrot.lane.b32.xlu0 %v2682, 32
    %v2704 = vpop.permute.xlu0 %2703
    %2705 = vrot.lane.b32.xlu0 %v2686, 32
    %v2706 = vpop.permute.xlu0 %2705
    %2707 = vrot.lane.b32.xlu0 %v2690, 32
    %v2708 = vpop.permute.xlu0 %2707
    %2709 = vrot.lane.b32.xlu0 %v2694, 32
    %v2710 = vpop.permute.xlu0 %2709
    %v2719 = vmul.f32 %v107, %v2696
    %v2720 = vmul.f32 %v108, %v2698
    %v2721 = vmul.f32 %v109, %v2700
    %v2722 = vmul.f32 %v110, %v2702
    %v2723 = vmul.f32 %v111, %v2704
    %v2724 = vmul.f32 %v112, %v2706
    %v2725 = vmul.f32 %v113, %v2708
    %v2726 = vmul.f32 %v114, %v2710
    %v2727 = vsel %vm146, %v2719, 0.0
    %2728 = vadd.xlane.f32.xlu0 %v2727
    %v2729 = vpop.xlane.xlu0 %2728
    %v2730 = vsel %vm146, %v2720, 0.0
    %2731 = vadd.xlane.f32.xlu0 %v2730
    %v2732 = vpop.xlane.xlu0 %2731
    %v2733 = vsel %vm146, %v2721, 0.0
    %2734 = vadd.xlane.f32.xlu0 %v2733
    %v2735 = vpop.xlane.xlu0 %2734
    %v2736 = vsel %vm146, %v2722, 0.0
    %2737 = vadd.xlane.f32.xlu0 %v2736
    %v2738 = vpop.xlane.xlu0 %2737
    %v2739 = vsel %vm146, %v2723, 0.0
    %2740 = vadd.xlane.f32.xlu0 %v2739
    %v2741 = vpop.xlane.xlu0 %2740
    %v2742 = vsel %vm146, %v2724, 0.0
    %2743 = vadd.xlane.f32.xlu0 %v2742
    %v2744 = vpop.xlane.xlu0 %2743
    %v2745 = vsel %vm146, %v2725, 0.0
    %2746 = vadd.xlane.f32.xlu0 %v2745
    %v2747 = vpop.xlane.xlu0 %2746
    %v2748 = vsel %vm146, %v2726, 0.0
    %2749 = vadd.xlane.f32.xlu0 %v2748
    %v2750 = vpop.xlane.xlu0 %2749
    %v2759 = vlaneseq
    %v2760 = vshrl.u32 %v2759, 7
    %v2761 = vsub.s32 %v527, %v2760
    %v2762 = vrot.slane %v2729, %v2761
    %v2763 = vlaneseq
    %v2764 = vshrl.u32 %v2763, 7
    %v2765 = vsub.s32 %v527, %v2764
    %v2766 = vrot.slane %v2732, %v2765
    %v2767 = vlaneseq
    %v2768 = vshrl.u32 %v2767, 7
    %v2769 = vsub.s32 %v527, %v2768
    %v2770 = vrot.slane %v2735, %v2769
    %v2771 = vlaneseq
    %v2772 = vshrl.u32 %v2771, 7
    %v2773 = vsub.s32 %v527, %v2772
    %v2774 = vrot.slane %v2738, %v2773
    %v2775 = vlaneseq
    %v2776 = vshrl.u32 %v2775, 7
    %v2777 = vsub.s32 %v527, %v2776
    %v2778 = vrot.slane %v2741, %v2777
    %v2779 = vlaneseq
    %v2780 = vshrl.u32 %v2779, 7
    %v2781 = vsub.s32 %v527, %v2780
    %v2782 = vrot.slane %v2744, %v2781
    %v2783 = vlaneseq
    %v2784 = vshrl.u32 %v2783, 7
    %v2785 = vsub.s32 %v527, %v2784
    %v2786 = vrot.slane %v2747, %v2785
    %v2787 = vlaneseq
    %v2788 = vshrl.u32 %v2787, 7
    %v2789 = vsub.s32 %v527, %v2788
    %v2790 = vrot.slane %v2750, %v2789
    %v2791 = vsel %vm560, %v2766, %v2762
    %v2792 = vsel %vm562, %v2770, %v2791
    %v2793 = vsel %vm564, %v2774, %v2792
    %v2794 = vsel %vm566, %v2778, %v2793
    %v2795 = vsel %vm568, %v2782, %v2794
    %v2796 = vsel %vm570, %v2786, %v2795
    %v2797 = vsel %vm572, %v2790, %v2796
    %v2799 = vsel %vm575, %v2797, -inf
    %2800 = vmax.xlane.f32.xlu0 %v2799
    %v2801 = vpop.xlane.xlu0 %2800
    %v2803 = vlaneseq
    %v2804 = vshrl.u32 %v2803, 7
    %v2805 = vsub.s32 0, %v2804
    %v2806 = vrot.slane %v2801, %v2805
    %v2807 = vlaneseq
    %v2808 = vshrl.u32 %v2807, 7
    %v2809 = vsub.s32 1, %v2808
    %v2810 = vrot.slane %v2801, %v2809
    %v2811 = vlaneseq
    %v2812 = vshrl.u32 %v2811, 7
    %v2813 = vsub.s32 2, %v2812
    %v2814 = vrot.slane %v2801, %v2813
    %v2815 = vlaneseq
    %v2816 = vshrl.u32 %v2815, 7
    %v2817 = vsub.s32 3, %v2816
    %v2818 = vrot.slane %v2801, %v2817
    %v2819 = vlaneseq
    %v2820 = vshrl.u32 %v2819, 7
    %v2821 = vsub.s32 4, %v2820
    %v2822 = vrot.slane %v2801, %v2821
    %v2823 = vlaneseq
    %v2824 = vshrl.u32 %v2823, 7
    %v2825 = vsub.s32 5, %v2824
    %v2826 = vrot.slane %v2801, %v2825
    %v2827 = vlaneseq
    %v2828 = vshrl.u32 %v2827, 7
    %v2829 = vsub.s32 6, %v2828
    %v2830 = vrot.slane %v2801, %v2829
    %v2831 = vlaneseq
    %v2832 = vshrl.u32 %v2831, 7
    %v2833 = vsub.s32 7, %v2832
    %v2834 = vrot.slane %v2801, %v2833
    %v2843 = vsub.f32 %v2729, %v2806
    %v2844 = vsub.f32 %v2732, %v2810
    %v2845 = vsub.f32 %v2735, %v2814
    %v2846 = vsub.f32 %v2738, %v2818
    %v2847 = vsub.f32 %v2741, %v2822
    %v2848 = vsub.f32 %v2744, %v2826
    %v2849 = vsub.f32 %v2747, %v2830
    %v2850 = vsub.f32 %v2750, %v2834
    %v2851 = vmul.f32 %v2843, 1.442695
    %v2852 = vpow.pop %v2851
    %v2853 = vmul.f32 %v2844, 1.442695
    %v2854 = vpow.pop %v2853
    %v2855 = vmul.f32 %v2845, 1.442695
    %v2856 = vpow.pop %v2855
    %v2857 = vmul.f32 %v2846, 1.442695
    %v2858 = vpow.pop %v2857
    %v2859 = vmul.f32 %v2847, 1.442695
    %v2860 = vpow.pop %v2859
    %v2861 = vmul.f32 %v2848, 1.442695
    %v2862 = vpow.pop %v2861
    %v2863 = vmul.f32 %v2849, 1.442695
    %v2864 = vpow.pop %v2863
    %v2865 = vmul.f32 %v2850, 1.442695
    %v2866 = vpow.pop %v2865
    %2875 = vset.pattern.permute.xlu0 0
    %2876 = vperm.xlu0 %2875, %v2852
    %v2877 = vpop.permute.xlu0 %2876
    %2878 = vset.pattern.permute.xlu0 0
    %2879 = vperm.xlu0 %2878, %v2854
    %v2880 = vpop.permute.xlu0 %2879
    %2881 = vset.pattern.permute.xlu0 0
    %2882 = vperm.xlu0 %2881, %v2856
    %v2883 = vpop.permute.xlu0 %2882
    %2884 = vset.pattern.permute.xlu0 0
    %2885 = vperm.xlu0 %2884, %v2858
    %v2886 = vpop.permute.xlu0 %2885
    %2887 = vset.pattern.permute.xlu0 0
    %2888 = vperm.xlu0 %2887, %v2860
    %v2889 = vpop.permute.xlu0 %2888
    %2890 = vset.pattern.permute.xlu0 0
    %2891 = vperm.xlu0 %2890, %v2862
    %v2892 = vpop.permute.xlu0 %2891
    %2893 = vset.pattern.permute.xlu0 0
    %2894 = vperm.xlu0 %2893, %v2864
    %v2895 = vpop.permute.xlu0 %2894
    %2896 = vset.pattern.permute.xlu0 0
    %2897 = vperm.xlu0 %2896, %v2866
    %v2898 = vpop.permute.xlu0 %2897
    %v2899 = vlaneseq
    %v2900 = vshrl.u32 %v2899, 7
    %v2901 = vsub.s32 %v527, %v2900
    %v2902 = vrot.slane %v2877, %v2901
    %v2903 = vlaneseq
    %v2904 = vshrl.u32 %v2903, 7
    %v2905 = vsub.s32 %v527, %v2904
    %v2906 = vrot.slane %v2880, %v2905
    %v2907 = vlaneseq
    %v2908 = vshrl.u32 %v2907, 7
    %v2909 = vsub.s32 %v527, %v2908
    %v2910 = vrot.slane %v2883, %v2909
    %v2911 = vlaneseq
    %v2912 = vshrl.u32 %v2911, 7
    %v2913 = vsub.s32 %v527, %v2912
    %v2914 = vrot.slane %v2886, %v2913
    %v2915 = vlaneseq
    %v2916 = vshrl.u32 %v2915, 7
    %v2917 = vsub.s32 %v527, %v2916
    %v2918 = vrot.slane %v2889, %v2917
    %v2919 = vlaneseq
    %v2920 = vshrl.u32 %v2919, 7
    %v2921 = vsub.s32 %v527, %v2920
    %v2922 = vrot.slane %v2892, %v2921
    %v2923 = vlaneseq
    %v2924 = vshrl.u32 %v2923, 7
    %v2925 = vsub.s32 %v527, %v2924
    %v2926 = vrot.slane %v2895, %v2925
    %v2927 = vlaneseq
    %v2928 = vshrl.u32 %v2927, 7
    %v2929 = vsub.s32 %v527, %v2928
    %v2930 = vrot.slane %v2898, %v2929
    %v2931 = vsel %vm560, %v2906, %v2902
    %v2932 = vsel %vm562, %v2910, %v2931
    %v2933 = vsel %vm564, %v2914, %v2932
    %v2934 = vsel %vm566, %v2918, %v2933
    %v2935 = vsel %vm568, %v2922, %v2934
    %v2936 = vsel %vm570, %v2926, %v2935
    %v2937 = vsel %vm572, %v2930, %v2936
    %v2939 = vsel %vm575, %v2937, 0.0
    %2940 = vadd.xlane.f32.xlu0 %v2939
    %v2941 = vpop.xlane.xlu0 %2940
    %v2942 = vrcp.pop %v2941
    %v2944 = vlaneseq
    %v2945 = vshrl.u32 %v2944, 7
    %v2946 = vsub.s32 0, %v2945
    %v2947 = vrot.slane %v2942, %v2946
    %v2948 = vlaneseq
    %v2949 = vshrl.u32 %v2948, 7
    %v2950 = vsub.s32 1, %v2949
    %v2951 = vrot.slane %v2942, %v2950
    %v2952 = vlaneseq
    %v2953 = vshrl.u32 %v2952, 7
    %v2954 = vsub.s32 2, %v2953
    %v2955 = vrot.slane %v2942, %v2954
    %v2956 = vlaneseq
    %v2957 = vshrl.u32 %v2956, 7
    %v2958 = vsub.s32 3, %v2957
    %v2959 = vrot.slane %v2942, %v2958
    %v2960 = vlaneseq
    %v2961 = vshrl.u32 %v2960, 7
    %v2962 = vsub.s32 4, %v2961
    %v2963 = vrot.slane %v2942, %v2962
    %v2964 = vlaneseq
    %v2965 = vshrl.u32 %v2964, 7
    %v2966 = vsub.s32 5, %v2965
    %v2967 = vrot.slane %v2942, %v2966
    %v2968 = vlaneseq
    %v2969 = vshrl.u32 %v2968, 7
    %v2970 = vsub.s32 6, %v2969
    %v2971 = vrot.slane %v2942, %v2970
    %v2972 = vlaneseq
    %v2973 = vshrl.u32 %v2972, 7
    %v2974 = vsub.s32 7, %v2973
    %v2975 = vrot.slane %v2942, %v2974
    %v2984 = vmul.f32 %v2852, %v2947
    %v2985 = vmul.f32 %v2854, %v2951
    %v2986 = vmul.f32 %v2856, %v2955
    %v2987 = vmul.f32 %v2858, %v2959
    %v2988 = vmul.f32 %v2860, %v2963
    %v2989 = vmul.f32 %v2862, %v2967
    %v2990 = vmul.f32 %v2864, %v2971
    %v2991 = vmul.f32 %v2866, %v2975
    %2993 = vset.pattern.permute.xlu0 0
    %2994 = vperm.xlu0 %2993, %v2984
    %v2995 = vpop.permute.xlu0 %2994
    %2998 = vset.pattern.permute.xlu0 0
    %2999 = vperm.xlu0 %2998, %v2985
    %v3000 = vpop.permute.xlu0 %2999
    %3003 = vset.pattern.permute.xlu0 0
    %3004 = vperm.xlu0 %3003, %v2986
    %v3005 = vpop.permute.xlu0 %3004
    %3008 = vset.pattern.permute.xlu0 0
    %3009 = vperm.xlu0 %3008, %v2987
    %v3010 = vpop.permute.xlu0 %3009
    %3013 = vset.pattern.permute.xlu0 0
    %3014 = vperm.xlu0 %3013, %v2988
    %v3015 = vpop.permute.xlu0 %3014
    %3018 = vset.pattern.permute.xlu0 0
    %3019 = vperm.xlu0 %3018, %v2989
    %v3020 = vpop.permute.xlu0 %3019
    %3023 = vset.pattern.permute.xlu0 0
    %3024 = vperm.xlu0 %3023, %v2990
    %v3025 = vpop.permute.xlu0 %3024
    %3028 = vset.pattern.permute.xlu0 0
    %3029 = vperm.xlu0 %3028, %v2991
    %v3030 = vpop.permute.xlu0 %3029
    %v3032 = vmul.f32 %v2995, %v107
    %v3033 = vmul.f32 %v3000, %v108
    %v3034 = vmul.f32 %v3005, %v109
    %v3035 = vmul.f32 %v3010, %v110
    %v3036 = vmul.f32 %v3015, %v111
    %v3037 = vmul.f32 %v3020, %v112
    %v3038 = vmul.f32 %v3025, %v113
    %v3039 = vmul.f32 %v3030, %v114
    %v3040 = vsel %vm146, %v3032, 0.0
    %v3041 = vrot.slane %v3040, 4
    %v3042 = vadd.f32 %v3040, %v3041
    %v3043 = vrot.slane %v3042, 2
    %v3044 = vadd.f32 %v3042, %v3043
    %v3045 = vrot.slane %v3044, 1
    %v3046 = vadd.f32 %v3044, %v3045
    %v3047 = vsel %vm146, %v3033, 0.0
    %v3048 = vrot.slane %v3047, 4
    %v3049 = vadd.f32 %v3047, %v3048
    %v3050 = vrot.slane %v3049, 2
    %v3051 = vadd.f32 %v3049, %v3050
    %v3052 = vrot.slane %v3051, 1
    %v3053 = vadd.f32 %v3051, %v3052
    %v3054 = vsel %vm146, %v3034, 0.0
    %v3055 = vrot.slane %v3054, 4
    %v3056 = vadd.f32 %v3054, %v3055
    %v3057 = vrot.slane %v3056, 2
    %v3058 = vadd.f32 %v3056, %v3057
    %v3059 = vrot.slane %v3058, 1
    %v3060 = vadd.f32 %v3058, %v3059
    %v3061 = vsel %vm146, %v3035, 0.0
    %v3062 = vrot.slane %v3061, 4
    %v3063 = vadd.f32 %v3061, %v3062
    %v3064 = vrot.slane %v3063, 2
    %v3065 = vadd.f32 %v3063, %v3064
    %v3066 = vrot.slane %v3065, 1
    %v3067 = vadd.f32 %v3065, %v3066
    %v3068 = vsel %vm146, %v3036, 0.0
    %v3069 = vrot.slane %v3068, 4
    %v3070 = vadd.f32 %v3068, %v3069
    %v3071 = vrot.slane %v3070, 2
    %v3072 = vadd.f32 %v3070, %v3071
    %v3073 = vrot.slane %v3072, 1
    %v3074 = vadd.f32 %v3072, %v3073
    %v3075 = vsel %vm146, %v3037, 0.0
    %v3076 = vrot.slane %v3075, 4
    %v3077 = vadd.f32 %v3075, %v3076
    %v3078 = vrot.slane %v3077, 2
    %v3079 = vadd.f32 %v3077, %v3078
    %v3080 = vrot.slane %v3079, 1
    %v3081 = vadd.f32 %v3079, %v3080
    %v3082 = vsel %vm146, %v3038, 0.0
    %v3083 = vrot.slane %v3082, 4
    %v3084 = vadd.f32 %v3082, %v3083
    %v3085 = vrot.slane %v3084, 2
    %v3086 = vadd.f32 %v3084, %v3085
    %v3087 = vrot.slane %v3086, 1
    %v3088 = vadd.f32 %v3086, %v3087
    %v3089 = vsel %vm146, %v3039, 0.0
    %v3090 = vrot.slane %v3089, 4
    %v3091 = vadd.f32 %v3089, %v3090
    %v3092 = vrot.slane %v3091, 2
    %v3093 = vadd.f32 %v3091, %v3092
    %v3094 = vrot.slane %v3093, 1
    %v3095 = vadd.f32 %v3093, %v3094
    %v3104 = vsel %vm560, %v3053, %v3046
    %v3105 = vsel %vm562, %v3060, %v3104
    %v3106 = vsel %vm564, %v3067, %v3105
    %v3107 = vsel %vm566, %v3074, %v3106
    %v3108 = vsel %vm568, %v3081, %v3107
    %v3109 = vsel %vm570, %v3088, %v3108
    %v3110 = vsel %vm572, %v3095, %v3109
    %v3111 = vsel %vm146, %v3110, 0
    %3113 = vmatprep.subr.mxu0 0.0
    %3114 = vmatpush1.msra.mxu0 %v123
    %3115 = vmatprep.subr.mxu0 0.0
    %3116 = vmatpush1.msra.mxu0 %v124
    %3117 = vmatprep.subr.mxu0 0.0
    %3118 = vmatpush1.msra.mxu0 %v125
    %3119 = vmatprep.subr.mxu0 0.0
    %3120 = vmatpush1.msra.mxu0 %v126
    %3121 = vmatprep.subr.mxu0 0.0
    %3122 = vmatpush1.msra.mxu0 0.0
    %3123 = vmatprep.subr.mxu0 0.0
    %3124 = vmatpush1.msra.mxu0 0.0
    %3125 = vmatprep.subr.mxu0 0.0
    %3126 = vmatpush1.msra.mxu0 0.0
    %3127 = vmatprep.subr.mxu0 0.0
    %3128 = vmatpush1.msra.mxu0 0.0
    %3129 = vmatprep.subr.mxu0 0.0
    %3130 = vmatpush1.msra.mxu0 0.0
    %3131 = vmatprep.subr.mxu0 0.0
    %3132 = vmatpush1.msra.mxu0 0.0
    %3133 = vmatprep.subr.mxu0 0.0
    %3134 = vmatpush1.msra.mxu0 0.0
    %3135 = vmatprep.subr.mxu0 0.0
    %3136 = vmatpush1.msra.mxu0 0.0
    %3137 = vmatprep.subr.mxu0 0.0
    %3138 = vmatpush1.msra.mxu0 0.0
    %3139 = vmatprep.subr.mxu0 0.0
    %3140 = vmatpush1.msra.mxu0 0.0
    %3141 = vmatprep.subr.mxu0 0.0
    %3142 = vmatpush1.msra.mxu0 0.0
    %3143 = vmatprep.subr.mxu0 0.0
    %3144 = vmatpush1.msra.mxu0 0.0
    %3145 = vmatprep.subr.mxu0 0.0
    %3146 = vmatpush1.msra.mxu0 0.0
    %3147 = vmatprep.subr.mxu0 0.0
    %3148 = vmatpush1.msra.mxu0 0.0
    %3149 = vmatprep.subr.mxu0 0.0
    %3150 = vmatpush1.msra.mxu0 0.0
    %3151 = vmatprep.subr.mxu0 0.0
    %3152 = vmatpush1.msra.mxu0 0.0
    %3153 = vmatprep.subr.mxu0 0.0
    %3154 = vmatpush1.msra.mxu0 0.0
    %3155 = vmatprep.subr.mxu0 0.0
    %3156 = vmatpush1.msra.mxu0 0.0
    %3157 = vmatprep.subr.mxu0 0.0
    %3158 = vmatpush1.msra.mxu0 0.0
    %3159 = vmatprep.subr.mxu0 0.0
    %3160 = vmatpush1.msra.mxu0 0.0
    %3161 = vmatprep.subr.mxu0 0.0
    %3162 = vmatpush1.msra.mxu0 0.0
    %3163 = vmatprep.subr.mxu0 0.0
    %3164 = vmatpush1.msra.mxu0 0.0
    %3165 = vmatprep.subr.mxu0 0.0
    %3166 = vmatpush1.msra.mxu0 0.0
    %3167 = vmatprep.subr.mxu0 0.0
    %3168 = vmatpush1.msra.mxu0 0.0
    %3169 = vmatprep.subr.mxu0 0.0
    %3170 = vmatpush1.msra.mxu0 0.0
    %3171 = vmatprep.subr.mxu0 0.0
    %3172 = vmatpush1.msra.mxu0 0.0
    %3173 = vmatprep.subr.mxu0 0.0
    %3174 = vmatpush1.msra.mxu0 0.0
    %3175 = vmatprep.subr.mxu0 0.0
    %3176 = vmatpush1.msra.mxu0 0.0
    %3177 = vmatprep.mubr.f32.mxu0 0.0
    %3178 = vmatmul.mubr.f32.gmra.mrb[0].mxu0 %v3111
    %v3179 = vpop.f32.mrb[0].mxu0
    %v3180 = vadd.f32 0.0, %v3179
    %v3181 = vpop.f32.mrb[0].mxu0
    %3182 = vdwg.mxu0
    %3183 = vrot.lane.b32.xlu0 %v2612, 32
    %v3184 = vpop.permute.xlu0 %3183
    %v3185 = vsel %vm146, %v3184, 0
    %3187 = vmatprep.subr.mxu0 0.0
    %3188 = vmatpush1.msra.mxu0 %v119
    %3189 = vmatprep.subr.mxu0 0.0
    %3190 = vmatpush1.msra.mxu0 %v120
    %3191 = vmatprep.subr.mxu0 0.0
    %3192 = vmatpush1.msra.mxu0 %v121
    %3193 = vmatprep.subr.mxu0 0.0
    %3194 = vmatpush1.msra.mxu0 %v122
    %3195 = vmatprep.subr.mxu0 0.0
    %3196 = vmatpush1.msra.mxu0 0.0
    %3197 = vmatprep.subr.mxu0 0.0
    %3198 = vmatpush1.msra.mxu0 0.0
    %3199 = vmatprep.subr.mxu0 0.0
    %3200 = vmatpush1.msra.mxu0 0.0
    %3201 = vmatprep.subr.mxu0 0.0
    %3202 = vmatpush1.msra.mxu0 0.0
    %3203 = vmatprep.subr.mxu0 0.0
    %3204 = vmatpush1.msra.mxu0 0.0
    %3205 = vmatprep.subr.mxu0 0.0
    %3206 = vmatpush1.msra.mxu0 0.0
    %3207 = vmatprep.subr.mxu0 0.0
    %3208 = vmatpush1.msra.mxu0 0.0
    %3209 = vmatprep.subr.mxu0 0.0
    %3210 = vmatpush1.msra.mxu0 0.0
    %3211 = vmatprep.subr.mxu0 0.0
    %3212 = vmatpush1.msra.mxu0 0.0
    %3213 = vmatprep.subr.mxu0 0.0
    %3214 = vmatpush1.msra.mxu0 0.0
    %3215 = vmatprep.subr.mxu0 0.0
    %3216 = vmatpush1.msra.mxu0 0.0
    %3217 = vmatprep.subr.mxu0 0.0
    %3218 = vmatpush1.msra.mxu0 0.0
    %3219 = vmatprep.subr.mxu0 0.0
    %3220 = vmatpush1.msra.mxu0 0.0
    %3221 = vmatprep.subr.mxu0 0.0
    %3222 = vmatpush1.msra.mxu0 0.0
    %3223 = vmatprep.subr.mxu0 0.0
    %3224 = vmatpush1.msra.mxu0 0.0
    %3225 = vmatprep.subr.mxu0 0.0
    %3226 = vmatpush1.msra.mxu0 0.0
    %3227 = vmatprep.subr.mxu0 0.0
    %3228 = vmatpush1.msra.mxu0 0.0
    %3229 = vmatprep.subr.mxu0 0.0
    %3230 = vmatpush1.msra.mxu0 0.0
    %3231 = vmatprep.subr.mxu0 0.0
    %3232 = vmatpush1.msra.mxu0 0.0
    %3233 = vmatprep.subr.mxu0 0.0
    %3234 = vmatpush1.msra.mxu0 0.0
    %3235 = vmatprep.subr.mxu0 0.0
    %3236 = vmatpush1.msra.mxu0 0.0
    %3237 = vmatprep.subr.mxu0 0.0
    %3238 = vmatpush1.msra.mxu0 0.0
    %3239 = vmatprep.subr.mxu0 0.0
    %3240 = vmatpush1.msra.mxu0 0.0
    %3241 = vmatprep.subr.mxu0 0.0
    %3242 = vmatpush1.msra.mxu0 0.0
    %3243 = vmatprep.subr.mxu0 0.0
    %3244 = vmatpush1.msra.mxu0 0.0
    %3245 = vmatprep.subr.mxu0 0.0
    %3246 = vmatpush1.msra.mxu0 0.0
    %3247 = vmatprep.subr.mxu0 0.0
    %3248 = vmatpush1.msra.mxu0 0.0
    %3249 = vmatprep.subr.mxu0 0.0
    %3250 = vmatpush1.msra.mxu0 0.0
    %3251 = vmatprep.mubr.f32.mxu0 0.0
    %3252 = vmatmul.mubr.f32.gmra.mrb[0].mxu0 %v3185
    %v3253 = vpop.f32.mrb[0].mxu0
    %v3254 = vadd.f32 %v3180, %v3253
    %v3255 = vpop.f32.mrb[0].mxu0
    %3256 = vdwg.mxu0
    %v3257 = vtanh.pop %v3254
    %3258 = vst.msk [vmem:[#allocation2 + $0x18] sm:$0xff] %vm146, %v3257
    %3259 = vmatprep.subr.mxu0 0.0
    %3260 = vmatpush1.msra.mxu0 %v115
    %3261 = vmatprep.subr.mxu0 0.0
    %3262 = vmatpush1.msra.mxu0 %v116
    %3263 = vmatprep.subr.mxu0 0.0
    %3264 = vmatpush1.msra.mxu0 %v117
    %3265 = vmatprep.subr.mxu0 0.0
    %3266 = vmatpush1.msra.mxu0 %v118
    %3267 = vmatprep.subr.mxu0 0.0
    %3268 = vmatpush1.msra.mxu0 0.0
    %3269 = vmatprep.subr.mxu0 0.0
    %3270 = vmatpush1.msra.mxu0 0.0
    %3271 = vmatprep.subr.mxu0 0.0
    %3272 = vmatpush1.msra.mxu0 0.0
    %3273 = vmatprep.subr.mxu0 0.0
    %3274 = vmatpush1.msra.mxu0 0.0
    %3275 = vmatprep.subr.mxu0 0.0
    %3276 = vmatpush1.msra.mxu0 0.0
    %3277 = vmatprep.subr.mxu0 0.0
    %3278 = vmatpush1.msra.mxu0 0.0
    %3279 = vmatprep.subr.mxu0 0.0
    %3280 = vmatpush1.msra.mxu0 0.0
    %3281 = vmatprep.subr.mxu0 0.0
    %3282 = vmatpush1.msra.mxu0 0.0
    %3283 = vmatprep.subr.mxu0 0.0
    %3284 = vmatpush1.msra.mxu0 0.0
    %3285 = vmatprep.subr.mxu0 0.0
    %3286 = vmatpush1.msra.mxu0 0.0
    %3287 = vmatprep.subr.mxu0 0.0
    %3288 = vmatpush1.msra.mxu0 0.0
    %3289 = vmatprep.subr.mxu0 0.0
    %3290 = vmatpush1.msra.mxu0 0.0
    %3291 = vmatprep.subr.mxu0 0.0
    %3292 = vmatpush1.msra.mxu0 0.0
    %3293 = vmatprep.subr.mxu0 0.0
    %3294 = vmatpush1.msra.mxu0 0.0
    %3295 = vmatprep.subr.mxu0 0.0
    %3296 = vmatpush1.msra.mxu0 0.0
    %3297 = vmatprep.subr.mxu0 0.0
    %3298 = vmatpush1.msra.mxu0 0.0
    %3299 = vmatprep.subr.mxu0 0.0
    %3300 = vmatpush1.msra.mxu0 0.0
    %3301 = vmatprep.subr.mxu0 0.0
    %3302 = vmatpush1.msra.mxu0 0.0
    %3303 = vmatprep.subr.mxu0 0.0
    %3304 = vmatpush1.msra.mxu0 0.0
    %3305 = vmatprep.subr.mxu0 0.0
    %3306 = vmatpush1.msra.mxu0 0.0
    %3307 = vmatprep.subr.mxu0 0.0
    %3308 = vmatpush1.msra.mxu0 0.0
    %3309 = vmatprep.subr.mxu0 0.0
    %3310 = vmatpush1.msra.mxu0 0.0
    %3311 = vmatprep.subr.mxu0 0.0
    %3312 = vmatpush1.msra.mxu0 0.0
    %3313 = vmatprep.subr.mxu0 0.0
    %3314 = vmatpush1.msra.mxu0 0.0
    %3315 = vmatprep.subr.mxu0 0.0
    %3316 = vmatpush1.msra.mxu0 0.0
    %3317 = vmatprep.subr.mxu0 0.0
    %3318 = vmatpush1.msra.mxu0 0.0
    %3319 = vmatprep.subr.mxu0 0.0
    %3320 = vmatpush1.msra.mxu0 0.0
    %3321 = vmatprep.subr.mxu0 0.0
    %3322 = vmatpush1.msra.mxu0 0.0
    %3323 = vmatprep.mubr.f32.mxu0 0.0
    %3324 = vmatmul.mubr.f32.gmra.mrb[0].mxu0 %v3185
    %v3325 = vpop.f32.mrb[0].mxu0
    %v3326 = vadd.f32 0.0, %v3325
    %v3327 = vpop.f32.mrb[0].mxu0
    %3328 = vdwg.mxu0
    %v3329 = vadd.f32 %v258, %v3326
    %v3330 = vxor.u32 %v3329, 2147483648
    %v3331 = vmul.f32 %v3330, 1.442695
    %v3332 = vpow.pop %v3331
    %v3333 = vadd.f32 %v3332, 1.0
    %v3334 = vrcp.pop %v3333
    %v3335 = vmul.f32 1.0, %v3334
    %v3336 = vtanh.pop %v3329
    %v3337 = vmul.f32 %v3335, %v2606
    %3339 = vrot.lane.b32.xlu0 %v3336, 64
    %v3340 = vpop.permute.xlu0 %3339
    %v3342 = vmul.f32 %v3335, %v3340
    %3344 = vrot.lane.b32.xlu0 %v3342, 32
    %v3345 = vpop.permute.xlu0 %3344
    %v3347 = vadd.f32 %v3337, %v3345
    %v3348 = vtanh.pop %v3347
    %3350 = vrot.lane.b32.xlu0 %v3348, 64
    %v3351 = vpop.permute.xlu0 %3350
    %v3353 = vmul.f32 %v3335, %v3351
    %v3355 = vcombine.high %v3353, %v3353
    %v3357 = vunpack.c.l.s4 1966171168
    %v3358 = vunpack.c.0.s8 %v3357
    %v3359 = vlaneseq
    %v3360 = vshrl.u32 %v3359, 7
    %v3361 = vsub.s32 %v3358, %v3360
    %v3362 = vrot.slane %v3353, %v3361
    %v3364 = vunpack.c.l.s4 1966171168
    %v3365 = vunpack.c.0.s8 %v3364
    %v3366 = vlaneseq
    %v3367 = vshrl.u32 %v3366, 7
    %v3368 = vsub.s32 %v3365, %v3367
    %v3369 = vrot.slane %v3355, %v3368
    %v3370 = vcombine.high %v3362, %v3362
    %v3371 = vcombine.high %v3369, %v3369
    %v3373 = vunpack.c.l.s4 1966171168
    %v3374 = vunpack.c.0.s8 %v3373
    %v3375 = vlaneseq
    %v3376 = vshrl.u32 %v3375, 7
    %v3377 = vsub.s32 %v3374, %v3376
    %v3378 = vrot.slane %v3362, %v3377
    %v3380 = vunpack.c.l.s4 1966171168
    %v3381 = vunpack.c.0.s8 %v3380
    %v3382 = vlaneseq
    %v3383 = vshrl.u32 %v3382, 7
    %v3384 = vsub.s32 %v3381, %v3383
    %v3385 = vrot.slane %v3369, %v3384
    %v3387 = vunpack.c.l.s4 1966171168
    %v3388 = vunpack.c.0.s8 %v3387
    %v3389 = vlaneseq
    %v3390 = vshrl.u32 %v3389, 7
    %v3391 = vsub.s32 %v3388, %v3390
    %v3392 = vrot.slane %v3370, %v3391
    %v3394 = vunpack.c.l.s4 1966171168
    %v3395 = vunpack.c.0.s8 %v3394
    %v3396 = vlaneseq
    %v3397 = vshrl.u32 %v3396, 7
    %v3398 = vsub.s32 %v3395, %v3397
    %v3399 = vrot.slane %v3371, %v3398
    %v3400 = vcombine.high %v3378, %v3378
    %v3401 = vcombine.high %v3385, %v3385
    %v3402 = vcombine.high %v3392, %v3392
    %v3403 = vcombine.high %v3399, %v3399
    %v3404 = vlaneseq
    %v3405 = vshrl.u32 %v3404, 7
    %v3406 = vsub.s32 0, %v3405
    %v3407 = vrot.slane %v3378, %v3406
    %v3408 = vlaneseq
    %v3409 = vshrl.u32 %v3408, 7
    %v3410 = vsub.s32 0, %v3409
    %v3411 = vrot.slane %v3392, %v3410
    %v3412 = vlaneseq
    %v3413 = vshrl.u32 %v3412, 7
    %v3414 = vsub.s32 0, %v3413
    %v3415 = vrot.slane %v3400, %v3414
    %v3416 = vlaneseq
    %v3417 = vshrl.u32 %v3416, 7
    %v3418 = vsub.s32 0, %v3417
    %v3419 = vrot.slane %v3402, %v3418
    %v3420 = vlaneseq
    %v3421 = vshrl.u32 %v3420, 7
    %v3422 = vsub.s32 0, %v3421
    %v3423 = vrot.slane %v3385, %v3422
    %v3424 = vlaneseq
    %v3425 = vshrl.u32 %v3424, 7
    %v3426 = vsub.s32 0, %v3425
    %v3427 = vrot.slane %v3399, %v3426
    %v3428 = vlaneseq
    %v3429 = vshrl.u32 %v3428, 7
    %v3430 = vsub.s32 0, %v3429
    %v3431 = vrot.slane %v3401, %v3430
    %v3432 = vlaneseq
    %v3433 = vshrl.u32 %v3432, 7
    %v3434 = vsub.s32 0, %v3433
    %v3435 = vrot.slane %v3403, %v3434
    %3436 = vrot.lane.b32.xlu0 %v3407, 32
    %v3437 = vpop.permute.xlu0 %3436
    %3438 = vrot.lane.b32.xlu0 %v3411, 32
    %v3439 = vpop.permute.xlu0 %3438
    %3440 = vrot.lane.b32.xlu0 %v3415, 32
    %v3441 = vpop.permute.xlu0 %3440
    %3442 = vrot.lane.b32.xlu0 %v3419, 32
    %v3443 = vpop.permute.xlu0 %3442
    %3444 = vrot.lane.b32.xlu0 %v3423, 32
    %v3445 = vpop.permute.xlu0 %3444
    %3446 = vrot.lane.b32.xlu0 %v3427, 32
    %v3447 = vpop.permute.xlu0 %3446
    %3448 = vrot.lane.b32.xlu0 %v3431, 32
    %v3449 = vpop.permute.xlu0 %3448
    %3450 = vrot.lane.b32.xlu0 %v3435, 32
    %v3451 = vpop.permute.xlu0 %3450
    %v3460 = vmul.f32 %v107, %v3437
    %v3461 = vmul.f32 %v108, %v3439
    %v3462 = vmul.f32 %v109, %v3441
    %v3463 = vmul.f32 %v110, %v3443
    %v3464 = vmul.f32 %v111, %v3445
    %v3465 = vmul.f32 %v112, %v3447
    %v3466 = vmul.f32 %v113, %v3449
    %v3467 = vmul.f32 %v114, %v3451
    %v3468 = vsel %vm146, %v3460, 0.0
    %3469 = vadd.xlane.f32.xlu0 %v3468
    %v3470 = vpop.xlane.xlu0 %3469
    %v3471 = vsel %vm146, %v3461, 0.0
    %3472 = vadd.xlane.f32.xlu0 %v3471
    %v3473 = vpop.xlane.xlu0 %3472
    %v3474 = vsel %vm146, %v3462, 0.0
    %3475 = vadd.xlane.f32.xlu0 %v3474
    %v3476 = vpop.xlane.xlu0 %3475
    %v3477 = vsel %vm146, %v3463, 0.0
    %3478 = vadd.xlane.f32.xlu0 %v3477
    %v3479 = vpop.xlane.xlu0 %3478
    %v3480 = vsel %vm146, %v3464, 0.0
    %3481 = vadd.xlane.f32.xlu0 %v3480
    %v3482 = vpop.xlane.xlu0 %3481
    %v3483 = vsel %vm146, %v3465, 0.0
    %3484 = vadd.xlane.f32.xlu0 %v3483
    %v3485 = vpop.xlane.xlu0 %3484
    %v3486 = vsel %vm146, %v3466, 0.0
    %3487 = vadd.xlane.f32.xlu0 %v3486
    %v3488 = vpop.xlane.xlu0 %3487
    %v3489 = vsel %vm146, %v3467, 0.0
    %3490 = vadd.xlane.f32.xlu0 %v3489
    %v3491 = vpop.xlane.xlu0 %3490
    %v3500 = vlaneseq
    %v3501 = vshrl.u32 %v3500, 7
    %v3502 = vsub.s32 %v527, %v3501
    %v3503 = vrot.slane %v3470, %v3502
    %v3504 = vlaneseq
    %v3505 = vshrl.u32 %v3504, 7
    %v3506 = vsub.s32 %v527, %v3505
    %v3507 = vrot.slane %v3473, %v3506
    %v3508 = vlaneseq
    %v3509 = vshrl.u32 %v3508, 7
    %v3510 = vsub.s32 %v527, %v3509
    %v3511 = vrot.slane %v3476, %v3510
    %v3512 = vlaneseq
    %v3513 = vshrl.u32 %v3512, 7
    %v3514 = vsub.s32 %v527, %v3513
    %v3515 = vrot.slane %v3479, %v3514
    %v3516 = vlaneseq
    %v3517 = vshrl.u32 %v3516, 7
    %v3518 = vsub.s32 %v527, %v3517
    %v3519 = vrot.slane %v3482, %v3518
    %v3520 = vlaneseq
    %v3521 = vshrl.u32 %v3520, 7
    %v3522 = vsub.s32 %v527, %v3521
    %v3523 = vrot.slane %v3485, %v3522
    %v3524 = vlaneseq
    %v3525 = vshrl.u32 %v3524, 7
    %v3526 = vsub.s32 %v527, %v3525
    %v3527 = vrot.slane %v3488, %v3526
    %v3528 = vlaneseq
    %v3529 = vshrl.u32 %v3528, 7
    %v3530 = vsub.s32 %v527, %v3529
    %v3531 = vrot.slane %v3491, %v3530
    %v3532 = vsel %vm560, %v3507, %v3503
    %v3533 = vsel %vm562, %v3511, %v3532
    %v3534 = vsel %vm564, %v3515, %v3533
    %v3535 = vsel %vm566, %v3519, %v3534
    %v3536 = vsel %vm568, %v3523, %v3535
    %v3537 = vsel %vm570, %v3527, %v3536
    %v3538 = vsel %vm572, %v3531, %v3537
    %v3540 = vsel %vm575, %v3538, -inf
    %3541 = vmax.xlane.f32.xlu0 %v3540
    %v3542 = vpop.xlane.xlu0 %3541
    %v3544 = vlaneseq
    %v3545 = vshrl.u32 %v3544, 7
    %v3546 = vsub.s32 0, %v3545
    %v3547 = vrot.slane %v3542, %v3546
    %v3548 = vlaneseq
    %v3549 = vshrl.u32 %v3548, 7
    %v3550 = vsub.s32 1, %v3549
    %v3551 = vrot.slane %v3542, %v3550
    %v3552 = vlaneseq
    %v3553 = vshrl.u32 %v3552, 7
    %v3554 = vsub.s32 2, %v3553
    %v3555 = vrot.slane %v3542, %v3554
    %v3556 = vlaneseq
    %v3557 = vshrl.u32 %v3556, 7
    %v3558 = vsub.s32 3, %v3557
    %v3559 = vrot.slane %v3542, %v3558
    %v3560 = vlaneseq
    %v3561 = vshrl.u32 %v3560, 7
    %v3562 = vsub.s32 4, %v3561
    %v3563 = vrot.slane %v3542, %v3562
    %v3564 = vlaneseq
    %v3565 = vshrl.u32 %v3564, 7
    %v3566 = vsub.s32 5, %v3565
    %v3567 = vrot.slane %v3542, %v3566
    %v3568 = vlaneseq
    %v3569 = vshrl.u32 %v3568, 7
    %v3570 = vsub.s32 6, %v3569
    %v3571 = vrot.slane %v3542, %v3570
    %v3572 = vlaneseq
    %v3573 = vshrl.u32 %v3572, 7
    %v3574 = vsub.s32 7, %v3573
    %v3575 = vrot.slane %v3542, %v3574
    %v3584 = vsub.f32 %v3470, %v3547
    %v3585 = vsub.f32 %v3473, %v3551
    %v3586 = vsub.f32 %v3476, %v3555
    %v3587 = vsub.f32 %v3479, %v3559
    %v3588 = vsub.f32 %v3482, %v3563
    %v3589 = vsub.f32 %v3485, %v3567
    %v3590 = vsub.f32 %v3488, %v3571
    %v3591 = vsub.f32 %v3491, %v3575
    %v3592 = vmul.f32 %v3584, 1.442695
    %v3593 = vpow.pop %v3592
    %v3594 = vmul.f32 %v3585, 1.442695
    %v3595 = vpow.pop %v3594
    %v3596 = vmul.f32 %v3586, 1.442695
    %v3597 = vpow.pop %v3596
    %v3598 = vmul.f32 %v3587, 1.442695
    %v3599 = vpow.pop %v3598
    %v3600 = vmul.f32 %v3588, 1.442695
    %v3601 = vpow.pop %v3600
    %v3602 = vmul.f32 %v3589, 1.442695
    %v3603 = vpow.pop %v3602
    %v3604 = vmul.f32 %v3590, 1.442695
    %v3605 = vpow.pop %v3604
    %v3606 = vmul.f32 %v3591, 1.442695
    %v3607 = vpow.pop %v3606
    %3616 = vset.pattern.permute.xlu0 0
    %3617 = vperm.xlu0 %3616, %v3593
    %v3618 = vpop.permute.xlu0 %3617
    %3619 = vset.pattern.permute.xlu0 0
    %3620 = vperm.xlu0 %3619, %v3595
    %v3621 = vpop.permute.xlu0 %3620
    %3622 = vset.pattern.permute.xlu0 0
    %3623 = vperm.xlu0 %3622, %v3597
    %v3624 = vpop.permute.xlu0 %3623
    %3625 = vset.pattern.permute.xlu0 0
    %3626 = vperm.xlu0 %3625, %v3599
    %v3627 = vpop.permute.xlu0 %3626
    %3628 = vset.pattern.permute.xlu0 0
    %3629 = vperm.xlu0 %3628, %v3601
    %v3630 = vpop.permute.xlu0 %3629
    %3631 = vset.pattern.permute.xlu0 0
    %3632 = vperm.xlu0 %3631, %v3603
    %v3633 = vpop.permute.xlu0 %3632
    %3634 = vset.pattern.permute.xlu0 0
    %3635 = vperm.xlu0 %3634, %v3605
    %v3636 = vpop.permute.xlu0 %3635
    %3637 = vset.pattern.permute.xlu0 0
    %3638 = vperm.xlu0 %3637, %v3607
    %v3639 = vpop.permute.xlu0 %3638
    %v3640 = vlaneseq
    %v3641 = vshrl.u32 %v3640, 7
    %v3642 = vsub.s32 %v527, %v3641
    %v3643 = vrot.slane %v3618, %v3642
    %v3644 = vlaneseq
    %v3645 = vshrl.u32 %v3644, 7
    %v3646 = vsub.s32 %v527, %v3645
    %v3647 = vrot.slane %v3621, %v3646
    %v3648 = vlaneseq
    %v3649 = vshrl.u32 %v3648, 7
    %v3650 = vsub.s32 %v527, %v3649
    %v3651 = vrot.slane %v3624, %v3650
    %v3652 = vlaneseq
    %v3653 = vshrl.u32 %v3652, 7
    %v3654 = vsub.s32 %v527, %v3653
    %v3655 = vrot.slane %v3627, %v3654
    %v3656 = vlaneseq
    %v3657 = vshrl.u32 %v3656, 7
    %v3658 = vsub.s32 %v527, %v3657
    %v3659 = vrot.slane %v3630, %v3658
    %v3660 = vlaneseq
    %v3661 = vshrl.u32 %v3660, 7
    %v3662 = vsub.s32 %v527, %v3661
    %v3663 = vrot.slane %v3633, %v3662
    %v3664 = vlaneseq
    %v3665 = vshrl.u32 %v3664, 7
    %v3666 = vsub.s32 %v527, %v3665
    %v3667 = vrot.slane %v3636, %v3666
    %v3668 = vlaneseq
    %v3669 = vshrl.u32 %v3668, 7
    %v3670 = vsub.s32 %v527, %v3669
    %v3671 = vrot.slane %v3639, %v3670
    %v3672 = vsel %vm560, %v3647, %v3643
    %v3673 = vsel %vm562, %v3651, %v3672
    %v3674 = vsel %vm564, %v3655, %v3673
    %v3675 = vsel %vm566, %v3659, %v3674
    %v3676 = vsel %vm568, %v3663, %v3675
    %v3677 = vsel %vm570, %v3667, %v3676
    %v3678 = vsel %vm572, %v3671, %v3677
    %v3680 = vsel %vm575, %v3678, 0.0
    %3681 = vadd.xlane.f32.xlu0 %v3680
    %v3682 = vpop.xlane.xlu0 %3681
    %v3683 = vrcp.pop %v3682
    %v3685 = vlaneseq
    %v3686 = vshrl.u32 %v3685, 7
    %v3687 = vsub.s32 0, %v3686
    %v3688 = vrot.slane %v3683, %v3687
    %v3689 = vlaneseq
    %v3690 = vshrl.u32 %v3689, 7
    %v3691 = vsub.s32 1, %v3690
    %v3692 = vrot.slane %v3683, %v3691
    %v3693 = vlaneseq
    %v3694 = vshrl.u32 %v3693, 7
    %v3695 = vsub.s32 2, %v3694
    %v3696 = vrot.slane %v3683, %v3695
    %v3697 = vlaneseq
    %v3698 = vshrl.u32 %v3697, 7
    %v3699 = vsub.s32 3, %v3698
    %v3700 = vrot.slane %v3683, %v3699
    %v3701 = vlaneseq
    %v3702 = vshrl.u32 %v3701, 7
    %v3703 = vsub.s32 4, %v3702
    %v3704 = vrot.slane %v3683, %v3703
    %v3705 = vlaneseq
    %v3706 = vshrl.u32 %v3705, 7
    %v3707 = vsub.s32 5, %v3706
    %v3708 = vrot.slane %v3683, %v3707
    %v3709 = vlaneseq
    %v3710 = vshrl.u32 %v3709, 7
    %v3711 = vsub.s32 6, %v3710
    %v3712 = vrot.slane %v3683, %v3711
    %v3713 = vlaneseq
    %v3714 = vshrl.u32 %v3713, 7
    %v3715 = vsub.s32 7, %v3714
    %v3716 = vrot.slane %v3683, %v3715
    %v3725 = vmul.f32 %v3593, %v3688
    %v3726 = vmul.f32 %v3595, %v3692
    %v3727 = vmul.f32 %v3597, %v3696
    %v3728 = vmul.f32 %v3599, %v3700
    %v3729 = vmul.f32 %v3601, %v3704
    %v3730 = vmul.f32 %v3603, %v3708
    %v3731 = vmul.f32 %v3605, %v3712
    %v3732 = vmul.f32 %v3607, %v3716
    %3734 = vset.pattern.permute.xlu0 0
    %3735 = vperm.xlu0 %3734, %v3725
    %v3736 = vpop.permute.xlu0 %3735
    %3739 = vset.pattern.permute.xlu0 0
    %3740 = vperm.xlu0 %3739, %v3726
    %v3741 = vpop.permute.xlu0 %3740
    %3744 = vset.pattern.permute.xlu0 0
    %3745 = vperm.xlu0 %3744, %v3727
    %v3746 = vpop.permute.xlu0 %3745
    %3749 = vset.pattern.permute.xlu0 0
    %3750 = vperm.xlu0 %3749, %v3728
    %v3751 = vpop.permute.xlu0 %3750
    %3754 = vset.pattern.permute.xlu0 0
    %3755 = vperm.xlu0 %3754, %v3729
    %v3756 = vpop.permute.xlu0 %3755
    %3759 = vset.pattern.permute.xlu0 0
    %3760 = vperm.xlu0 %3759, %v3730
    %v3761 = vpop.permute.xlu0 %3760
    %3764 = vset.pattern.permute.xlu0 0
    %3765 = vperm.xlu0 %3764, %v3731
    %v3766 = vpop.permute.xlu0 %3765
    %3769 = vset.pattern.permute.xlu0 0
    %3770 = vperm.xlu0 %3769, %v3732
    %v3771 = vpop.permute.xlu0 %3770
    %v3773 = vmul.f32 %v3736, %v107
    %v3774 = vmul.f32 %v3741, %v108
    %v3775 = vmul.f32 %v3746, %v109
    %v3776 = vmul.f32 %v3751, %v110
    %v3777 = vmul.f32 %v3756, %v111
    %v3778 = vmul.f32 %v3761, %v112
    %v3779 = vmul.f32 %v3766, %v113
    %v3780 = vmul.f32 %v3771, %v114
    %v3781 = vsel %vm146, %v3773, 0.0
    %v3782 = vrot.slane %v3781, 4
    %v3783 = vadd.f32 %v3781, %v3782
    %v3784 = vrot.slane %v3783, 2
    %v3785 = vadd.f32 %v3783, %v3784
    %v3786 = vrot.slane %v3785, 1
    %v3787 = vadd.f32 %v3785, %v3786
    %v3788 = vsel %vm146, %v3774, 0.0
    %v3789 = vrot.slane %v3788, 4
    %v3790 = vadd.f32 %v3788, %v3789
    %v3791 = vrot.slane %v3790, 2
    %v3792 = vadd.f32 %v3790, %v3791
    %v3793 = vrot.slane %v3792, 1
    %v3794 = vadd.f32 %v3792, %v3793
    %v3795 = vsel %vm146, %v3775, 0.0
    %v3796 = vrot.slane %v3795, 4
    %v3797 = vadd.f32 %v3795, %v3796
    %v3798 = vrot.slane %v3797, 2
    %v3799 = vadd.f32 %v3797, %v3798
    %v3800 = vrot.slane %v3799, 1
    %v3801 = vadd.f32 %v3799, %v3800
    %v3802 = vsel %vm146, %v3776, 0.0
    %v3803 = vrot.slane %v3802, 4
    %v3804 = vadd.f32 %v3802, %v3803
    %v3805 = vrot.slane %v3804, 2
    %v3806 = vadd.f32 %v3804, %v3805
    %v3807 = vrot.slane %v3806, 1
    %v3808 = vadd.f32 %v3806, %v3807
    %v3809 = vsel %vm146, %v3777, 0.0
    %v3810 = vrot.slane %v3809, 4
    %v3811 = vadd.f32 %v3809, %v3810
    %v3812 = vrot.slane %v3811, 2
    %v3813 = vadd.f32 %v3811, %v3812
    %v3814 = vrot.slane %v3813, 1
    %v3815 = vadd.f32 %v3813, %v3814
    %v3816 = vsel %vm146, %v3778, 0.0
    %v3817 = vrot.slane %v3816, 4
    %v3818 = vadd.f32 %v3816, %v3817
    %v3819 = vrot.slane %v3818, 2
    %v3820 = vadd.f32 %v3818, %v3819
    %v3821 = vrot.slane %v3820, 1
    %v3822 = vadd.f32 %v3820, %v3821
    %v3823 = vsel %vm146, %v3779, 0.0
    %v3824 = vrot.slane %v3823, 4
    %v3825 = vadd.f32 %v3823, %v3824
    %v3826 = vrot.slane %v3825, 2
    %v3827 = vadd.f32 %v3825, %v3826
    %v3828 = vrot.slane %v3827, 1
    %v3829 = vadd.f32 %v3827, %v3828
    %v3830 = vsel %vm146, %v3780, 0.0
    %v3831 = vrot.slane %v3830, 4
    %v3832 = vadd.f32 %v3830, %v3831
    %v3833 = vrot.slane %v3832, 2
    %v3834 = vadd.f32 %v3832, %v3833
    %v3835 = vrot.slane %v3834, 1
    %v3836 = vadd.f32 %v3834, %v3835
    %v3845 = vsel %vm560, %v3794, %v3787
    %v3846 = vsel %vm562, %v3801, %v3845
    %v3847 = vsel %vm564, %v3808, %v3846
    %v3848 = vsel %vm566, %v3815, %v3847
    %v3849 = vsel %vm568, %v3822, %v3848
    %v3850 = vsel %vm570, %v3829, %v3849
    %v3851 = vsel %vm572, %v3836, %v3850
    %v3852 = vsel %vm146, %v3851, 0
    %3854 = vmatprep.subr.mxu0 0.0
    %3855 = vmatpush1.msra.mxu0 %v123
    %3856 = vmatprep.subr.mxu0 0.0
    %3857 = vmatpush1.msra.mxu0 %v124
    %3858 = vmatprep.subr.mxu0 0.0
    %3859 = vmatpush1.msra.mxu0 %v125
    %3860 = vmatprep.subr.mxu0 0.0
    %3861 = vmatpush1.msra.mxu0 %v126
    %3862 = vmatprep.subr.mxu0 0.0
    %3863 = vmatpush1.msra.mxu0 0.0
    %3864 = vmatprep.subr.mxu0 0.0
    %3865 = vmatpush1.msra.mxu0 0.0
    %3866 = vmatprep.subr.mxu0 0.0
    %3867 = vmatpush1.msra.mxu0 0.0
    %3868 = vmatprep.subr.mxu0 0.0
    %3869 = vmatpush1.msra.mxu0 0.0
    %3870 = vmatprep.subr.mxu0 0.0
    %3871 = vmatpush1.msra.mxu0 0.0
    %3872 = vmatprep.subr.mxu0 0.0
    %3873 = vmatpush1.msra.mxu0 0.0
    %3874 = vmatprep.subr.mxu0 0.0
    %3875 = vmatpush1.msra.mxu0 0.0
    %3876 = vmatprep.subr.mxu0 0.0
    %3877 = vmatpush1.msra.mxu0 0.0
    %3878 = vmatprep.subr.mxu0 0.0
    %3879 = vmatpush1.msra.mxu0 0.0
    %3880 = vmatprep.subr.mxu0 0.0
    %3881 = vmatpush1.msra.mxu0 0.0
    %3882 = vmatprep.subr.mxu0 0.0
    %3883 = vmatpush1.msra.mxu0 0.0
    %3884 = vmatprep.subr.mxu0 0.0
    %3885 = vmatpush1.msra.mxu0 0.0
    %3886 = vmatprep.subr.mxu0 0.0
    %3887 = vmatpush1.msra.mxu0 0.0
    %3888 = vmatprep.subr.mxu0 0.0
    %3889 = vmatpush1.msra.mxu0 0.0
    %3890 = vmatprep.subr.mxu0 0.0
    %3891 = vmatpush1.msra.mxu0 0.0
    %3892 = vmatprep.subr.mxu0 0.0
    %3893 = vmatpush1.msra.mxu0 0.0
    %3894 = vmatprep.subr.mxu0 0.0
    %3895 = vmatpush1.msra.mxu0 0.0
    %3896 = vmatprep.subr.mxu0 0.0
    %3897 = vmatpush1.msra.mxu0 0.0
    %3898 = vmatprep.subr.mxu0 0.0
    %3899 = vmatpush1.msra.mxu0 0.0
    %3900 = vmatprep.subr.mxu0 0.0
    %3901 = vmatpush1.msra.mxu0 0.0
    %3902 = vmatprep.subr.mxu0 0.0
    %3903 = vmatpush1.msra.mxu0 0.0
    %3904 = vmatprep.subr.mxu0 0.0
    %3905 = vmatpush1.msra.mxu0 0.0
    %3906 = vmatprep.subr.mxu0 0.0
    %3907 = vmatpush1.msra.mxu0 0.0
    %3908 = vmatprep.subr.mxu0 0.0
    %3909 = vmatpush1.msra.mxu0 0.0
    %3910 = vmatprep.subr.mxu0 0.0
    %3911 = vmatpush1.msra.mxu0 0.0
    %3912 = vmatprep.subr.mxu0 0.0
    %3913 = vmatpush1.msra.mxu0 0.0
    %3914 = vmatprep.subr.mxu0 0.0
    %3915 = vmatpush1.msra.mxu0 0.0
    %3916 = vmatprep.subr.mxu0 0.0
    %3917 = vmatpush1.msra.mxu0 0.0
    %3918 = vmatprep.mubr.f32.mxu0 0.0
    %3919 = vmatmul.mubr.f32.gmra.mrb[0].mxu0 %v3852
    %v3920 = vpop.f32.mrb[0].mxu0
    %v3921 = vadd.f32 0.0, %v3920
    %v3922 = vpop.f32.mrb[0].mxu0
    %3923 = vdwg.mxu0
    %3924 = vrot.lane.b32.xlu0 %v3353, 32
    %v3925 = vpop.permute.xlu0 %3924
    %v3926 = vsel %vm146, %v3925, 0
    %3928 = vmatprep.subr.mxu0 0.0
    %3929 = vmatpush1.msra.mxu0 %v119
    %3930 = vmatprep.subr.mxu0 0.0
    %3931 = vmatpush1.msra.mxu0 %v120
    %3932 = vmatprep.subr.mxu0 0.0
    %3933 = vmatpush1.msra.mxu0 %v121
    %3934 = vmatprep.subr.mxu0 0.0
    %3935 = vmatpush1.msra.mxu0 %v122
    %3936 = vmatprep.subr.mxu0 0.0
    %3937 = vmatpush1.msra.mxu0 0.0
    %3938 = vmatprep.subr.mxu0 0.0
    %3939 = vmatpush1.msra.mxu0 0.0
    %3940 = vmatprep.subr.mxu0 0.0
    %3941 = vmatpush1.msra.mxu0 0.0
    %3942 = vmatprep.subr.mxu0 0.0
    %3943 = vmatpush1.msra.mxu0 0.0
    %3944 = vmatprep.subr.mxu0 0.0
    %3945 = vmatpush1.msra.mxu0 0.0
    %3946 = vmatprep.subr.mxu0 0.0
    %3947 = vmatpush1.msra.mxu0 0.0
    %3948 = vmatprep.subr.mxu0 0.0
    %3949 = vmatpush1.msra.mxu0 0.0
    %3950 = vmatprep.subr.mxu0 0.0
    %3951 = vmatpush1.msra.mxu0 0.0
    %3952 = vmatprep.subr.mxu0 0.0
    %3953 = vmatpush1.msra.mxu0 0.0
    %3954 = vmatprep.subr.mxu0 0.0
    %3955 = vmatpush1.msra.mxu0 0.0
    %3956 = vmatprep.subr.mxu0 0.0
    %3957 = vmatpush1.msra.mxu0 0.0
    %3958 = vmatprep.subr.mxu0 0.0
    %3959 = vmatpush1.msra.mxu0 0.0
    %3960 = vmatprep.subr.mxu0 0.0
    %3961 = vmatpush1.msra.mxu0 0.0
    %3962 = vmatprep.subr.mxu0 0.0
    %3963 = vmatpush1.msra.mxu0 0.0
    %3964 = vmatprep.subr.mxu0 0.0
    %3965 = vmatpush1.msra.mxu0 0.0
    %3966 = vmatprep.subr.mxu0 0.0
    %3967 = vmatpush1.msra.mxu0 0.0
    %3968 = vmatprep.subr.mxu0 0.0
    %3969 = vmatpush1.msra.mxu0 0.0
    %3970 = vmatprep.subr.mxu0 0.0
    %3971 = vmatpush1.msra.mxu0 0.0
    %3972 = vmatprep.subr.mxu0 0.0
    %3973 = vmatpush1.msra.mxu0 0.0
    %3974 = vmatprep.subr.mxu0 0.0
    %3975 = vmatpush1.msra.mxu0 0.0
    %3976 = vmatprep.subr.mxu0 0.0
    %3977 = vmatpush1.msra.mxu0 0.0
    %3978 = vmatprep.subr.mxu0 0.0
    %3979 = vmatpush1.msra.mxu0 0.0
    %3980 = vmatprep.subr.mxu0 0.0
    %3981 = vmatpush1.msra.mxu0 0.0
    %3982 = vmatprep.subr.mxu0 0.0
    %3983 = vmatpush1.msra.mxu0 0.0
    %3984 = vmatprep.subr.mxu0 0.0
    %3985 = vmatpush1.msra.mxu0 0.0
    %3986 = vmatprep.subr.mxu0 0.0
    %3987 = vmatpush1.msra.mxu0 0.0
    %3988 = vmatprep.subr.mxu0 0.0
    %3989 = vmatpush1.msra.mxu0 0.0
    %3990 = vmatprep.subr.mxu0 0.0
    %3991 = vmatpush1.msra.mxu0 0.0
    %3992 = vmatprep.mubr.f32.mxu0 0.0
    %3993 = vmatmul.mubr.f32.gmra.mrb[0].mxu0 %v3926
    %v3994 = vpop.f32.mrb[0].mxu0
    %v3995 = vadd.f32 %v3921, %v3994
    %v3996 = vpop.f32.mrb[0].mxu0
    %3997 = vdwg.mxu0
    %v3998 = vtanh.pop %v3995
    %3999 = vst.msk [vmem:[#allocation2 + $0x20] sm:$0xff] %vm146, %v3998
    %4000 = vmatprep.subr.mxu0 0.0
    %4001 = vmatpush1.msra.mxu0 %v115
    %4002 = vmatprep.subr.mxu0 0.0
    %4003 = vmatpush1.msra.mxu0 %v116
    %4004 = vmatprep.subr.mxu0 0.0
    %4005 = vmatpush1.msra.mxu0 %v117
    %4006 = vmatprep.subr.mxu0 0.0
    %4007 = vmatpush1.msra.mxu0 %v118
    %4008 = vmatprep.subr.mxu0 0.0
    %4009 = vmatpush1.msra.mxu0 0.0
    %4010 = vmatprep.subr.mxu0 0.0
    %4011 = vmatpush1.msra.mxu0 0.0
    %4012 = vmatprep.subr.mxu0 0.0
    %4013 = vmatpush1.msra.mxu0 0.0
    %4014 = vmatprep.subr.mxu0 0.0
    %4015 = vmatpush1.msra.mxu0 0.0
    %4016 = vmatprep.subr.mxu0 0.0
    %4017 = vmatpush1.msra.mxu0 0.0
    %4018 = vmatprep.subr.mxu0 0.0
    %4019 = vmatpush1.msra.mxu0 0.0
    %4020 = vmatprep.subr.mxu0 0.0
    %4021 = vmatpush1.msra.mxu0 0.0
    %4022 = vmatprep.subr.mxu0 0.0
    %4023 = vmatpush1.msra.mxu0 0.0
    %4024 = vmatprep.subr.mxu0 0.0
    %4025 = vmatpush1.msra.mxu0 0.0
    %4026 = vmatprep.subr.mxu0 0.0
    %4027 = vmatpush1.msra.mxu0 0.0
    %4028 = vmatprep.subr.mxu0 0.0
    %4029 = vmatpush1.msra.mxu0 0.0
    %4030 = vmatprep.subr.mxu0 0.0
    %4031 = vmatpush1.msra.mxu0 0.0
    %4032 = vmatprep.subr.mxu0 0.0
    %4033 = vmatpush1.msra.mxu0 0.0
    %4034 = vmatprep.subr.mxu0 0.0
    %4035 = vmatpush1.msra.mxu0 0.0
    %4036 = vmatprep.subr.mxu0 0.0
    %4037 = vmatpush1.msra.mxu0 0.0
    %4038 = vmatprep.subr.mxu0 0.0
    %4039 = vmatpush1.msra.mxu0 0.0
    %4040 = vmatprep.subr.mxu0 0.0
    %4041 = vmatpush1.msra.mxu0 0.0
    %4042 = vmatprep.subr.mxu0 0.0
    %4043 = vmatpush1.msra.mxu0 0.0
    %4044 = vmatprep.subr.mxu0 0.0
    %4045 = vmatpush1.msra.mxu0 0.0
    %4046 = vmatprep.subr.mxu0 0.0
    %4047 = vmatpush1.msra.mxu0 0.0
    %4048 = vmatprep.subr.mxu0 0.0
    %4049 = vmatpush1.msra.mxu0 0.0
    %4050 = vmatprep.subr.mxu0 0.0
    %4051 = vmatpush1.msra.mxu0 0.0
    %4052 = vmatprep.subr.mxu0 0.0
    %4053 = vmatpush1.msra.mxu0 0.0
    %4054 = vmatprep.subr.mxu0 0.0
    %4055 = vmatpush1.msra.mxu0 0.0
    %4056 = vmatprep.subr.mxu0 0.0
    %4057 = vmatpush1.msra.mxu0 0.0
    %4058 = vmatprep.subr.mxu0 0.0
    %4059 = vmatpush1.msra.mxu0 0.0
    %4060 = vmatprep.subr.mxu0 0.0
    %4061 = vmatpush1.msra.mxu0 0.0
    %4062 = vmatprep.subr.mxu0 0.0
    %4063 = vmatpush1.msra.mxu0 0.0
    %4064 = vmatprep.mubr.f32.mxu0 0.0
    %4065 = vmatmul.mubr.f32.gmra.mrb[0].mxu0 %v3926
    %v4066 = vpop.f32.mrb[0].mxu0
    %v4067 = vadd.f32 0.0, %v4066
    %v4068 = vpop.f32.mrb[0].mxu0
    %4069 = vdwg.mxu0
    %v4070 = vadd.f32 %v263, %v4067
    %v4071 = vxor.u32 %v4070, 2147483648
    %v4072 = vmul.f32 %v4071, 1.442695
    %v4073 = vpow.pop %v4072
    %v4074 = vadd.f32 %v4073, 1.0
    %v4075 = vrcp.pop %v4074
    %v4076 = vmul.f32 1.0, %v4075
    %v4077 = vtanh.pop %v4070
    %v4078 = vmul.f32 %v4076, %v3347
    %4080 = vrot.lane.b32.xlu0 %v4077, 64
    %v4081 = vpop.permute.xlu0 %4080
    %v4083 = vmul.f32 %v4076, %v4081
    %4085 = vrot.lane.b32.xlu0 %v4083, 32
    %v4086 = vpop.permute.xlu0 %4085
    %v4088 = vadd.f32 %v4078, %v4086
    %v4089 = vtanh.pop %v4088
    %4091 = vrot.lane.b32.xlu0 %v4089, 64
    %v4092 = vpop.permute.xlu0 %4091
    %v4094 = vmul.f32 %v4076, %v4092
    %v4096 = vcombine.high %v4094, %v4094
    %v4098 = vunpack.c.l.s4 1966171168
    %v4099 = vunpack.c.0.s8 %v4098
    %v4100 = vlaneseq
    %v4101 = vshrl.u32 %v4100, 7
    %v4102 = vsub.s32 %v4099, %v4101
    %v4103 = vrot.slane %v4094, %v4102
    %v4105 = vunpack.c.l.s4 1966171168
    %v4106 = vunpack.c.0.s8 %v4105
    %v4107 = vlaneseq
    %v4108 = vshrl.u32 %v4107, 7
    %v4109 = vsub.s32 %v4106, %v4108
    %v4110 = vrot.slane %v4096, %v4109
    %v4111 = vcombine.high %v4103, %v4103
    %v4112 = vcombine.high %v4110, %v4110
    %v4114 = vunpack.c.l.s4 1966171168
    %v4115 = vunpack.c.0.s8 %v4114
    %v4116 = vlaneseq
    %v4117 = vshrl.u32 %v4116, 7
    %v4118 = vsub.s32 %v4115, %v4117
    %v4119 = vrot.slane %v4103, %v4118
    %v4121 = vunpack.c.l.s4 1966171168
    %v4122 = vunpack.c.0.s8 %v4121
    %v4123 = vlaneseq
    %v4124 = vshrl.u32 %v4123, 7
    %v4125 = vsub.s32 %v4122, %v4124
    %v4126 = vrot.slane %v4110, %v4125
    %v4128 = vunpack.c.l.s4 1966171168
    %v4129 = vunpack.c.0.s8 %v4128
    %v4130 = vlaneseq
    %v4131 = vshrl.u32 %v4130, 7
    %v4132 = vsub.s32 %v4129, %v4131
    %v4133 = vrot.slane %v4111, %v4132
    %v4135 = vunpack.c.l.s4 1966171168
    %v4136 = vunpack.c.0.s8 %v4135
    %v4137 = vlaneseq
    %v4138 = vshrl.u32 %v4137, 7
    %v4139 = vsub.s32 %v4136, %v4138
    %v4140 = vrot.slane %v4112, %v4139
    %v4141 = vcombine.high %v4119, %v4119
    %v4142 = vcombine.high %v4126, %v4126
    %v4143 = vcombine.high %v4133, %v4133
    %v4144 = vcombine.high %v4140, %v4140
    %v4145 = vlaneseq
    %v4146 = vshrl.u32 %v4145, 7
    %v4147 = vsub.s32 0, %v4146
    %v4148 = vrot.slane %v4119, %v4147
    %v4149 = vlaneseq
    %v4150 = vshrl.u32 %v4149, 7
    %v4151 = vsub.s32 0, %v4150
    %v4152 = vrot.slane %v4133, %v4151
    %v4153 = vlaneseq
    %v4154 = vshrl.u32 %v4153, 7
    %v4155 = vsub.s32 0, %v4154
    %v4156 = vrot.slane %v4141, %v4155
    %v4157 = vlaneseq
    %v4158 = vshrl.u32 %v4157, 7
    %v4159 = vsub.s32 0, %v4158
    %v4160 = vrot.slane %v4143, %v4159
    %v4161 = vlaneseq
    %v4162 = vshrl.u32 %v4161, 7
    %v4163 = vsub.s32 0, %v4162
    %v4164 = vrot.slane %v4126, %v4163
    %v4165 = vlaneseq
    %v4166 = vshrl.u32 %v4165, 7
    %v4167 = vsub.s32 0, %v4166
    %v4168 = vrot.slane %v4140, %v4167
    %v4169 = vlaneseq
    %v4170 = vshrl.u32 %v4169, 7
    %v4171 = vsub.s32 0, %v4170
    %v4172 = vrot.slane %v4142, %v4171
    %v4173 = vlaneseq
    %v4174 = vshrl.u32 %v4173, 7
    %v4175 = vsub.s32 0, %v4174
    %v4176 = vrot.slane %v4144, %v4175
    %4177 = vrot.lane.b32.xlu0 %v4148, 32
    %v4178 = vpop.permute.xlu0 %4177
    %4179 = vrot.lane.b32.xlu0 %v4152, 32
    %v4180 = vpop.permute.xlu0 %4179
    %4181 = vrot.lane.b32.xlu0 %v4156, 32
    %v4182 = vpop.permute.xlu0 %4181
    %4183 = vrot.lane.b32.xlu0 %v4160, 32
    %v4184 = vpop.permute.xlu0 %4183
    %4185 = vrot.lane.b32.xlu0 %v4164, 32
    %v4186 = vpop.permute.xlu0 %4185
    %4187 = vrot.lane.b32.xlu0 %v4168, 32
    %v4188 = vpop.permute.xlu0 %4187
    %4189 = vrot.lane.b32.xlu0 %v4172, 32
    %v4190 = vpop.permute.xlu0 %4189
    %4191 = vrot.lane.b32.xlu0 %v4176, 32
    %v4192 = vpop.permute.xlu0 %4191
    %v4201 = vmul.f32 %v107, %v4178
    %v4202 = vmul.f32 %v108, %v4180
    %v4203 = vmul.f32 %v109, %v4182
    %v4204 = vmul.f32 %v110, %v4184
    %v4205 = vmul.f32 %v111, %v4186
    %v4206 = vmul.f32 %v112, %v4188
    %v4207 = vmul.f32 %v113, %v4190
    %v4208 = vmul.f32 %v114, %v4192
    %v4209 = vsel %vm146, %v4201, 0.0
    %4210 = vadd.xlane.f32.xlu0 %v4209
    %v4211 = vpop.xlane.xlu0 %4210
    %v4212 = vsel %vm146, %v4202, 0.0
    %4213 = vadd.xlane.f32.xlu0 %v4212
    %v4214 = vpop.xlane.xlu0 %4213
    %v4215 = vsel %vm146, %v4203, 0.0
    %4216 = vadd.xlane.f32.xlu0 %v4215
    %v4217 = vpop.xlane.xlu0 %4216
    %v4218 = vsel %vm146, %v4204, 0.0
    %4219 = vadd.xlane.f32.xlu0 %v4218
    %v4220 = vpop.xlane.xlu0 %4219
    %v4221 = vsel %vm146, %v4205, 0.0
    %4222 = vadd.xlane.f32.xlu0 %v4221
    %v4223 = vpop.xlane.xlu0 %4222
    %v4224 = vsel %vm146, %v4206, 0.0
    %4225 = vadd.xlane.f32.xlu0 %v4224
    %v4226 = vpop.xlane.xlu0 %4225
    %v4227 = vsel %vm146, %v4207, 0.0
    %4228 = vadd.xlane.f32.xlu0 %v4227
    %v4229 = vpop.xlane.xlu0 %4228
    %v4230 = vsel %vm146, %v4208, 0.0
    %4231 = vadd.xlane.f32.xlu0 %v4230
    %v4232 = vpop.xlane.xlu0 %4231
    %v4241 = vlaneseq
    %v4242 = vshrl.u32 %v4241, 7
    %v4243 = vsub.s32 %v527, %v4242
    %v4244 = vrot.slane %v4211, %v4243
    %v4245 = vlaneseq
    %v4246 = vshrl.u32 %v4245, 7
    %v4247 = vsub.s32 %v527, %v4246
    %v4248 = vrot.slane %v4214, %v4247
    %v4249 = vlaneseq
    %v4250 = vshrl.u32 %v4249, 7
    %v4251 = vsub.s32 %v527, %v4250
    %v4252 = vrot.slane %v4217, %v4251
    %v4253 = vlaneseq
    %v4254 = vshrl.u32 %v4253, 7
    %v4255 = vsub.s32 %v527, %v4254
    %v4256 = vrot.slane %v4220, %v4255
    %v4257 = vlaneseq
    %v4258 = vshrl.u32 %v4257, 7
    %v4259 = vsub.s32 %v527, %v4258
    %v4260 = vrot.slane %v4223, %v4259
    %v4261 = vlaneseq
    %v4262 = vshrl.u32 %v4261, 7
    %v4263 = vsub.s32 %v527, %v4262
    %v4264 = vrot.slane %v4226, %v4263
    %v4265 = vlaneseq
    %v4266 = vshrl.u32 %v4265, 7
    %v4267 = vsub.s32 %v527, %v4266
    %v4268 = vrot.slane %v4229, %v4267
    %v4269 = vlaneseq
    %v4270 = vshrl.u32 %v4269, 7
    %v4271 = vsub.s32 %v527, %v4270
    %v4272 = vrot.slane %v4232, %v4271
    %v4273 = vsel %vm560, %v4248, %v4244
    %v4274 = vsel %vm562, %v4252, %v4273
    %v4275 = vsel %vm564, %v4256, %v4274
    %v4276 = vsel %vm566, %v4260, %v4275
    %v4277 = vsel %vm568, %v4264, %v4276
    %v4278 = vsel %vm570, %v4268, %v4277
    %v4279 = vsel %vm572, %v4272, %v4278
    %v4281 = vsel %vm575, %v4279, -inf
    %4282 = vmax.xlane.f32.xlu0 %v4281
    %v4283 = vpop.xlane.xlu0 %4282
    %v4285 = vlaneseq
    %v4286 = vshrl.u32 %v4285, 7
    %v4287 = vsub.s32 0, %v4286
    %v4288 = vrot.slane %v4283, %v4287
    %v4289 = vlaneseq
    %v4290 = vshrl.u32 %v4289, 7
    %v4291 = vsub.s32 1, %v4290
    %v4292 = vrot.slane %v4283, %v4291
    %v4293 = vlaneseq
    %v4294 = vshrl.u32 %v4293, 7
    %v4295 = vsub.s32 2, %v4294
    %v4296 = vrot.slane %v4283, %v4295
    %v4297 = vlaneseq
    %v4298 = vshrl.u32 %v4297, 7
    %v4299 = vsub.s32 3, %v4298
    %v4300 = vrot.slane %v4283, %v4299
    %v4301 = vlaneseq
    %v4302 = vshrl.u32 %v4301, 7
    %v4303 = vsub.s32 4, %v4302
    %v4304 = vrot.slane %v4283, %v4303
    %v4305 = vlaneseq
    %v4306 = vshrl.u32 %v4305, 7
    %v4307 = vsub.s32 5, %v4306
    %v4308 = vrot.slane %v4283, %v4307
    %v4309 = vlaneseq
    %v4310 = vshrl.u32 %v4309, 7
    %v4311 = vsub.s32 6, %v4310
    %v4312 = vrot.slane %v4283, %v4311
    %v4313 = vlaneseq
    %v4314 = vshrl.u32 %v4313, 7
    %v4315 = vsub.s32 7, %v4314
    %v4316 = vrot.slane %v4283, %v4315
    %v4325 = vsub.f32 %v4211, %v4288
    %v4326 = vsub.f32 %v4214, %v4292
    %v4327 = vsub.f32 %v4217, %v4296
    %v4328 = vsub.f32 %v4220, %v4300
    %v4329 = vsub.f32 %v4223, %v4304
    %v4330 = vsub.f32 %v4226, %v4308
    %v4331 = vsub.f32 %v4229, %v4312
    %v4332 = vsub.f32 %v4232, %v4316
    %v4333 = vmul.f32 %v4325, 1.442695
    %v4334 = vpow.pop %v4333
    %v4335 = vmul.f32 %v4326, 1.442695
    %v4336 = vpow.pop %v4335
    %v4337 = vmul.f32 %v4327, 1.442695
    %v4338 = vpow.pop %v4337
    %v4339 = vmul.f32 %v4328, 1.442695
    %v4340 = vpow.pop %v4339
    %v4341 = vmul.f32 %v4329, 1.442695
    %v4342 = vpow.pop %v4341
    %v4343 = vmul.f32 %v4330, 1.442695
    %v4344 = vpow.pop %v4343
    %v4345 = vmul.f32 %v4331, 1.442695
    %v4346 = vpow.pop %v4345
    %v4347 = vmul.f32 %v4332, 1.442695
    %v4348 = vpow.pop %v4347
    %4357 = vset.pattern.permute.xlu0 0
    %4358 = vperm.xlu0 %4357, %v4334
    %v4359 = vpop.permute.xlu0 %4358
    %4360 = vset.pattern.permute.xlu0 0
    %4361 = vperm.xlu0 %4360, %v4336
    %v4362 = vpop.permute.xlu0 %4361
    %4363 = vset.pattern.permute.xlu0 0
    %4364 = vperm.xlu0 %4363, %v4338
    %v4365 = vpop.permute.xlu0 %4364
    %4366 = vset.pattern.permute.xlu0 0
    %4367 = vperm.xlu0 %4366, %v4340
    %v4368 = vpop.permute.xlu0 %4367
    %4369 = vset.pattern.permute.xlu0 0
    %4370 = vperm.xlu0 %4369, %v4342
    %v4371 = vpop.permute.xlu0 %4370
    %4372 = vset.pattern.permute.xlu0 0
    %4373 = vperm.xlu0 %4372, %v4344
    %v4374 = vpop.permute.xlu0 %4373
    %4375 = vset.pattern.permute.xlu0 0
    %4376 = vperm.xlu0 %4375, %v4346
    %v4377 = vpop.permute.xlu0 %4376
    %4378 = vset.pattern.permute.xlu0 0
    %4379 = vperm.xlu0 %4378, %v4348
    %v4380 = vpop.permute.xlu0 %4379
    %v4381 = vlaneseq
    %v4382 = vshrl.u32 %v4381, 7
    %v4383 = vsub.s32 %v527, %v4382
    %v4384 = vrot.slane %v4359, %v4383
    %v4385 = vlaneseq
    %v4386 = vshrl.u32 %v4385, 7
    %v4387 = vsub.s32 %v527, %v4386
    %v4388 = vrot.slane %v4362, %v4387
    %v4389 = vlaneseq
    %v4390 = vshrl.u32 %v4389, 7
    %v4391 = vsub.s32 %v527, %v4390
    %v4392 = vrot.slane %v4365, %v4391
    %v4393 = vlaneseq
    %v4394 = vshrl.u32 %v4393, 7
    %v4395 = vsub.s32 %v527, %v4394
    %v4396 = vrot.slane %v4368, %v4395
    %v4397 = vlaneseq
    %v4398 = vshrl.u32 %v4397, 7
    %v4399 = vsub.s32 %v527, %v4398
    %v4400 = vrot.slane %v4371, %v4399
    %v4401 = vlaneseq
    %v4402 = vshrl.u32 %v4401, 7
    %v4403 = vsub.s32 %v527, %v4402
    %v4404 = vrot.slane %v4374, %v4403
    %v4405 = vlaneseq
    %v4406 = vshrl.u32 %v4405, 7
    %v4407 = vsub.s32 %v527, %v4406
    %v4408 = vrot.slane %v4377, %v4407
    %v4409 = vlaneseq
    %v4410 = vshrl.u32 %v4409, 7
    %v4411 = vsub.s32 %v527, %v4410
    %v4412 = vrot.slane %v4380, %v4411
    %v4413 = vsel %vm560, %v4388, %v4384
    %v4414 = vsel %vm562, %v4392, %v4413
    %v4415 = vsel %vm564, %v4396, %v4414
    %v4416 = vsel %vm566, %v4400, %v4415
    %v4417 = vsel %vm568, %v4404, %v4416
    %v4418 = vsel %vm570, %v4408, %v4417
    %v4419 = vsel %vm572, %v4412, %v4418
    %v4421 = vsel %vm575, %v4419, 0.0
    %4422 = vadd.xlane.f32.xlu0 %v4421
    %v4423 = vpop.xlane.xlu0 %4422
    %v4424 = vrcp.pop %v4423
    %v4426 = vlaneseq
    %v4427 = vshrl.u32 %v4426, 7
    %v4428 = vsub.s32 0, %v4427
    %v4429 = vrot.slane %v4424, %v4428
    %v4430 = vlaneseq
    %v4431 = vshrl.u32 %v4430, 7
    %v4432 = vsub.s32 1, %v4431
    %v4433 = vrot.slane %v4424, %v4432
    %v4434 = vlaneseq
    %v4435 = vshrl.u32 %v4434, 7
    %v4436 = vsub.s32 2, %v4435
    %v4437 = vrot.slane %v4424, %v4436
    %v4438 = vlaneseq
    %v4439 = vshrl.u32 %v4438, 7
    %v4440 = vsub.s32 3, %v4439
    %v4441 = vrot.slane %v4424, %v4440
    %v4442 = vlaneseq
    %v4443 = vshrl.u32 %v4442, 7
    %v4444 = vsub.s32 4, %v4443
    %v4445 = vrot.slane %v4424, %v4444
    %v4446 = vlaneseq
    %v4447 = vshrl.u32 %v4446, 7
    %v4448 = vsub.s32 5, %v4447
    %v4449 = vrot.slane %v4424, %v4448
    %v4450 = vlaneseq
    %v4451 = vshrl.u32 %v4450, 7
    %v4452 = vsub.s32 6, %v4451
    %v4453 = vrot.slane %v4424, %v4452
    %v4454 = vlaneseq
    %v4455 = vshrl.u32 %v4454, 7
    %v4456 = vsub.s32 7, %v4455
    %v4457 = vrot.slane %v4424, %v4456
    %v4466 = vmul.f32 %v4334, %v4429
    %v4467 = vmul.f32 %v4336, %v4433
    %v4468 = vmul.f32 %v4338, %v4437
    %v4469 = vmul.f32 %v4340, %v4441
    %v4470 = vmul.f32 %v4342, %v4445
    %v4471 = vmul.f32 %v4344, %v4449
    %v4472 = vmul.f32 %v4346, %v4453
    %v4473 = vmul.f32 %v4348, %v4457
    %4475 = vset.pattern.permute.xlu0 0
    %4476 = vperm.xlu0 %4475, %v4466
    %v4477 = vpop.permute.xlu0 %4476
    %4480 = vset.pattern.permute.xlu0 0
    %4481 = vperm.xlu0 %4480, %v4467
    %v4482 = vpop.permute.xlu0 %4481
    %4485 = vset.pattern.permute.xlu0 0
    %4486 = vperm.xlu0 %4485, %v4468
    %v4487 = vpop.permute.xlu0 %4486
    %4490 = vset.pattern.permute.xlu0 0
    %4491 = vperm.xlu0 %4490, %v4469
    %v4492 = vpop.permute.xlu0 %4491
    %4495 = vset.pattern.permute.xlu0 0
    %4496 = vperm.xlu0 %4495, %v4470
    %v4497 = vpop.permute.xlu0 %4496
    %4500 = vset.pattern.permute.xlu0 0
    %4501 = vperm.xlu0 %4500, %v4471
    %v4502 = vpop.permute.xlu0 %4501
    %4505 = vset.pattern.permute.xlu0 0
    %4506 = vperm.xlu0 %4505, %v4472
    %v4507 = vpop.permute.xlu0 %4506
    %4510 = vset.pattern.permute.xlu0 0
    %4511 = vperm.xlu0 %4510, %v4473
    %v4512 = vpop.permute.xlu0 %4511
    %v4514 = vmul.f32 %v4477, %v107
    %v4515 = vmul.f32 %v4482, %v108
    %v4516 = vmul.f32 %v4487, %v109
    %v4517 = vmul.f32 %v4492, %v110
    %v4518 = vmul.f32 %v4497, %v111
    %v4519 = vmul.f32 %v4502, %v112
    %v4520 = vmul.f32 %v4507, %v113
    %v4521 = vmul.f32 %v4512, %v114
    %v4522 = vsel %vm146, %v4514, 0.0
    %v4523 = vrot.slane %v4522, 4
    %v4524 = vadd.f32 %v4522, %v4523
    %v4525 = vrot.slane %v4524, 2
    %v4526 = vadd.f32 %v4524, %v4525
    %v4527 = vrot.slane %v4526, 1
    %v4528 = vadd.f32 %v4526, %v4527
    %v4529 = vsel %vm146, %v4515, 0.0
    %v4530 = vrot.slane %v4529, 4
    %v4531 = vadd.f32 %v4529, %v4530
    %v4532 = vrot.slane %v4531, 2
    %v4533 = vadd.f32 %v4531, %v4532
    %v4534 = vrot.slane %v4533, 1
    %v4535 = vadd.f32 %v4533, %v4534
    %v4536 = vsel %vm146, %v4516, 0.0
    %v4537 = vrot.slane %v4536, 4
    %v4538 = vadd.f32 %v4536, %v4537
    %v4539 = vrot.slane %v4538, 2
    %v4540 = vadd.f32 %v4538, %v4539
    %v4541 = vrot.slane %v4540, 1
    %v4542 = vadd.f32 %v4540, %v4541
    %v4543 = vsel %vm146, %v4517, 0.0
    %v4544 = vrot.slane %v4543, 4
    %v4545 = vadd.f32 %v4543, %v4544
    %v4546 = vrot.slane %v4545, 2
    %v4547 = vadd.f32 %v4545, %v4546
    %v4548 = vrot.slane %v4547, 1
    %v4549 = vadd.f32 %v4547, %v4548
    %v4550 = vsel %vm146, %v4518, 0.0
    %v4551 = vrot.slane %v4550, 4
    %v4552 = vadd.f32 %v4550, %v4551
    %v4553 = vrot.slane %v4552, 2
    %v4554 = vadd.f32 %v4552, %v4553
    %v4555 = vrot.slane %v4554, 1
    %v4556 = vadd.f32 %v4554, %v4555
    %v4557 = vsel %vm146, %v4519, 0.0
    %v4558 = vrot.slane %v4557, 4
    %v4559 = vadd.f32 %v4557, %v4558
    %v4560 = vrot.slane %v4559, 2
    %v4561 = vadd.f32 %v4559, %v4560
    %v4562 = vrot.slane %v4561, 1
    %v4563 = vadd.f32 %v4561, %v4562
    %v4564 = vsel %vm146, %v4520, 0.0
    %v4565 = vrot.slane %v4564, 4
    %v4566 = vadd.f32 %v4564, %v4565
    %v4567 = vrot.slane %v4566, 2
    %v4568 = vadd.f32 %v4566, %v4567
    %v4569 = vrot.slane %v4568, 1
    %v4570 = vadd.f32 %v4568, %v4569
    %v4571 = vsel %vm146, %v4521, 0.0
    %v4572 = vrot.slane %v4571, 4
    %v4573 = vadd.f32 %v4571, %v4572
    %v4574 = vrot.slane %v4573, 2
    %v4575 = vadd.f32 %v4573, %v4574
    %v4576 = vrot.slane %v4575, 1
    %v4577 = vadd.f32 %v4575, %v4576
    %v4586 = vsel %vm560, %v4535, %v4528
    %v4587 = vsel %vm562, %v4542, %v4586
    %v4588 = vsel %vm564, %v4549, %v4587
    %v4589 = vsel %vm566, %v4556, %v4588
    %v4590 = vsel %vm568, %v4563, %v4589
    %v4591 = vsel %vm570, %v4570, %v4590
    %v4592 = vsel %vm572, %v4577, %v4591
    %v4593 = vsel %vm146, %v4592, 0
    %4595 = vmatprep.subr.mxu0 0.0
    %4596 = vmatpush1.msra.mxu0 %v123
    %4597 = vmatprep.subr.mxu0 0.0
    %4598 = vmatpush1.msra.mxu0 %v124
    %4599 = vmatprep.subr.mxu0 0.0
    %4600 = vmatpush1.msra.mxu0 %v125
    %4601 = vmatprep.subr.mxu0 0.0
    %4602 = vmatpush1.msra.mxu0 %v126
    %4603 = vmatprep.subr.mxu0 0.0
    %4604 = vmatpush1.msra.mxu0 0.0
    %4605 = vmatprep.subr.mxu0 0.0
    %4606 = vmatpush1.msra.mxu0 0.0
    %4607 = vmatprep.subr.mxu0 0.0
    %4608 = vmatpush1.msra.mxu0 0.0
    %4609 = vmatprep.subr.mxu0 0.0
    %4610 = vmatpush1.msra.mxu0 0.0
    %4611 = vmatprep.subr.mxu0 0.0
    %4612 = vmatpush1.msra.mxu0 0.0
    %4613 = vmatprep.subr.mxu0 0.0
    %4614 = vmatpush1.msra.mxu0 0.0
    %4615 = vmatprep.subr.mxu0 0.0
    %4616 = vmatpush1.msra.mxu0 0.0
    %4617 = vmatprep.subr.mxu0 0.0
    %4618 = vmatpush1.msra.mxu0 0.0
    %4619 = vmatprep.subr.mxu0 0.0
    %4620 = vmatpush1.msra.mxu0 0.0
    %4621 = vmatprep.subr.mxu0 0.0
    %4622 = vmatpush1.msra.mxu0 0.0
    %4623 = vmatprep.subr.mxu0 0.0
    %4624 = vmatpush1.msra.mxu0 0.0
    %4625 = vmatprep.subr.mxu0 0.0
    %4626 = vmatpush1.msra.mxu0 0.0
    %4627 = vmatprep.subr.mxu0 0.0
    %4628 = vmatpush1.msra.mxu0 0.0
    %4629 = vmatprep.subr.mxu0 0.0
    %4630 = vmatpush1.msra.mxu0 0.0
    %4631 = vmatprep.subr.mxu0 0.0
    %4632 = vmatpush1.msra.mxu0 0.0
    %4633 = vmatprep.subr.mxu0 0.0
    %4634 = vmatpush1.msra.mxu0 0.0
    %4635 = vmatprep.subr.mxu0 0.0
    %4636 = vmatpush1.msra.mxu0 0.0
    %4637 = vmatprep.subr.mxu0 0.0
    %4638 = vmatpush1.msra.mxu0 0.0
    %4639 = vmatprep.subr.mxu0 0.0
    %4640 = vmatpush1.msra.mxu0 0.0
    %4641 = vmatprep.subr.mxu0 0.0
    %4642 = vmatpush1.msra.mxu0 0.0
    %4643 = vmatprep.subr.mxu0 0.0
    %4644 = vmatpush1.msra.mxu0 0.0
    %4645 = vmatprep.subr.mxu0 0.0
    %4646 = vmatpush1.msra.mxu0 0.0
    %4647 = vmatprep.subr.mxu0 0.0
    %4648 = vmatpush1.msra.mxu0 0.0
    %4649 = vmatprep.subr.mxu0 0.0
    %4650 = vmatpush1.msra.mxu0 0.0
    %4651 = vmatprep.subr.mxu0 0.0
    %4652 = vmatpush1.msra.mxu0 0.0
    %4653 = vmatprep.subr.mxu0 0.0
    %4654 = vmatpush1.msra.mxu0 0.0
    %4655 = vmatprep.subr.mxu0 0.0
    %4656 = vmatpush1.msra.mxu0 0.0
    %4657 = vmatprep.subr.mxu0 0.0
    %4658 = vmatpush1.msra.mxu0 0.0
    %4659 = vmatprep.mubr.f32.mxu0 0.0
    %4660 = vmatmul.mubr.f32.gmra.mrb[0].mxu0 %v4593
    %v4661 = vpop.f32.mrb[0].mxu0
    %v4662 = vadd.f32 0.0, %v4661
    %v4663 = vpop.f32.mrb[0].mxu0
    %4664 = vdwg.mxu0
    %4665 = vrot.lane.b32.xlu0 %v4094, 32
    %v4666 = vpop.permute.xlu0 %4665
    %v4667 = vsel %vm146, %v4666, 0
    %4669 = vmatprep.subr.mxu0 0.0
    %4670 = vmatpush1.msra.mxu0 %v119
    %4671 = vmatprep.subr.mxu0 0.0
    %4672 = vmatpush1.msra.mxu0 %v120
    %4673 = vmatprep.subr.mxu0 0.0
    %4674 = vmatpush1.msra.mxu0 %v121
    %4675 = vmatprep.subr.mxu0 0.0
    %4676 = vmatpush1.msra.mxu0 %v122
    %4677 = vmatprep.subr.mxu0 0.0
    %4678 = vmatpush1.msra.mxu0 0.0
    %4679 = vmatprep.subr.mxu0 0.0
    %4680 = vmatpush1.msra.mxu0 0.0
    %4681 = vmatprep.subr.mxu0 0.0
    %4682 = vmatpush1.msra.mxu0 0.0
    %4683 = vmatprep.subr.mxu0 0.0
    %4684 = vmatpush1.msra.mxu0 0.0
    %4685 = vmatprep.subr.mxu0 0.0
    %4686 = vmatpush1.msra.mxu0 0.0
    %4687 = vmatprep.subr.mxu0 0.0
    %4688 = vmatpush1.msra.mxu0 0.0
    %4689 = vmatprep.subr.mxu0 0.0
    %4690 = vmatpush1.msra.mxu0 0.0
    %4691 = vmatprep.subr.mxu0 0.0
    %4692 = vmatpush1.msra.mxu0 0.0
    %4693 = vmatprep.subr.mxu0 0.0
    %4694 = vmatpush1.msra.mxu0 0.0
    %4695 = vmatprep.subr.mxu0 0.0
    %4696 = vmatpush1.msra.mxu0 0.0
    %4697 = vmatprep.subr.mxu0 0.0
    %4698 = vmatpush1.msra.mxu0 0.0
    %4699 = vmatprep.subr.mxu0 0.0
    %4700 = vmatpush1.msra.mxu0 0.0
    %4701 = vmatprep.subr.mxu0 0.0
    %4702 = vmatpush1.msra.mxu0 0.0
    %4703 = vmatprep.subr.mxu0 0.0
    %4704 = vmatpush1.msra.mxu0 0.0
    %4705 = vmatprep.subr.mxu0 0.0
    %4706 = vmatpush1.msra.mxu0 0.0
    %4707 = vmatprep.subr.mxu0 0.0
    %4708 = vmatpush1.msra.mxu0 0.0
    %4709 = vmatprep.subr.mxu0 0.0
    %4710 = vmatpush1.msra.mxu0 0.0
    %4711 = vmatprep.subr.mxu0 0.0
    %4712 = vmatpush1.msra.mxu0 0.0
    %4713 = vmatprep.subr.mxu0 0.0
    %4714 = vmatpush1.msra.mxu0 0.0
    %4715 = vmatprep.subr.mxu0 0.0
    %4716 = vmatpush1.msra.mxu0 0.0
    %4717 = vmatprep.subr.mxu0 0.0
    %4718 = vmatpush1.msra.mxu0 0.0
    %4719 = vmatprep.subr.mxu0 0.0
    %4720 = vmatpush1.msra.mxu0 0.0
    %4721 = vmatprep.subr.mxu0 0.0
    %4722 = vmatpush1.msra.mxu0 0.0
    %4723 = vmatprep.subr.mxu0 0.0
    %4724 = vmatpush1.msra.mxu0 0.0
    %4725 = vmatprep.subr.mxu0 0.0
    %4726 = vmatpush1.msra.mxu0 0.0
    %4727 = vmatprep.subr.mxu0 0.0
    %4728 = vmatpush1.msra.mxu0 0.0
    %4729 = vmatprep.subr.mxu0 0.0
    %4730 = vmatpush1.msra.mxu0 0.0
    %4731 = vmatprep.subr.mxu0 0.0
    %4732 = vmatpush1.msra.mxu0 0.0
    %4733 = vmatprep.mubr.f32.mxu0 0.0
    %4734 = vmatmul.mubr.f32.gmra.mrb[0].mxu0 %v4667
    %v4735 = vpop.f32.mrb[0].mxu0
    %v4736 = vadd.f32 %v4662, %v4735
    %v4737 = vpop.f32.mrb[0].mxu0
    %4738 = vdwg.mxu0
    %v4739 = vtanh.pop %v4736
    %4740 = vst.msk [vmem:[#allocation2 + $0x28] sm:$0xff] %vm146, %v4739
    %4741 = vmatprep.subr.mxu0 0.0
    %4742 = vmatpush1.msra.mxu0 %v115
    %4743 = vmatprep.subr.mxu0 0.0
    %4744 = vmatpush1.msra.mxu0 %v116
    %4745 = vmatprep.subr.mxu0 0.0
    %4746 = vmatpush1.msra.mxu0 %v117
    %4747 = vmatprep.subr.mxu0 0.0
    %4748 = vmatpush1.msra.mxu0 %v118
    %4749 = vmatprep.subr.mxu0 0.0
    %4750 = vmatpush1.msra.mxu0 0.0
    %4751 = vmatprep.subr.mxu0 0.0
    %4752 = vmatpush1.msra.mxu0 0.0
    %4753 = vmatprep.subr.mxu0 0.0
    %4754 = vmatpush1.msra.mxu0 0.0
    %4755 = vmatprep.subr.mxu0 0.0
    %4756 = vmatpush1.msra.mxu0 0.0
    %4757 = vmatprep.subr.mxu0 0.0
    %4758 = vmatpush1.msra.mxu0 0.0
    %4759 = vmatprep.subr.mxu0 0.0
    %4760 = vmatpush1.msra.mxu0 0.0
    %4761 = vmatprep.subr.mxu0 0.0
    %4762 = vmatpush1.msra.mxu0 0.0
    %4763 = vmatprep.subr.mxu0 0.0
    %4764 = vmatpush1.msra.mxu0 0.0
    %4765 = vmatprep.subr.mxu0 0.0
    %4766 = vmatpush1.msra.mxu0 0.0
    %4767 = vmatprep.subr.mxu0 0.0
    %4768 = vmatpush1.msra.mxu0 0.0
    %4769 = vmatprep.subr.mxu0 0.0
    %4770 = vmatpush1.msra.mxu0 0.0
    %4771 = vmatprep.subr.mxu0 0.0
    %4772 = vmatpush1.msra.mxu0 0.0
    %4773 = vmatprep.subr.mxu0 0.0
    %4774 = vmatpush1.msra.mxu0 0.0
    %4775 = vmatprep.subr.mxu0 0.0
    %4776 = vmatpush1.msra.mxu0 0.0
    %4777 = vmatprep.subr.mxu0 0.0
    %4778 = vmatpush1.msra.mxu0 0.0
    %4779 = vmatprep.subr.mxu0 0.0
    %4780 = vmatpush1.msra.mxu0 0.0
    %4781 = vmatprep.subr.mxu0 0.0
    %4782 = vmatpush1.msra.mxu0 0.0
    %4783 = vmatprep.subr.mxu0 0.0
    %4784 = vmatpush1.msra.mxu0 0.0
    %4785 = vmatprep.subr.mxu0 0.0
    %4786 = vmatpush1.msra.mxu0 0.0
    %4787 = vmatprep.subr.mxu0 0.0
    %4788 = vmatpush1.msra.mxu0 0.0
    %4789 = vmatprep.subr.mxu0 0.0
    %4790 = vmatpush1.msra.mxu0 0.0
    %4791 = vmatprep.subr.mxu0 0.0
    %4792 = vmatpush1.msra.mxu0 0.0
    %4793 = vmatprep.subr.mxu0 0.0
    %4794 = vmatpush1.msra.mxu0 0.0
    %4795 = vmatprep.subr.mxu0 0.0
    %4796 = vmatpush1.msra.mxu0 0.0
    %4797 = vmatprep.subr.mxu0 0.0
    %4798 = vmatpush1.msra.mxu0 0.0
    %4799 = vmatprep.subr.mxu0 0.0
    %4800 = vmatpush1.msra.mxu0 0.0
    %4801 = vmatprep.subr.mxu0 0.0
    %4802 = vmatpush1.msra.mxu0 0.0
    %4803 = vmatprep.subr.mxu0 0.0
    %4804 = vmatpush1.msra.mxu0 0.0
    %4805 = vmatprep.mubr.f32.mxu0 0.0
    %4806 = vmatmul.mubr.f32.gmra.mrb[0].mxu0 %v4667
    %v4807 = vpop.f32.mrb[0].mxu0
    %v4808 = vadd.f32 0.0, %v4807
    %v4809 = vpop.f32.mrb[0].mxu0
    %4810 = vdwg.mxu0
    %v4811 = vadd.f32 %v268, %v4808
    %v4812 = vxor.u32 %v4811, 2147483648
    %v4813 = vmul.f32 %v4812, 1.442695
    %v4814 = vpow.pop %v4813
    %v4815 = vadd.f32 %v4814, 1.0
    %v4816 = vrcp.pop %v4815
    %v4817 = vmul.f32 1.0, %v4816
    %v4818 = vtanh.pop %v4811
    %v4819 = vmul.f32 %v4817, %v4088
    %4821 = vrot.lane.b32.xlu0 %v4818, 64
    %v4822 = vpop.permute.xlu0 %4821
    %v4824 = vmul.f32 %v4817, %v4822
    %4826 = vrot.lane.b32.xlu0 %v4824, 32
    %v4827 = vpop.permute.xlu0 %4826
    %v4829 = vadd.f32 %v4819, %v4827
    %v4830 = vtanh.pop %v4829
    %4832 = vrot.lane.b32.xlu0 %v4830, 64
    %v4833 = vpop.permute.xlu0 %4832
    %v4835 = vmul.f32 %v4817, %v4833
    %v4837 = vcombine.high %v4835, %v4835
    %v4839 = vunpack.c.l.s4 1966171168
    %v4840 = vunpack.c.0.s8 %v4839
    %v4841 = vlaneseq
    %v4842 = vshrl.u32 %v4841, 7
    %v4843 = vsub.s32 %v4840, %v4842
    %v4844 = vrot.slane %v4835, %v4843
    %v4846 = vunpack.c.l.s4 1966171168
    %v4847 = vunpack.c.0.s8 %v4846
    %v4848 = vlaneseq
    %v4849 = vshrl.u32 %v4848, 7
    %v4850 = vsub.s32 %v4847, %v4849
    %v4851 = vrot.slane %v4837, %v4850
    %v4852 = vcombine.high %v4844, %v4844
    %v4853 = vcombine.high %v4851, %v4851
    %v4855 = vunpack.c.l.s4 1966171168
    %v4856 = vunpack.c.0.s8 %v4855
    %v4857 = vlaneseq
    %v4858 = vshrl.u32 %v4857, 7
    %v4859 = vsub.s32 %v4856, %v4858
    %v4860 = vrot.slane %v4844, %v4859
    %v4862 = vunpack.c.l.s4 1966171168
    %v4863 = vunpack.c.0.s8 %v4862
    %v4864 = vlaneseq
    %v4865 = vshrl.u32 %v4864, 7
    %v4866 = vsub.s32 %v4863, %v4865
    %v4867 = vrot.slane %v4851, %v4866
    %v4869 = vunpack.c.l.s4 1966171168
    %v4870 = vunpack.c.0.s8 %v4869
    %v4871 = vlaneseq
    %v4872 = vshrl.u32 %v4871, 7
    %v4873 = vsub.s32 %v4870, %v4872
    %v4874 = vrot.slane %v4852, %v4873
    %v4876 = vunpack.c.l.s4 1966171168
    %v4877 = vunpack.c.0.s8 %v4876
    %v4878 = vlaneseq
    %v4879 = vshrl.u32 %v4878, 7
    %v4880 = vsub.s32 %v4877, %v4879
    %v4881 = vrot.slane %v4853, %v4880
    %v4882 = vcombine.high %v4860, %v4860
    %v4883 = vcombine.high %v4867, %v4867
    %v4884 = vcombine.high %v4874, %v4874
    %v4885 = vcombine.high %v4881, %v4881
    %v4886 = vlaneseq
    %v4887 = vshrl.u32 %v4886, 7
    %v4888 = vsub.s32 0, %v4887
    %v4889 = vrot.slane %v4860, %v4888
    %v4890 = vlaneseq
    %v4891 = vshrl.u32 %v4890, 7
    %v4892 = vsub.s32 0, %v4891
    %v4893 = vrot.slane %v4874, %v4892
    %v4894 = vlaneseq
    %v4895 = vshrl.u32 %v4894, 7
    %v4896 = vsub.s32 0, %v4895
    %v4897 = vrot.slane %v4882, %v4896
    %v4898 = vlaneseq
    %v4899 = vshrl.u32 %v4898, 7
    %v4900 = vsub.s32 0, %v4899
    %v4901 = vrot.slane %v4884, %v4900
    %v4902 = vlaneseq
    %v4903 = vshrl.u32 %v4902, 7
    %v4904 = vsub.s32 0, %v4903
    %v4905 = vrot.slane %v4867, %v4904
    %v4906 = vlaneseq
    %v4907 = vshrl.u32 %v4906, 7
    %v4908 = vsub.s32 0, %v4907
    %v4909 = vrot.slane %v4881, %v4908
    %v4910 = vlaneseq
    %v4911 = vshrl.u32 %v4910, 7
    %v4912 = vsub.s32 0, %v4911
    %v4913 = vrot.slane %v4883, %v4912
    %v4914 = vlaneseq
    %v4915 = vshrl.u32 %v4914, 7
    %v4916 = vsub.s32 0, %v4915
    %v4917 = vrot.slane %v4885, %v4916
    %4918 = vrot.lane.b32.xlu0 %v4889, 32
    %v4919 = vpop.permute.xlu0 %4918
    %4920 = vrot.lane.b32.xlu0 %v4893, 32
    %v4921 = vpop.permute.xlu0 %4920
    %4922 = vrot.lane.b32.xlu0 %v4897, 32
    %v4923 = vpop.permute.xlu0 %4922
    %4924 = vrot.lane.b32.xlu0 %v4901, 32
    %v4925 = vpop.permute.xlu0 %4924
    %4926 = vrot.lane.b32.xlu0 %v4905, 32
    %v4927 = vpop.permute.xlu0 %4926
    %4928 = vrot.lane.b32.xlu0 %v4909, 32
    %v4929 = vpop.permute.xlu0 %4928
    %4930 = vrot.lane.b32.xlu0 %v4913, 32
    %v4931 = vpop.permute.xlu0 %4930
    %4932 = vrot.lane.b32.xlu0 %v4917, 32
    %v4933 = vpop.permute.xlu0 %4932
    %v4942 = vmul.f32 %v107, %v4919
    %v4943 = vmul.f32 %v108, %v4921
    %v4944 = vmul.f32 %v109, %v4923
    %v4945 = vmul.f32 %v110, %v4925
    %v4946 = vmul.f32 %v111, %v4927
    %v4947 = vmul.f32 %v112, %v4929
    %v4948 = vmul.f32 %v113, %v4931
    %v4949 = vmul.f32 %v114, %v4933
    %v4950 = vsel %vm146, %v4942, 0.0
    %4951 = vadd.xlane.f32.xlu0 %v4950
    %v4952 = vpop.xlane.xlu0 %4951
    %v4953 = vsel %vm146, %v4943, 0.0
    %4954 = vadd.xlane.f32.xlu0 %v4953
    %v4955 = vpop.xlane.xlu0 %4954
    %v4956 = vsel %vm146, %v4944, 0.0
    %4957 = vadd.xlane.f32.xlu0 %v4956
    %v4958 = vpop.xlane.xlu0 %4957
    %v4959 = vsel %vm146, %v4945, 0.0
    %4960 = vadd.xlane.f32.xlu0 %v4959
    %v4961 = vpop.xlane.xlu0 %4960
    %v4962 = vsel %vm146, %v4946, 0.0
    %4963 = vadd.xlane.f32.xlu0 %v4962
    %v4964 = vpop.xlane.xlu0 %4963
    %v4965 = vsel %vm146, %v4947, 0.0
    %4966 = vadd.xlane.f32.xlu0 %v4965
    %v4967 = vpop.xlane.xlu0 %4966
    %v4968 = vsel %vm146, %v4948, 0.0
    %4969 = vadd.xlane.f32.xlu0 %v4968
    %v4970 = vpop.xlane.xlu0 %4969
    %v4971 = vsel %vm146, %v4949, 0.0
    %4972 = vadd.xlane.f32.xlu0 %v4971
    %v4973 = vpop.xlane.xlu0 %4972
    %v4982 = vlaneseq
    %v4983 = vshrl.u32 %v4982, 7
    %v4984 = vsub.s32 %v527, %v4983
    %v4985 = vrot.slane %v4952, %v4984
    %v4986 = vlaneseq
    %v4987 = vshrl.u32 %v4986, 7
    %v4988 = vsub.s32 %v527, %v4987
    %v4989 = vrot.slane %v4955, %v4988
    %v4990 = vlaneseq
    %v4991 = vshrl.u32 %v4990, 7
    %v4992 = vsub.s32 %v527, %v4991
    %v4993 = vrot.slane %v4958, %v4992
    %v4994 = vlaneseq
    %v4995 = vshrl.u32 %v4994, 7
    %v4996 = vsub.s32 %v527, %v4995
    %v4997 = vrot.slane %v4961, %v4996
    %v4998 = vlaneseq
    %v4999 = vshrl.u32 %v4998, 7
    %v5000 = vsub.s32 %v527, %v4999
    %v5001 = vrot.slane %v4964, %v5000
    %v5002 = vlaneseq
    %v5003 = vshrl.u32 %v5002, 7
    %v5004 = vsub.s32 %v527, %v5003
    %v5005 = vrot.slane %v4967, %v5004
    %v5006 = vlaneseq
    %v5007 = vshrl.u32 %v5006, 7
    %v5008 = vsub.s32 %v527, %v5007
    %v5009 = vrot.slane %v4970, %v5008
    %v5010 = vlaneseq
    %v5011 = vshrl.u32 %v5010, 7
    %v5012 = vsub.s32 %v527, %v5011
    %v5013 = vrot.slane %v4973, %v5012
    %v5014 = vsel %vm560, %v4989, %v4985
    %v5015 = vsel %vm562, %v4993, %v5014
    %v5016 = vsel %vm564, %v4997, %v5015
    %v5017 = vsel %vm566, %v5001, %v5016
    %v5018 = vsel %vm568, %v5005, %v5017
    %v5019 = vsel %vm570, %v5009, %v5018
    %v5020 = vsel %vm572, %v5013, %v5019
    %v5022 = vsel %vm575, %v5020, -inf
    %5023 = vmax.xlane.f32.xlu0 %v5022
    %v5024 = vpop.xlane.xlu0 %5023
    %v5026 = vlaneseq
    %v5027 = vshrl.u32 %v5026, 7
    %v5028 = vsub.s32 0, %v5027
    %v5029 = vrot.slane %v5024, %v5028
    %v5030 = vlaneseq
    %v5031 = vshrl.u32 %v5030, 7
    %v5032 = vsub.s32 1, %v5031
    %v5033 = vrot.slane %v5024, %v5032
    %v5034 = vlaneseq
    %v5035 = vshrl.u32 %v5034, 7
    %v5036 = vsub.s32 2, %v5035
    %v5037 = vrot.slane %v5024, %v5036
    %v5038 = vlaneseq
    %v5039 = vshrl.u32 %v5038, 7
    %v5040 = vsub.s32 3, %v5039
    %v5041 = vrot.slane %v5024, %v5040
    %v5042 = vlaneseq
    %v5043 = vshrl.u32 %v5042, 7
    %v5044 = vsub.s32 4, %v5043
    %v5045 = vrot.slane %v5024, %v5044
    %v5046 = vlaneseq
    %v5047 = vshrl.u32 %v5046, 7
    %v5048 = vsub.s32 5, %v5047
    %v5049 = vrot.slane %v5024, %v5048
    %v5050 = vlaneseq
    %v5051 = vshrl.u32 %v5050, 7
    %v5052 = vsub.s32 6, %v5051
    %v5053 = vrot.slane %v5024, %v5052
    %v5054 = vlaneseq
    %v5055 = vshrl.u32 %v5054, 7
    %v5056 = vsub.s32 7, %v5055
    %v5057 = vrot.slane %v5024, %v5056
    %v5066 = vsub.f32 %v4952, %v5029
    %v5067 = vsub.f32 %v4955, %v5033
    %v5068 = vsub.f32 %v4958, %v5037
    %v5069 = vsub.f32 %v4961, %v5041
    %v5070 = vsub.f32 %v4964, %v5045
    %v5071 = vsub.f32 %v4967, %v5049
    %v5072 = vsub.f32 %v4970, %v5053
    %v5073 = vsub.f32 %v4973, %v5057
    %v5074 = vmul.f32 %v5066, 1.442695
    %v5075 = vpow.pop %v5074
    %v5076 = vmul.f32 %v5067, 1.442695
    %v5077 = vpow.pop %v5076
    %v5078 = vmul.f32 %v5068, 1.442695
    %v5079 = vpow.pop %v5078
    %v5080 = vmul.f32 %v5069, 1.442695
    %v5081 = vpow.pop %v5080
    %v5082 = vmul.f32 %v5070, 1.442695
    %v5083 = vpow.pop %v5082
    %v5084 = vmul.f32 %v5071, 1.442695
    %v5085 = vpow.pop %v5084
    %v5086 = vmul.f32 %v5072, 1.442695
    %v5087 = vpow.pop %v5086
    %v5088 = vmul.f32 %v5073, 1.442695
    %v5089 = vpow.pop %v5088
    %5098 = vset.pattern.permute.xlu0 0
    %5099 = vperm.xlu0 %5098, %v5075
    %v5100 = vpop.permute.xlu0 %5099
    %5101 = vset.pattern.permute.xlu0 0
    %5102 = vperm.xlu0 %5101, %v5077
    %v5103 = vpop.permute.xlu0 %5102
    %5104 = vset.pattern.permute.xlu0 0
    %5105 = vperm.xlu0 %5104, %v5079
    %v5106 = vpop.permute.xlu0 %5105
    %5107 = vset.pattern.permute.xlu0 0
    %5108 = vperm.xlu0 %5107, %v5081
    %v5109 = vpop.permute.xlu0 %5108
    %5110 = vset.pattern.permute.xlu0 0
    %5111 = vperm.xlu0 %5110, %v5083
    %v5112 = vpop.permute.xlu0 %5111
    %5113 = vset.pattern.permute.xlu0 0
    %5114 = vperm.xlu0 %5113, %v5085
    %v5115 = vpop.permute.xlu0 %5114
    %5116 = vset.pattern.permute.xlu0 0
    %5117 = vperm.xlu0 %5116, %v5087
    %v5118 = vpop.permute.xlu0 %5117
    %5119 = vset.pattern.permute.xlu0 0
    %5120 = vperm.xlu0 %5119, %v5089
    %v5121 = vpop.permute.xlu0 %5120
    %v5122 = vlaneseq
    %v5123 = vshrl.u32 %v5122, 7
    %v5124 = vsub.s32 %v527, %v5123
    %v5125 = vrot.slane %v5100, %v5124
    %v5126 = vlaneseq
    %v5127 = vshrl.u32 %v5126, 7
    %v5128 = vsub.s32 %v527, %v5127
    %v5129 = vrot.slane %v5103, %v5128
    %v5130 = vlaneseq
    %v5131 = vshrl.u32 %v5130, 7
    %v5132 = vsub.s32 %v527, %v5131
    %v5133 = vrot.slane %v5106, %v5132
    %v5134 = vlaneseq
    %v5135 = vshrl.u32 %v5134, 7
    %v5136 = vsub.s32 %v527, %v5135
    %v5137 = vrot.slane %v5109, %v5136
    %v5138 = vlaneseq
    %v5139 = vshrl.u32 %v5138, 7
    %v5140 = vsub.s32 %v527, %v5139
    %v5141 = vrot.slane %v5112, %v5140
    %v5142 = vlaneseq
    %v5143 = vshrl.u32 %v5142, 7
    %v5144 = vsub.s32 %v527, %v5143
    %v5145 = vrot.slane %v5115, %v5144
    %v5146 = vlaneseq
    %v5147 = vshrl.u32 %v5146, 7
    %v5148 = vsub.s32 %v527, %v5147
    %v5149 = vrot.slane %v5118, %v5148
    %v5150 = vlaneseq
    %v5151 = vshrl.u32 %v5150, 7
    %v5152 = vsub.s32 %v527, %v5151
    %v5153 = vrot.slane %v5121, %v5152
    %v5154 = vsel %vm560, %v5129, %v5125
    %v5155 = vsel %vm562, %v5133, %v5154
    %v5156 = vsel %vm564, %v5137, %v5155
    %v5157 = vsel %vm566, %v5141, %v5156
    %v5158 = vsel %vm568, %v5145, %v5157
    %v5159 = vsel %vm570, %v5149, %v5158
    %v5160 = vsel %vm572, %v5153, %v5159
    %v5162 = vsel %vm575, %v5160, 0.0
    %5163 = vadd.xlane.f32.xlu0 %v5162
    %v5164 = vpop.xlane.xlu0 %5163
    %v5165 = vrcp.pop %v5164
    %v5167 = vlaneseq
    %v5168 = vshrl.u32 %v5167, 7
    %v5169 = vsub.s32 0, %v5168
    %v5170 = vrot.slane %v5165, %v5169
    %v5171 = vlaneseq
    %v5172 = vshrl.u32 %v5171, 7
    %v5173 = vsub.s32 1, %v5172
    %v5174 = vrot.slane %v5165, %v5173
    %v5175 = vlaneseq
    %v5176 = vshrl.u32 %v5175, 7
    %v5177 = vsub.s32 2, %v5176
    %v5178 = vrot.slane %v5165, %v5177
    %v5179 = vlaneseq
    %v5180 = vshrl.u32 %v5179, 7
    %v5181 = vsub.s32 3, %v5180
    %v5182 = vrot.slane %v5165, %v5181
    %v5183 = vlaneseq
    %v5184 = vshrl.u32 %v5183, 7
    %v5185 = vsub.s32 4, %v5184
    %v5186 = vrot.slane %v5165, %v5185
    %v5187 = vlaneseq
    %v5188 = vshrl.u32 %v5187, 7
    %v5189 = vsub.s32 5, %v5188
    %v5190 = vrot.slane %v5165, %v5189
    %v5191 = vlaneseq
    %v5192 = vshrl.u32 %v5191, 7
    %v5193 = vsub.s32 6, %v5192
    %v5194 = vrot.slane %v5165, %v5193
    %v5195 = vlaneseq
    %v5196 = vshrl.u32 %v5195, 7
    %v5197 = vsub.s32 7, %v5196
    %v5198 = vrot.slane %v5165, %v5197
    %v5207 = vmul.f32 %v5075, %v5170
    %v5208 = vmul.f32 %v5077, %v5174
    %v5209 = vmul.f32 %v5079, %v5178
    %v5210 = vmul.f32 %v5081, %v5182
    %v5211 = vmul.f32 %v5083, %v5186
    %v5212 = vmul.f32 %v5085, %v5190
    %v5213 = vmul.f32 %v5087, %v5194
    %v5214 = vmul.f32 %v5089, %v5198
    %5216 = vset.pattern.permute.xlu0 0
    %5217 = vperm.xlu0 %5216, %v5207
    %v5218 = vpop.permute.xlu0 %5217
    %5221 = vset.pattern.permute.xlu0 0
    %5222 = vperm.xlu0 %5221, %v5208
    %v5223 = vpop.permute.xlu0 %5222
    %5226 = vset.pattern.permute.xlu0 0
    %5227 = vperm.xlu0 %5226, %v5209
    %v5228 = vpop.permute.xlu0 %5227
    %5231 = vset.pattern.permute.xlu0 0
    %5232 = vperm.xlu0 %5231, %v5210
    %v5233 = vpop.permute.xlu0 %5232
    %5236 = vset.pattern.permute.xlu0 0
    %5237 = vperm.xlu0 %5236, %v5211
    %v5238 = vpop.permute.xlu0 %5237
    %5241 = vset.pattern.permute.xlu0 0
    %5242 = vperm.xlu0 %5241, %v5212
    %v5243 = vpop.permute.xlu0 %5242
    %5246 = vset.pattern.permute.xlu0 0
    %5247 = vperm.xlu0 %5246, %v5213
    %v5248 = vpop.permute.xlu0 %5247
    %5251 = vset.pattern.permute.xlu0 0
    %5252 = vperm.xlu0 %5251, %v5214
    %v5253 = vpop.permute.xlu0 %5252
    %v5255 = vmul.f32 %v5218, %v107
    %v5256 = vmul.f32 %v5223, %v108
    %v5257 = vmul.f32 %v5228, %v109
    %v5258 = vmul.f32 %v5233, %v110
    %v5259 = vmul.f32 %v5238, %v111
    %v5260 = vmul.f32 %v5243, %v112
    %v5261 = vmul.f32 %v5248, %v113
    %v5262 = vmul.f32 %v5253, %v114
    %v5263 = vsel %vm146, %v5255, 0.0
    %v5264 = vrot.slane %v5263, 4
    %v5265 = vadd.f32 %v5263, %v5264
    %v5266 = vrot.slane %v5265, 2
    %v5267 = vadd.f32 %v5265, %v5266
    %v5268 = vrot.slane %v5267, 1
    %v5269 = vadd.f32 %v5267, %v5268
    %v5270 = vsel %vm146, %v5256, 0.0
    %v5271 = vrot.slane %v5270, 4
    %v5272 = vadd.f32 %v5270, %v5271
    %v5273 = vrot.slane %v5272, 2
    %v5274 = vadd.f32 %v5272, %v5273
    %v5275 = vrot.slane %v5274, 1
    %v5276 = vadd.f32 %v5274, %v5275
    %v5277 = vsel %vm146, %v5257, 0.0
    %v5278 = vrot.slane %v5277, 4
    %v5279 = vadd.f32 %v5277, %v5278
    %v5280 = vrot.slane %v5279, 2
    %v5281 = vadd.f32 %v5279, %v5280
    %v5282 = vrot.slane %v5281, 1
    %v5283 = vadd.f32 %v5281, %v5282
    %v5284 = vsel %vm146, %v5258, 0.0
    %v5285 = vrot.slane %v5284, 4
    %v5286 = vadd.f32 %v5284, %v5285
    %v5287 = vrot.slane %v5286, 2
    %v5288 = vadd.f32 %v5286, %v5287
    %v5289 = vrot.slane %v5288, 1
    %v5290 = vadd.f32 %v5288, %v5289
    %v5291 = vsel %vm146, %v5259, 0.0
    %v5292 = vrot.slane %v5291, 4
    %v5293 = vadd.f32 %v5291, %v5292
    %v5294 = vrot.slane %v5293, 2
    %v5295 = vadd.f32 %v5293, %v5294
    %v5296 = vrot.slane %v5295, 1
    %v5297 = vadd.f32 %v5295, %v5296
    %v5298 = vsel %vm146, %v5260, 0.0
    %v5299 = vrot.slane %v5298, 4
    %v5300 = vadd.f32 %v5298, %v5299
    %v5301 = vrot.slane %v5300, 2
    %v5302 = vadd.f32 %v5300, %v5301
    %v5303 = vrot.slane %v5302, 1
    %v5304 = vadd.f32 %v5302, %v5303
    %v5305 = vsel %vm146, %v5261, 0.0
    %v5306 = vrot.slane %v5305, 4
    %v5307 = vadd.f32 %v5305, %v5306
    %v5308 = vrot.slane %v5307, 2
    %v5309 = vadd.f32 %v5307, %v5308
    %v5310 = vrot.slane %v5309, 1
    %v5311 = vadd.f32 %v5309, %v5310
    %v5312 = vsel %vm146, %v5262, 0.0
    %v5313 = vrot.slane %v5312, 4
    %v5314 = vadd.f32 %v5312, %v5313
    %v5315 = vrot.slane %v5314, 2
    %v5316 = vadd.f32 %v5314, %v5315
    %v5317 = vrot.slane %v5316, 1
    %v5318 = vadd.f32 %v5316, %v5317
    %v5327 = vsel %vm560, %v5276, %v5269
    %v5328 = vsel %vm562, %v5283, %v5327
    %v5329 = vsel %vm564, %v5290, %v5328
    %v5330 = vsel %vm566, %v5297, %v5329
    %v5331 = vsel %vm568, %v5304, %v5330
    %v5332 = vsel %vm570, %v5311, %v5331
    %v5333 = vsel %vm572, %v5318, %v5332
    %v5334 = vsel %vm146, %v5333, 0
    %5336 = vmatprep.subr.mxu0 0.0
    %5337 = vmatpush1.msra.mxu0 %v123
    %5338 = vmatprep.subr.mxu0 0.0
    %5339 = vmatpush1.msra.mxu0 %v124
    %5340 = vmatprep.subr.mxu0 0.0
    %5341 = vmatpush1.msra.mxu0 %v125
    %5342 = vmatprep.subr.mxu0 0.0
    %5343 = vmatpush1.msra.mxu0 %v126
    %5344 = vmatprep.subr.mxu0 0.0
    %5345 = vmatpush1.msra.mxu0 0.0
    %5346 = vmatprep.subr.mxu0 0.0
    %5347 = vmatpush1.msra.mxu0 0.0
    %5348 = vmatprep.subr.mxu0 0.0
    %5349 = vmatpush1.msra.mxu0 0.0
    %5350 = vmatprep.subr.mxu0 0.0
    %5351 = vmatpush1.msra.mxu0 0.0
    %5352 = vmatprep.subr.mxu0 0.0
    %5353 = vmatpush1.msra.mxu0 0.0
    %5354 = vmatprep.subr.mxu0 0.0
    %5355 = vmatpush1.msra.mxu0 0.0
    %5356 = vmatprep.subr.mxu0 0.0
    %5357 = vmatpush1.msra.mxu0 0.0
    %5358 = vmatprep.subr.mxu0 0.0
    %5359 = vmatpush1.msra.mxu0 0.0
    %5360 = vmatprep.subr.mxu0 0.0
    %5361 = vmatpush1.msra.mxu0 0.0
    %5362 = vmatprep.subr.mxu0 0.0
    %5363 = vmatpush1.msra.mxu0 0.0
    %5364 = vmatprep.subr.mxu0 0.0
    %5365 = vmatpush1.msra.mxu0 0.0
    %5366 = vmatprep.subr.mxu0 0.0
    %5367 = vmatpush1.msra.mxu0 0.0
    %5368 = vmatprep.subr.mxu0 0.0
    %5369 = vmatpush1.msra.mxu0 0.0
    %5370 = vmatprep.subr.mxu0 0.0
    %5371 = vmatpush1.msra.mxu0 0.0
    %5372 = vmatprep.subr.mxu0 0.0
    %5373 = vmatpush1.msra.mxu0 0.0
    %5374 = vmatprep.subr.mxu0 0.0
    %5375 = vmatpush1.msra.mxu0 0.0
    %5376 = vmatprep.subr.mxu0 0.0
    %5377 = vmatpush1.msra.mxu0 0.0
    %5378 = vmatprep.subr.mxu0 0.0
    %5379 = vmatpush1.msra.mxu0 0.0
    %5380 = vmatprep.subr.mxu0 0.0
    %5381 = vmatpush1.msra.mxu0 0.0
    %5382 = vmatprep.subr.mxu0 0.0
    %5383 = vmatpush1.msra.mxu0 0.0
    %5384 = vmatprep.subr.mxu0 0.0
    %5385 = vmatpush1.msra.mxu0 0.0
    %5386 = vmatprep.subr.mxu0 0.0
    %5387 = vmatpush1.msra.mxu0 0.0
    %5388 = vmatprep.subr.mxu0 0.0
    %5389 = vmatpush1.msra.mxu0 0.0
    %5390 = vmatprep.subr.mxu0 0.0
    %5391 = vmatpush1.msra.mxu0 0.0
    %5392 = vmatprep.subr.mxu0 0.0
    %5393 = vmatpush1.msra.mxu0 0.0
    %5394 = vmatprep.subr.mxu0 0.0
    %5395 = vmatpush1.msra.mxu0 0.0
    %5396 = vmatprep.subr.mxu0 0.0
    %5397 = vmatpush1.msra.mxu0 0.0
    %5398 = vmatprep.subr.mxu0 0.0
    %5399 = vmatpush1.msra.mxu0 0.0
    %5400 = vmatprep.mubr.f32.mxu0 0.0
    %5401 = vmatmul.mubr.f32.gmra.mrb[0].mxu0 %v5334
    %v5402 = vpop.f32.mrb[0].mxu0
    %v5403 = vadd.f32 0.0, %v5402
    %v5404 = vpop.f32.mrb[0].mxu0
    %5405 = vdwg.mxu0
    %5406 = vrot.lane.b32.xlu0 %v4835, 32
    %v5407 = vpop.permute.xlu0 %5406
    %v5408 = vsel %vm146, %v5407, 0
    %5410 = vmatprep.subr.mxu0 0.0
    %5411 = vmatpush1.msra.mxu0 %v119
    %5412 = vmatprep.subr.mxu0 0.0
    %5413 = vmatpush1.msra.mxu0 %v120
    %5414 = vmatprep.subr.mxu0 0.0
    %5415 = vmatpush1.msra.mxu0 %v121
    %5416 = vmatprep.subr.mxu0 0.0
    %5417 = vmatpush1.msra.mxu0 %v122
    %5418 = vmatprep.subr.mxu0 0.0
    %5419 = vmatpush1.msra.mxu0 0.0
    %5420 = vmatprep.subr.mxu0 0.0
    %5421 = vmatpush1.msra.mxu0 0.0
    %5422 = vmatprep.subr.mxu0 0.0
    %5423 = vmatpush1.msra.mxu0 0.0
    %5424 = vmatprep.subr.mxu0 0.0
    %5425 = vmatpush1.msra.mxu0 0.0
    %5426 = vmatprep.subr.mxu0 0.0
    %5427 = vmatpush1.msra.mxu0 0.0
    %5428 = vmatprep.subr.mxu0 0.0
    %5429 = vmatpush1.msra.mxu0 0.0
    %5430 = vmatprep.subr.mxu0 0.0
    %5431 = vmatpush1.msra.mxu0 0.0
    %5432 = vmatprep.subr.mxu0 0.0
    %5433 = vmatpush1.msra.mxu0 0.0
    %5434 = vmatprep.subr.mxu0 0.0
    %5435 = vmatpush1.msra.mxu0 0.0
    %5436 = vmatprep.subr.mxu0 0.0
    %5437 = vmatpush1.msra.mxu0 0.0
    %5438 = vmatprep.subr.mxu0 0.0
    %5439 = vmatpush1.msra.mxu0 0.0
    %5440 = vmatprep.subr.mxu0 0.0
    %5441 = vmatpush1.msra.mxu0 0.0
    %5442 = vmatprep.subr.mxu0 0.0
    %5443 = vmatpush1.msra.mxu0 0.0
    %5444 = vmatprep.subr.mxu0 0.0
    %5445 = vmatpush1.msra.mxu0 0.0
    %5446 = vmatprep.subr.mxu0 0.0
    %5447 = vmatpush1.msra.mxu0 0.0
    %5448 = vmatprep.subr.mxu0 0.0
    %5449 = vmatpush1.msra.mxu0 0.0
    %5450 = vmatprep.subr.mxu0 0.0
    %5451 = vmatpush1.msra.mxu0 0.0
    %5452 = vmatprep.subr.mxu0 0.0
    %5453 = vmatpush1.msra.mxu0 0.0
    %5454 = vmatprep.subr.mxu0 0.0
    %5455 = vmatpush1.msra.mxu0 0.0
    %5456 = vmatprep.subr.mxu0 0.0
    %5457 = vmatpush1.msra.mxu0 0.0
    %5458 = vmatprep.subr.mxu0 0.0
    %5459 = vmatpush1.msra.mxu0 0.0
    %5460 = vmatprep.subr.mxu0 0.0
    %5461 = vmatpush1.msra.mxu0 0.0
    %5462 = vmatprep.subr.mxu0 0.0
    %5463 = vmatpush1.msra.mxu0 0.0
    %5464 = vmatprep.subr.mxu0 0.0
    %5465 = vmatpush1.msra.mxu0 0.0
    %5466 = vmatprep.subr.mxu0 0.0
    %5467 = vmatpush1.msra.mxu0 0.0
    %5468 = vmatprep.subr.mxu0 0.0
    %5469 = vmatpush1.msra.mxu0 0.0
    %5470 = vmatprep.subr.mxu0 0.0
    %5471 = vmatpush1.msra.mxu0 0.0
    %5472 = vmatprep.subr.mxu0 0.0
    %5473 = vmatpush1.msra.mxu0 0.0
    %5474 = vmatprep.mubr.f32.mxu0 0.0
    %5475 = vmatmul.mubr.f32.gmra.mrb[0].mxu0 %v5408
    %v5476 = vpop.f32.mrb[0].mxu0
    %v5477 = vadd.f32 %v5403, %v5476
    %v5478 = vpop.f32.mrb[0].mxu0
    %5479 = vdwg.mxu0
    %v5480 = vtanh.pop %v5477
    %5481 = vst.msk [vmem:[#allocation2 + $0x30] sm:$0xff] %vm146, %v5480
    %5482 = vmatprep.subr.mxu0 0.0
    %5483 = vmatpush1.msra.mxu0 %v115
    %5484 = vmatprep.subr.mxu0 0.0
    %5485 = vmatpush1.msra.mxu0 %v116
    %5486 = vmatprep.subr.mxu0 0.0
    %5487 = vmatpush1.msra.mxu0 %v117
    %5488 = vmatprep.subr.mxu0 0.0
    %5489 = vmatpush1.msra.mxu0 %v118
    %5490 = vmatprep.subr.mxu0 0.0
    %5491 = vmatpush1.msra.mxu0 0.0
    %5492 = vmatprep.subr.mxu0 0.0
    %5493 = vmatpush1.msra.mxu0 0.0
    %5494 = vmatprep.subr.mxu0 0.0
    %5495 = vmatpush1.msra.mxu0 0.0
    %5496 = vmatprep.subr.mxu0 0.0
    %5497 = vmatpush1.msra.mxu0 0.0
    %5498 = vmatprep.subr.mxu0 0.0
    %5499 = vmatpush1.msra.mxu0 0.0
    %5500 = vmatprep.subr.mxu0 0.0
    %5501 = vmatpush1.msra.mxu0 0.0
    %5502 = vmatprep.subr.mxu0 0.0
    %5503 = vmatpush1.msra.mxu0 0.0
    %5504 = vmatprep.subr.mxu0 0.0
    %5505 = vmatpush1.msra.mxu0 0.0
    %5506 = vmatprep.subr.mxu0 0.0
    %5507 = vmatpush1.msra.mxu0 0.0
    %5508 = vmatprep.subr.mxu0 0.0
    %5509 = vmatpush1.msra.mxu0 0.0
    %5510 = vmatprep.subr.mxu0 0.0
    %5511 = vmatpush1.msra.mxu0 0.0
    %5512 = vmatprep.subr.mxu0 0.0
    %5513 = vmatpush1.msra.mxu0 0.0
    %5514 = vmatprep.subr.mxu0 0.0
    %5515 = vmatpush1.msra.mxu0 0.0
    %5516 = vmatprep.subr.mxu0 0.0
    %5517 = vmatpush1.msra.mxu0 0.0
    %5518 = vmatprep.subr.mxu0 0.0
    %5519 = vmatpush1.msra.mxu0 0.0
    %5520 = vmatprep.subr.mxu0 0.0
    %5521 = vmatpush1.msra.mxu0 0.0
    %5522 = vmatprep.subr.mxu0 0.0
    %5523 = vmatpush1.msra.mxu0 0.0
    %5524 = vmatprep.subr.mxu0 0.0
    %5525 = vmatpush1.msra.mxu0 0.0
    %5526 = vmatprep.subr.mxu0 0.0
    %5527 = vmatpush1.msra.mxu0 0.0
    %5528 = vmatprep.subr.mxu0 0.0
    %5529 = vmatpush1.msra.mxu0 0.0
    %5530 = vmatprep.subr.mxu0 0.0
    %5531 = vmatpush1.msra.mxu0 0.0
    %5532 = vmatprep.subr.mxu0 0.0
    %5533 = vmatpush1.msra.mxu0 0.0
    %5534 = vmatprep.subr.mxu0 0.0
    %5535 = vmatpush1.msra.mxu0 0.0
    %5536 = vmatprep.subr.mxu0 0.0
    %5537 = vmatpush1.msra.mxu0 0.0
    %5538 = vmatprep.subr.mxu0 0.0
    %5539 = vmatpush1.msra.mxu0 0.0
    %5540 = vmatprep.subr.mxu0 0.0
    %5541 = vmatpush1.msra.mxu0 0.0
    %5542 = vmatprep.subr.mxu0 0.0
    %5543 = vmatpush1.msra.mxu0 0.0
    %5544 = vmatprep.subr.mxu0 0.0
    %5545 = vmatpush1.msra.mxu0 0.0
    %5546 = vmatprep.mubr.f32.mxu0 0.0
    %5547 = vmatmul.mubr.f32.gmra.mrb[0].mxu0 %v5408
    %v5548 = vpop.f32.mrb[0].mxu0
    %v5549 = vadd.f32 0.0, %v5548
    %v5550 = vpop.f32.mrb[0].mxu0
    %5551 = vdwg.mxu0
    %v5552 = vadd.f32 %v273, %v5549
    %v5553 = vxor.u32 %v5552, 2147483648
    %v5554 = vmul.f32 %v5553, 1.442695
    %v5555 = vpow.pop %v5554
    %v5556 = vadd.f32 %v5555, 1.0
    %v5557 = vrcp.pop %v5556
    %v5558 = vmul.f32 1.0, %v5557
    %v5559 = vtanh.pop %v5552
    %v5560 = vmul.f32 %v5558, %v4829
    %5562 = vrot.lane.b32.xlu0 %v5559, 64
    %v5563 = vpop.permute.xlu0 %5562
    %v5565 = vmul.f32 %v5558, %v5563
    %5567 = vrot.lane.b32.xlu0 %v5565, 32
    %v5568 = vpop.permute.xlu0 %5567
    %v5570 = vadd.f32 %v5560, %v5568
    %v5571 = vtanh.pop %v5570
    %5573 = vrot.lane.b32.xlu0 %v5571, 64
    %v5574 = vpop.permute.xlu0 %5573
    %v5576 = vmul.f32 %v5558, %v5574
    %v5578 = vcombine.high %v5576, %v5576
    %v5580 = vunpack.c.l.s4 1966171168
    %v5581 = vunpack.c.0.s8 %v5580
    %v5582 = vlaneseq
    %v5583 = vshrl.u32 %v5582, 7
    %v5584 = vsub.s32 %v5581, %v5583
    %v5585 = vrot.slane %v5576, %v5584
    %v5587 = vunpack.c.l.s4 1966171168
    %v5588 = vunpack.c.0.s8 %v5587
    %v5589 = vlaneseq
    %v5590 = vshrl.u32 %v5589, 7
    %v5591 = vsub.s32 %v5588, %v5590
    %v5592 = vrot.slane %v5578, %v5591
    %v5593 = vcombine.high %v5585, %v5585
    %v5594 = vcombine.high %v5592, %v5592
    %v5596 = vunpack.c.l.s4 1966171168
    %v5597 = vunpack.c.0.s8 %v5596
    %v5598 = vlaneseq
    %v5599 = vshrl.u32 %v5598, 7
    %v5600 = vsub.s32 %v5597, %v5599
    %v5601 = vrot.slane %v5585, %v5600
    %v5603 = vunpack.c.l.s4 1966171168
    %v5604 = vunpack.c.0.s8 %v5603
    %v5605 = vlaneseq
    %v5606 = vshrl.u32 %v5605, 7
    %v5607 = vsub.s32 %v5604, %v5606
    %v5608 = vrot.slane %v5592, %v5607
    %v5610 = vunpack.c.l.s4 1966171168
    %v5611 = vunpack.c.0.s8 %v5610
    %v5612 = vlaneseq
    %v5613 = vshrl.u32 %v5612, 7
    %v5614 = vsub.s32 %v5611, %v5613
    %v5615 = vrot.slane %v5593, %v5614
    %v5617 = vunpack.c.l.s4 1966171168
    %v5618 = vunpack.c.0.s8 %v5617
    %v5619 = vlaneseq
    %v5620 = vshrl.u32 %v5619, 7
    %v5621 = vsub.s32 %v5618, %v5620
    %v5622 = vrot.slane %v5594, %v5621
    %v5623 = vcombine.high %v5601, %v5601
    %v5624 = vcombine.high %v5608, %v5608
    %v5625 = vcombine.high %v5615, %v5615
    %v5626 = vcombine.high %v5622, %v5622
    %v5627 = vlaneseq
    %v5628 = vshrl.u32 %v5627, 7
    %v5629 = vsub.s32 0, %v5628
    %v5630 = vrot.slane %v5601, %v5629
    %v5631 = vlaneseq
    %v5632 = vshrl.u32 %v5631, 7
    %v5633 = vsub.s32 0, %v5632
    %v5634 = vrot.slane %v5615, %v5633
    %v5635 = vlaneseq
    %v5636 = vshrl.u32 %v5635, 7
    %v5637 = vsub.s32 0, %v5636
    %v5638 = vrot.slane %v5623, %v5637
    %v5639 = vlaneseq
    %v5640 = vshrl.u32 %v5639, 7
    %v5641 = vsub.s32 0, %v5640
    %v5642 = vrot.slane %v5625, %v5641
    %v5643 = vlaneseq
    %v5644 = vshrl.u32 %v5643, 7
    %v5645 = vsub.s32 0, %v5644
    %v5646 = vrot.slane %v5608, %v5645
    %v5647 = vlaneseq
    %v5648 = vshrl.u32 %v5647, 7
    %v5649 = vsub.s32 0, %v5648
    %v5650 = vrot.slane %v5622, %v5649
    %v5651 = vlaneseq
    %v5652 = vshrl.u32 %v5651, 7
    %v5653 = vsub.s32 0, %v5652
    %v5654 = vrot.slane %v5624, %v5653
    %v5655 = vlaneseq
    %v5656 = vshrl.u32 %v5655, 7
    %v5657 = vsub.s32 0, %v5656
    %v5658 = vrot.slane %v5626, %v5657
    %5659 = vrot.lane.b32.xlu0 %v5630, 32
    %v5660 = vpop.permute.xlu0 %5659
    %5661 = vrot.lane.b32.xlu0 %v5634, 32
    %v5662 = vpop.permute.xlu0 %5661
    %5663 = vrot.lane.b32.xlu0 %v5638, 32
    %v5664 = vpop.permute.xlu0 %5663
    %5665 = vrot.lane.b32.xlu0 %v5642, 32
    %v5666 = vpop.permute.xlu0 %5665
    %5667 = vrot.lane.b32.xlu0 %v5646, 32
    %v5668 = vpop.permute.xlu0 %5667
    %5669 = vrot.lane.b32.xlu0 %v5650, 32
    %v5670 = vpop.permute.xlu0 %5669
    %5671 = vrot.lane.b32.xlu0 %v5654, 32
    %v5672 = vpop.permute.xlu0 %5671
    %5673 = vrot.lane.b32.xlu0 %v5658, 32
    %v5674 = vpop.permute.xlu0 %5673
    %v5683 = vmul.f32 %v107, %v5660
    %v5684 = vmul.f32 %v108, %v5662
    %v5685 = vmul.f32 %v109, %v5664
    %v5686 = vmul.f32 %v110, %v5666
    %v5687 = vmul.f32 %v111, %v5668
    %v5688 = vmul.f32 %v112, %v5670
    %v5689 = vmul.f32 %v113, %v5672
    %v5690 = vmul.f32 %v114, %v5674
    %v5691 = vsel %vm146, %v5683, 0.0
    %5692 = vadd.xlane.f32.xlu0 %v5691
    %v5693 = vpop.xlane.xlu0 %5692
    %v5694 = vsel %vm146, %v5684, 0.0
    %5695 = vadd.xlane.f32.xlu0 %v5694
    %v5696 = vpop.xlane.xlu0 %5695
    %v5697 = vsel %vm146, %v5685, 0.0
    %5698 = vadd.xlane.f32.xlu0 %v5697
    %v5699 = vpop.xlane.xlu0 %5698
    %v5700 = vsel %vm146, %v5686, 0.0
    %5701 = vadd.xlane.f32.xlu0 %v5700
    %v5702 = vpop.xlane.xlu0 %5701
    %v5703 = vsel %vm146, %v5687, 0.0
    %5704 = vadd.xlane.f32.xlu0 %v5703
    %v5705 = vpop.xlane.xlu0 %5704
    %v5706 = vsel %vm146, %v5688, 0.0
    %5707 = vadd.xlane.f32.xlu0 %v5706
    %v5708 = vpop.xlane.xlu0 %5707
    %v5709 = vsel %vm146, %v5689, 0.0
    %5710 = vadd.xlane.f32.xlu0 %v5709
    %v5711 = vpop.xlane.xlu0 %5710
    %v5712 = vsel %vm146, %v5690, 0.0
    %5713 = vadd.xlane.f32.xlu0 %v5712
    %v5714 = vpop.xlane.xlu0 %5713
    %v5723 = vlaneseq
    %v5724 = vshrl.u32 %v5723, 7
    %v5725 = vsub.s32 %v527, %v5724
    %v5726 = vrot.slane %v5693, %v5725
    %v5727 = vlaneseq
    %v5728 = vshrl.u32 %v5727, 7
    %v5729 = vsub.s32 %v527, %v5728
    %v5730 = vrot.slane %v5696, %v5729
    %v5731 = vlaneseq
    %v5732 = vshrl.u32 %v5731, 7
    %v5733 = vsub.s32 %v527, %v5732
    %v5734 = vrot.slane %v5699, %v5733
    %v5735 = vlaneseq
    %v5736 = vshrl.u32 %v5735, 7
    %v5737 = vsub.s32 %v527, %v5736
    %v5738 = vrot.slane %v5702, %v5737
    %v5739 = vlaneseq
    %v5740 = vshrl.u32 %v5739, 7
    %v5741 = vsub.s32 %v527, %v5740
    %v5742 = vrot.slane %v5705, %v5741
    %v5743 = vlaneseq
    %v5744 = vshrl.u32 %v5743, 7
    %v5745 = vsub.s32 %v527, %v5744
    %v5746 = vrot.slane %v5708, %v5745
    %v5747 = vlaneseq
    %v5748 = vshrl.u32 %v5747, 7
    %v5749 = vsub.s32 %v527, %v5748
    %v5750 = vrot.slane %v5711, %v5749
    %v5751 = vlaneseq
    %v5752 = vshrl.u32 %v5751, 7
    %v5753 = vsub.s32 %v527, %v5752
    %v5754 = vrot.slane %v5714, %v5753
    %v5755 = vsel %vm560, %v5730, %v5726
    %v5756 = vsel %vm562, %v5734, %v5755
    %v5757 = vsel %vm564, %v5738, %v5756
    %v5758 = vsel %vm566, %v5742, %v5757
    %v5759 = vsel %vm568, %v5746, %v5758
    %v5760 = vsel %vm570, %v5750, %v5759
    %v5761 = vsel %vm572, %v5754, %v5760
    %v5763 = vsel %vm575, %v5761, -inf
    %5764 = vmax.xlane.f32.xlu0 %v5763
    %v5765 = vpop.xlane.xlu0 %5764
    %v5767 = vlaneseq
    %v5768 = vshrl.u32 %v5767, 7
    %v5769 = vsub.s32 0, %v5768
    %v5770 = vrot.slane %v5765, %v5769
    %v5771 = vlaneseq
    %v5772 = vshrl.u32 %v5771, 7
    %v5773 = vsub.s32 1, %v5772
    %v5774 = vrot.slane %v5765, %v5773
    %v5775 = vlaneseq
    %v5776 = vshrl.u32 %v5775, 7
    %v5777 = vsub.s32 2, %v5776
    %v5778 = vrot.slane %v5765, %v5777
    %v5779 = vlaneseq
    %v5780 = vshrl.u32 %v5779, 7
    %v5781 = vsub.s32 3, %v5780
    %v5782 = vrot.slane %v5765, %v5781
    %v5783 = vlaneseq
    %v5784 = vshrl.u32 %v5783, 7
    %v5785 = vsub.s32 4, %v5784
    %v5786 = vrot.slane %v5765, %v5785
    %v5787 = vlaneseq
    %v5788 = vshrl.u32 %v5787, 7
    %v5789 = vsub.s32 5, %v5788
    %v5790 = vrot.slane %v5765, %v5789
    %v5791 = vlaneseq
    %v5792 = vshrl.u32 %v5791, 7
    %v5793 = vsub.s32 6, %v5792
    %v5794 = vrot.slane %v5765, %v5793
    %v5795 = vlaneseq
    %v5796 = vshrl.u32 %v5795, 7
    %v5797 = vsub.s32 7, %v5796
    %v5798 = vrot.slane %v5765, %v5797
    %v5807 = vsub.f32 %v5693, %v5770
    %v5808 = vsub.f32 %v5696, %v5774
    %v5809 = vsub.f32 %v5699, %v5778
    %v5810 = vsub.f32 %v5702, %v5782
    %v5811 = vsub.f32 %v5705, %v5786
    %v5812 = vsub.f32 %v5708, %v5790
    %v5813 = vsub.f32 %v5711, %v5794
    %v5814 = vsub.f32 %v5714, %v5798
    %v5815 = vmul.f32 %v5807, 1.442695
    %v5816 = vpow.pop %v5815
    %v5817 = vmul.f32 %v5808, 1.442695
    %v5818 = vpow.pop %v5817
    %v5819 = vmul.f32 %v5809, 1.442695
    %v5820 = vpow.pop %v5819
    %v5821 = vmul.f32 %v5810, 1.442695
    %v5822 = vpow.pop %v5821
    %v5823 = vmul.f32 %v5811, 1.442695
    %v5824 = vpow.pop %v5823
    %v5825 = vmul.f32 %v5812, 1.442695
    %v5826 = vpow.pop %v5825
    %v5827 = vmul.f32 %v5813, 1.442695
    %v5828 = vpow.pop %v5827
    %v5829 = vmul.f32 %v5814, 1.442695
    %v5830 = vpow.pop %v5829
    %5839 = vset.pattern.permute.xlu0 0
    %5840 = vperm.xlu0 %5839, %v5816
    %v5841 = vpop.permute.xlu0 %5840
    %5842 = vset.pattern.permute.xlu0 0
    %5843 = vperm.xlu0 %5842, %v5818
    %v5844 = vpop.permute.xlu0 %5843
    %5845 = vset.pattern.permute.xlu0 0
    %5846 = vperm.xlu0 %5845, %v5820
    %v5847 = vpop.permute.xlu0 %5846
    %5848 = vset.pattern.permute.xlu0 0
    %5849 = vperm.xlu0 %5848, %v5822
    %v5850 = vpop.permute.xlu0 %5849
    %5851 = vset.pattern.permute.xlu0 0
    %5852 = vperm.xlu0 %5851, %v5824
    %v5853 = vpop.permute.xlu0 %5852
    %5854 = vset.pattern.permute.xlu0 0
    %5855 = vperm.xlu0 %5854, %v5826
    %v5856 = vpop.permute.xlu0 %5855
    %5857 = vset.pattern.permute.xlu0 0
    %5858 = vperm.xlu0 %5857, %v5828
    %v5859 = vpop.permute.xlu0 %5858
    %5860 = vset.pattern.permute.xlu0 0
    %5861 = vperm.xlu0 %5860, %v5830
    %v5862 = vpop.permute.xlu0 %5861
    %v5863 = vlaneseq
    %v5864 = vshrl.u32 %v5863, 7
    %v5865 = vsub.s32 %v527, %v5864
    %v5866 = vrot.slane %v5841, %v5865
    %v5867 = vlaneseq
    %v5868 = vshrl.u32 %v5867, 7
    %v5869 = vsub.s32 %v527, %v5868
    %v5870 = vrot.slane %v5844, %v5869
    %v5871 = vlaneseq
    %v5872 = vshrl.u32 %v5871, 7
    %v5873 = vsub.s32 %v527, %v5872
    %v5874 = vrot.slane %v5847, %v5873
    %v5875 = vlaneseq
    %v5876 = vshrl.u32 %v5875, 7
    %v5877 = vsub.s32 %v527, %v5876
    %v5878 = vrot.slane %v5850, %v5877
    %v5879 = vlaneseq
    %v5880 = vshrl.u32 %v5879, 7
    %v5881 = vsub.s32 %v527, %v5880
    %v5882 = vrot.slane %v5853, %v5881
    %v5883 = vlaneseq
    %v5884 = vshrl.u32 %v5883, 7
    %v5885 = vsub.s32 %v527, %v5884
    %v5886 = vrot.slane %v5856, %v5885
    %v5887 = vlaneseq
    %v5888 = vshrl.u32 %v5887, 7
    %v5889 = vsub.s32 %v527, %v5888
    %v5890 = vrot.slane %v5859, %v5889
    %v5891 = vlaneseq
    %v5892 = vshrl.u32 %v5891, 7
    %v5893 = vsub.s32 %v527, %v5892
    %v5894 = vrot.slane %v5862, %v5893
    %v5895 = vsel %vm560, %v5870, %v5866
    %v5896 = vsel %vm562, %v5874, %v5895
    %v5897 = vsel %vm564, %v5878, %v5896
    %v5898 = vsel %vm566, %v5882, %v5897
    %v5899 = vsel %vm568, %v5886, %v5898
    %v5900 = vsel %vm570, %v5890, %v5899
    %v5901 = vsel %vm572, %v5894, %v5900
    %v5903 = vsel %vm575, %v5901, 0.0
    %5904 = vadd.xlane.f32.xlu0 %v5903
    %v5905 = vpop.xlane.xlu0 %5904
    %v5906 = vrcp.pop %v5905
    %v5908 = vlaneseq
    %v5909 = vshrl.u32 %v5908, 7
    %v5910 = vsub.s32 0, %v5909
    %v5911 = vrot.slane %v5906, %v5910
    %v5912 = vlaneseq
    %v5913 = vshrl.u32 %v5912, 7
    %v5914 = vsub.s32 1, %v5913
    %v5915 = vrot.slane %v5906, %v5914
    %v5916 = vlaneseq
    %v5917 = vshrl.u32 %v5916, 7
    %v5918 = vsub.s32 2, %v5917
    %v5919 = vrot.slane %v5906, %v5918
    %v5920 = vlaneseq
    %v5921 = vshrl.u32 %v5920, 7
    %v5922 = vsub.s32 3, %v5921
    %v5923 = vrot.slane %v5906, %v5922
    %v5924 = vlaneseq
    %v5925 = vshrl.u32 %v5924, 7
    %v5926 = vsub.s32 4, %v5925
    %v5927 = vrot.slane %v5906, %v5926
    %v5928 = vlaneseq
    %v5929 = vshrl.u32 %v5928, 7
    %v5930 = vsub.s32 5, %v5929
    %v5931 = vrot.slane %v5906, %v5930
    %v5932 = vlaneseq
    %v5933 = vshrl.u32 %v5932, 7
    %v5934 = vsub.s32 6, %v5933
    %v5935 = vrot.slane %v5906, %v5934
    %v5936 = vlaneseq
    %v5937 = vshrl.u32 %v5936, 7
    %v5938 = vsub.s32 7, %v5937
    %v5939 = vrot.slane %v5906, %v5938
    %v5948 = vmul.f32 %v5816, %v5911
    %v5949 = vmul.f32 %v5818, %v5915
    %v5950 = vmul.f32 %v5820, %v5919
    %v5951 = vmul.f32 %v5822, %v5923
    %v5952 = vmul.f32 %v5824, %v5927
    %v5953 = vmul.f32 %v5826, %v5931
    %v5954 = vmul.f32 %v5828, %v5935
    %v5955 = vmul.f32 %v5830, %v5939
    %5957 = vset.pattern.permute.xlu0 0
    %5958 = vperm.xlu0 %5957, %v5948
    %v5959 = vpop.permute.xlu0 %5958
    %5962 = vset.pattern.permute.xlu0 0
    %5963 = vperm.xlu0 %5962, %v5949
    %v5964 = vpop.permute.xlu0 %5963
    %5967 = vset.pattern.permute.xlu0 0
    %5968 = vperm.xlu0 %5967, %v5950
    %v5969 = vpop.permute.xlu0 %5968
    %5972 = vset.pattern.permute.xlu0 0
    %5973 = vperm.xlu0 %5972, %v5951
    %v5974 = vpop.permute.xlu0 %5973
    %5977 = vset.pattern.permute.xlu0 0
    %5978 = vperm.xlu0 %5977, %v5952
    %v5979 = vpop.permute.xlu0 %5978
    %5982 = vset.pattern.permute.xlu0 0
    %5983 = vperm.xlu0 %5982, %v5953
    %v5984 = vpop.permute.xlu0 %5983
    %5987 = vset.pattern.permute.xlu0 0
    %5988 = vperm.xlu0 %5987, %v5954
    %v5989 = vpop.permute.xlu0 %5988
    %5992 = vset.pattern.permute.xlu0 0
    %5993 = vperm.xlu0 %5992, %v5955
    %v5994 = vpop.permute.xlu0 %5993
    %v5996 = vmul.f32 %v5959, %v107
    %v5997 = vmul.f32 %v5964, %v108
    %v5998 = vmul.f32 %v5969, %v109
    %v5999 = vmul.f32 %v5974, %v110
    %v6000 = vmul.f32 %v5979, %v111
    %v6001 = vmul.f32 %v5984, %v112
    %v6002 = vmul.f32 %v5989, %v113
    %v6003 = vmul.f32 %v5994, %v114
    %v6004 = vsel %vm146, %v5996, 0.0
    %v6005 = vrot.slane %v6004, 4
    %v6006 = vadd.f32 %v6004, %v6005
    %v6007 = vrot.slane %v6006, 2
    %v6008 = vadd.f32 %v6006, %v6007
    %v6009 = vrot.slane %v6008, 1
    %v6010 = vadd.f32 %v6008, %v6009
    %v6011 = vsel %vm146, %v5997, 0.0
    %v6012 = vrot.slane %v6011, 4
    %v6013 = vadd.f32 %v6011, %v6012
    %v6014 = vrot.slane %v6013, 2
    %v6015 = vadd.f32 %v6013, %v6014
    %v6016 = vrot.slane %v6015, 1
    %v6017 = vadd.f32 %v6015, %v6016
    %v6018 = vsel %vm146, %v5998, 0.0
    %v6019 = vrot.slane %v6018, 4
    %v6020 = vadd.f32 %v6018, %v6019
    %v6021 = vrot.slane %v6020, 2
    %v6022 = vadd.f32 %v6020, %v6021
    %v6023 = vrot.slane %v6022, 1
    %v6024 = vadd.f32 %v6022, %v6023
    %v6025 = vsel %vm146, %v5999, 0.0
    %v6026 = vrot.slane %v6025, 4
    %v6027 = vadd.f32 %v6025, %v6026
    %v6028 = vrot.slane %v6027, 2
    %v6029 = vadd.f32 %v6027, %v6028
    %v6030 = vrot.slane %v6029, 1
    %v6031 = vadd.f32 %v6029, %v6030
    %v6032 = vsel %vm146, %v6000, 0.0
    %v6033 = vrot.slane %v6032, 4
    %v6034 = vadd.f32 %v6032, %v6033
    %v6035 = vrot.slane %v6034, 2
    %v6036 = vadd.f32 %v6034, %v6035
    %v6037 = vrot.slane %v6036, 1
    %v6038 = vadd.f32 %v6036, %v6037
    %v6039 = vsel %vm146, %v6001, 0.0
    %v6040 = vrot.slane %v6039, 4
    %v6041 = vadd.f32 %v6039, %v6040
    %v6042 = vrot.slane %v6041, 2
    %v6043 = vadd.f32 %v6041, %v6042
    %v6044 = vrot.slane %v6043, 1
    %v6045 = vadd.f32 %v6043, %v6044
    %v6046 = vsel %vm146, %v6002, 0.0
    %v6047 = vrot.slane %v6046, 4
    %v6048 = vadd.f32 %v6046, %v6047
    %v6049 = vrot.slane %v6048, 2
    %v6050 = vadd.f32 %v6048, %v6049
    %v6051 = vrot.slane %v6050, 1
    %v6052 = vadd.f32 %v6050, %v6051
    %v6053 = vsel %vm146, %v6003, 0.0
    %v6054 = vrot.slane %v6053, 4
    %v6055 = vadd.f32 %v6053, %v6054
    %v6056 = vrot.slane %v6055, 2
    %v6057 = vadd.f32 %v6055, %v6056
    %v6058 = vrot.slane %v6057, 1
    %v6059 = vadd.f32 %v6057, %v6058
    %v6068 = vsel %vm560, %v6017, %v6010
    %v6069 = vsel %vm562, %v6024, %v6068
    %v6070 = vsel %vm564, %v6031, %v6069
    %v6071 = vsel %vm566, %v6038, %v6070
    %v6072 = vsel %vm568, %v6045, %v6071
    %v6073 = vsel %vm570, %v6052, %v6072
    %v6074 = vsel %vm572, %v6059, %v6073
    %v6075 = vsel %vm146, %v6074, 0
    %6077 = vmatprep.subr.mxu0 0.0
    %6078 = vmatpush1.msra.mxu0 %v123
    %6079 = vmatprep.subr.mxu0 0.0
    %6080 = vmatpush1.msra.mxu0 %v124
    %6081 = vmatprep.subr.mxu0 0.0
    %6082 = vmatpush1.msra.mxu0 %v125
    %6083 = vmatprep.subr.mxu0 0.0
    %6084 = vmatpush1.msra.mxu0 %v126
    %6085 = vmatprep.subr.mxu0 0.0
    %6086 = vmatpush1.msra.mxu0 0.0
    %6087 = vmatprep.subr.mxu0 0.0
    %6088 = vmatpush1.msra.mxu0 0.0
    %6089 = vmatprep.subr.mxu0 0.0
    %6090 = vmatpush1.msra.mxu0 0.0
    %6091 = vmatprep.subr.mxu0 0.0
    %6092 = vmatpush1.msra.mxu0 0.0
    %6093 = vmatprep.subr.mxu0 0.0
    %6094 = vmatpush1.msra.mxu0 0.0
    %6095 = vmatprep.subr.mxu0 0.0
    %6096 = vmatpush1.msra.mxu0 0.0
    %6097 = vmatprep.subr.mxu0 0.0
    %6098 = vmatpush1.msra.mxu0 0.0
    %6099 = vmatprep.subr.mxu0 0.0
    %6100 = vmatpush1.msra.mxu0 0.0
    %6101 = vmatprep.subr.mxu0 0.0
    %6102 = vmatpush1.msra.mxu0 0.0
    %6103 = vmatprep.subr.mxu0 0.0
    %6104 = vmatpush1.msra.mxu0 0.0
    %6105 = vmatprep.subr.mxu0 0.0
    %6106 = vmatpush1.msra.mxu0 0.0
    %6107 = vmatprep.subr.mxu0 0.0
    %6108 = vmatpush1.msra.mxu0 0.0
    %6109 = vmatprep.subr.mxu0 0.0
    %6110 = vmatpush1.msra.mxu0 0.0
    %6111 = vmatprep.subr.mxu0 0.0
    %6112 = vmatpush1.msra.mxu0 0.0
    %6113 = vmatprep.subr.mxu0 0.0
    %6114 = vmatpush1.msra.mxu0 0.0
    %6115 = vmatprep.subr.mxu0 0.0
    %6116 = vmatpush1.msra.mxu0 0.0
    %6117 = vmatprep.subr.mxu0 0.0
    %6118 = vmatpush1.msra.mxu0 0.0
    %6119 = vmatprep.subr.mxu0 0.0
    %6120 = vmatpush1.msra.mxu0 0.0
    %6121 = vmatprep.subr.mxu0 0.0
    %6122 = vmatpush1.msra.mxu0 0.0
    %6123 = vmatprep.subr.mxu0 0.0
    %6124 = vmatpush1.msra.mxu0 0.0
    %6125 = vmatprep.subr.mxu0 0.0
    %6126 = vmatpush1.msra.mxu0 0.0
    %6127 = vmatprep.subr.mxu0 0.0
    %6128 = vmatpush1.msra.mxu0 0.0
    %6129 = vmatprep.subr.mxu0 0.0
    %6130 = vmatpush1.msra.mxu0 0.0
    %6131 = vmatprep.subr.mxu0 0.0
    %6132 = vmatpush1.msra.mxu0 0.0
    %6133 = vmatprep.subr.mxu0 0.0
    %6134 = vmatpush1.msra.mxu0 0.0
    %6135 = vmatprep.subr.mxu0 0.0
    %6136 = vmatpush1.msra.mxu0 0.0
    %6137 = vmatprep.subr.mxu0 0.0
    %6138 = vmatpush1.msra.mxu0 0.0
    %6139 = vmatprep.subr.mxu0 0.0
    %6140 = vmatpush1.msra.mxu0 0.0
    %6141 = vmatprep.mubr.f32.mxu0 0.0
    %6142 = vmatmul.mubr.f32.gmra.mrb[0].mxu0 %v6075
    %v6143 = vpop.f32.mrb[0].mxu0
    %v6144 = vadd.f32 0.0, %v6143
    %v6145 = vpop.f32.mrb[0].mxu0
    %6146 = vdwg.mxu0
    %6147 = vrot.lane.b32.xlu0 %v5576, 32
    %v6148 = vpop.permute.xlu0 %6147
    %v6149 = vsel %vm146, %v6148, 0
    %6151 = vmatprep.subr.mxu0 0.0
    %6152 = vmatpush1.msra.mxu0 %v119
    %6153 = vmatprep.subr.mxu0 0.0
    %6154 = vmatpush1.msra.mxu0 %v120
    %6155 = vmatprep.subr.mxu0 0.0
    %6156 = vmatpush1.msra.mxu0 %v121
    %6157 = vmatprep.subr.mxu0 0.0
    %6158 = vmatpush1.msra.mxu0 %v122
    %6159 = vmatprep.subr.mxu0 0.0
    %6160 = vmatpush1.msra.mxu0 0.0
    %6161 = vmatprep.subr.mxu0 0.0
    %6162 = vmatpush1.msra.mxu0 0.0
    %6163 = vmatprep.subr.mxu0 0.0
    %6164 = vmatpush1.msra.mxu0 0.0
    %6165 = vmatprep.subr.mxu0 0.0
    %6166 = vmatpush1.msra.mxu0 0.0
    %6167 = vmatprep.subr.mxu0 0.0
    %6168 = vmatpush1.msra.mxu0 0.0
    %6169 = vmatprep.subr.mxu0 0.0
    %6170 = vmatpush1.msra.mxu0 0.0
    %6171 = vmatprep.subr.mxu0 0.0
    %6172 = vmatpush1.msra.mxu0 0.0
    %6173 = vmatprep.subr.mxu0 0.0
    %6174 = vmatpush1.msra.mxu0 0.0
    %6175 = vmatprep.subr.mxu0 0.0
    %6176 = vmatpush1.msra.mxu0 0.0
    %6177 = vmatprep.subr.mxu0 0.0
    %6178 = vmatpush1.msra.mxu0 0.0
    %6179 = vmatprep.subr.mxu0 0.0
    %6180 = vmatpush1.msra.mxu0 0.0
    %6181 = vmatprep.subr.mxu0 0.0
    %6182 = vmatpush1.msra.mxu0 0.0
    %6183 = vmatprep.subr.mxu0 0.0
    %6184 = vmatpush1.msra.mxu0 0.0
    %6185 = vmatprep.subr.mxu0 0.0
    %6186 = vmatpush1.msra.mxu0 0.0
    %6187 = vmatprep.subr.mxu0 0.0
    %6188 = vmatpush1.msra.mxu0 0.0
    %6189 = vmatprep.subr.mxu0 0.0
    %6190 = vmatpush1.msra.mxu0 0.0
    %6191 = vmatprep.subr.mxu0 0.0
    %6192 = vmatpush1.msra.mxu0 0.0
    %6193 = vmatprep.subr.mxu0 0.0
    %6194 = vmatpush1.msra.mxu0 0.0
    %6195 = vmatprep.subr.mxu0 0.0
    %6196 = vmatpush1.msra.mxu0 0.0
    %6197 = vmatprep.subr.mxu0 0.0
    %6198 = vmatpush1.msra.mxu0 0.0
    %6199 = vmatprep.subr.mxu0 0.0
    %6200 = vmatpush1.msra.mxu0 0.0
    %6201 = vmatprep.subr.mxu0 0.0
    %6202 = vmatpush1.msra.mxu0 0.0
    %6203 = vmatprep.subr.mxu0 0.0
    %6204 = vmatpush1.msra.mxu0 0.0
    %6205 = vmatprep.subr.mxu0 0.0
    %6206 = vmatpush1.msra.mxu0 0.0
    %6207 = vmatprep.subr.mxu0 0.0
    %6208 = vmatpush1.msra.mxu0 0.0
    %6209 = vmatprep.subr.mxu0 0.0
    %6210 = vmatpush1.msra.mxu0 0.0
    %6211 = vmatprep.subr.mxu0 0.0
    %6212 = vmatpush1.msra.mxu0 0.0
    %6213 = vmatprep.subr.mxu0 0.0
    %6214 = vmatpush1.msra.mxu0 0.0
    %6215 = vmatprep.mubr.f32.mxu0 0.0
    %6216 = vmatmul.mubr.f32.gmra.mrb[0].mxu0 %v6149
    %v6217 = vpop.f32.mrb[0].mxu0
    %v6218 = vadd.f32 %v6144, %v6217
    %v6219 = vpop.f32.mrb[0].mxu0
    %6220 = vdwg.mxu0
    %v6221 = vtanh.pop %v6218
    %6222 = vst.msk [vmem:[#allocation2 + $0x38] sm:$0xff] %vm146, %v6221
    %6224 = vst.msk [vmem:[#allocation13] sm:$0xff] %vm146, %v6148
    %6226 = vrot.lane.b32.xlu0 %v5570, 96
    %v6227 = vpop.permute.xlu0 %6226
    %6229 = vst.msk [vmem:[#allocation15] sm:$0xff] %vm146, %v6227
    %v6230 = vld [vmem:[#allocation2] sm:$0xff]
    %v6231 = vld [vmem:[#allocation2 + $0x8] sm:$0xff]
    %v6232 = vld [vmem:[#allocation2 + $0x10] sm:$0xff]
    %v6233 = vld [vmem:[#allocation2 + $0x18] sm:$0xff]
    %v6234 = vld [vmem:[#allocation2 + $0x20] sm:$0xff]
    %v6235 = vld [vmem:[#allocation2 + $0x28] sm:$0xff]
    %v6236 = vld [vmem:[#allocation2 + $0x30] sm:$0xff]
    %v6237 = vld [vmem:[#allocation2 + $0x38] sm:$0xff]
    %v6238 = vld [vmem:[%s9] sm:$0xff]
    %v6239 = vld [vmem:[%s9 + $0x8] sm:$0xff]
    %v6240 = vld [vmem:[%s9 + $0x10] sm:$0xff]
    %v6241 = vld [vmem:[%s9 + $0x18] sm:$0xff]
    %v6242 = vld [vmem:[%s10] sm:$0x1]
    %v6244 = vlaneseq
    %v6245 = vshrl.u32 %v6244, 7
    %v6246 = vsub.s32 0, %v6245
    %v6247 = vrot.slane %v6242, %v6246
    %v6250 = vsel %vm146, %v6230, 0
    %v6253 = vsel %vm146, %v6231, 0
    %v6256 = vsel %vm146, %v6232, 0
    %v6259 = vsel %vm146, %v6233, 0
    %v6262 = vsel %vm146, %v6234, 0
    %v6265 = vsel %vm146, %v6235, 0
    %v6268 = vsel %vm146, %v6236, 0
    %v6271 = vsel %vm146, %v6237, 0
    %6273 = vmatprep.subr.mxu0 0.0
    %6274 = vmatpush1.msra.mxu0 %v6238
    %6275 = vmatprep.subr.mxu0 0.0
    %6276 = vmatpush1.msra.mxu0 %v6239
    %6277 = vmatprep.subr.mxu0 0.0
    %6278 = vmatpush1.msra.mxu0 %v6240
    %6279 = vmatprep.subr.mxu0 0.0
    %6280 = vmatpush1.msra.mxu0 %v6241
    %6281 = vmatprep.subr.mxu0 0.0
    %6282 = vmatpush1.msra.mxu0 0.0
    %6283 = vmatprep.subr.mxu0 0.0
    %6284 = vmatpush1.msra.mxu0 0.0
    %6285 = vmatprep.subr.mxu0 0.0
    %6286 = vmatpush1.msra.mxu0 0.0
    %6287 = vmatprep.subr.mxu0 0.0
    %6288 = vmatpush1.msra.mxu0 0.0
    %6289 = vmatprep.subr.mxu0 0.0
    %6290 = vmatpush1.msra.mxu0 0.0
    %6291 = vmatprep.subr.mxu0 0.0
    %6292 = vmatpush1.msra.mxu0 0.0
    %6293 = vmatprep.subr.mxu0 0.0
    %6294 = vmatpush1.msra.mxu0 0.0
    %6295 = vmatprep.subr.mxu0 0.0
    %6296 = vmatpush1.msra.mxu0 0.0
    %6297 = vmatprep.subr.mxu0 0.0
    %6298 = vmatpush1.msra.mxu0 0.0
    %6299 = vmatprep.subr.mxu0 0.0
    %6300 = vmatpush1.msra.mxu0 0.0
    %6301 = vmatprep.subr.mxu0 0.0
    %6302 = vmatpush1.msra.mxu0 0.0
    %6303 = vmatprep.subr.mxu0 0.0
    %6304 = vmatpush1.msra.mxu0 0.0
    %6305 = vmatprep.subr.mxu0 0.0
    %6306 = vmatpush1.msra.mxu0 0.0
    %6307 = vmatprep.subr.mxu0 0.0
    %6308 = vmatpush1.msra.mxu0 0.0
    %6309 = vmatprep.subr.mxu0 0.0
    %6310 = vmatpush1.msra.mxu0 0.0
    %6311 = vmatprep.subr.mxu0 0.0
    %6312 = vmatpush1.msra.mxu0 0.0
    %6313 = vmatprep.subr.mxu0 0.0
    %6314 = vmatpush1.msra.mxu0 0.0
    %6315 = vmatprep.subr.mxu0 0.0
    %6316 = vmatpush1.msra.mxu0 0.0
    %6317 = vmatprep.subr.mxu0 0.0
    %6318 = vmatpush1.msra.mxu0 0.0
    %6319 = vmatprep.subr.mxu0 0.0
    %6320 = vmatpush1.msra.mxu0 0.0
    %6321 = vmatprep.subr.mxu0 0.0
    %6322 = vmatpush1.msra.mxu0 0.0
    %6323 = vmatprep.subr.mxu0 0.0
    %6324 = vmatpush1.msra.mxu0 0.0
    %6325 = vmatprep.subr.mxu0 0.0
    %6326 = vmatpush1.msra.mxu0 0.0
    %6327 = vmatprep.subr.mxu0 0.0
    %6328 = vmatpush1.msra.mxu0 0.0
    %6329 = vmatprep.subr.mxu0 0.0
    %6330 = vmatpush1.msra.mxu0 0.0
    %6331 = vmatprep.subr.mxu0 0.0
    %6332 = vmatpush1.msra.mxu0 0.0
    %6333 = vmatprep.subr.mxu0 0.0
    %6334 = vmatpush1.msra.mxu0 0.0
    %6335 = vmatprep.subr.mxu0 0.0
    %6336 = vmatpush1.msra.mxu0 0.0
    %6337 = vmatprep.mubr.f32.mxu0 0.0
    %6338 = vmatmul.mubr.f32.gmra.mrb[0].mxu0 %v6250
    %v6339 = vpop.f32.mrb[0].mxu0
    %v6340 = vadd.f32 %v6247, %v6339
    %v6341 = vpop.f32.mrb[0].mxu0
    %6342 = vmatprep.mubr.f32.mxu0 0.0
    %6343 = vmatmul.mubr.f32.gmra.mrb[0].mxu0 %v6253
    %v6344 = vpop.f32.mrb[0].mxu0
    %v6345 = vadd.f32 %v6247, %v6344
    %v6346 = vpop.f32.mrb[0].mxu0
    %6347 = vmatprep.mubr.f32.mxu0 0.0
    %6348 = vmatmul.mubr.f32.gmra.mrb[0].mxu0 %v6256
    %v6349 = vpop.f32.mrb[0].mxu0
    %v6350 = vadd.f32 %v6247, %v6349
    %v6351 = vpop.f32.mrb[0].mxu0
    %6352 = vmatprep.mubr.f32.mxu0 0.0
    %6353 = vmatmul.mubr.f32.gmra.mrb[0].mxu0 %v6259
    %v6354 = vpop.f32.mrb[0].mxu0
    %v6355 = vadd.f32 %v6247, %v6354
    %v6356 = vpop.f32.mrb[0].mxu0
    %6357 = vmatprep.mubr.f32.mxu0 0.0
    %6358 = vmatmul.mubr.f32.gmra.mrb[0].mxu0 %v6262
    %v6359 = vpop.f32.mrb[0].mxu0
    %v6360 = vadd.f32 %v6247, %v6359
    %v6361 = vpop.f32.mrb[0].mxu0
    %6362 = vmatprep.mubr.f32.mxu0 0.0
    %6363 = vmatmul.mubr.f32.gmra.mrb[0].mxu0 %v6265
    %v6364 = vpop.f32.mrb[0].mxu0
    %v6365 = vadd.f32 %v6247, %v6364
    %v6366 = vpop.f32.mrb[0].mxu0
    %6367 = vmatprep.mubr.f32.mxu0 0.0
    %6368 = vmatmul.mubr.f32.gmra.mrb[0].mxu0 %v6268
    %v6369 = vpop.f32.mrb[0].mxu0
    %v6370 = vadd.f32 %v6247, %v6369
    %v6371 = vpop.f32.mrb[0].mxu0
    %6372 = vmatprep.mubr.f32.mxu0 0.0
    %6373 = vmatmul.mubr.f32.gmra.mrb[0].mxu0 %v6271
    %v6374 = vpop.f32.mrb[0].mxu0
    %v6375 = vadd.f32 %v6247, %v6374
    %v6376 = vpop.f32.mrb[0].mxu0
    %6377 = vdwg.mxu0
    %6378 = vmax.xlane.f32.xlu0 %v6340
    %v6379 = vpop.xlane.xlu0 %6378
    %6380 = vmax.xlane.f32.xlu0 %v6345
    %v6381 = vpop.xlane.xlu0 %6380
    %6382 = vmax.xlane.f32.xlu0 %v6350
    %v6383 = vpop.xlane.xlu0 %6382
    %6384 = vmax.xlane.f32.xlu0 %v6355
    %v6385 = vpop.xlane.xlu0 %6384
    %6386 = vmax.xlane.f32.xlu0 %v6360
    %v6387 = vpop.xlane.xlu0 %6386
    %6388 = vmax.xlane.f32.xlu0 %v6365
    %v6389 = vpop.xlane.xlu0 %6388
    %6390 = vmax.xlane.f32.xlu0 %v6370
    %v6391 = vpop.xlane.xlu0 %6390
    %6392 = vmax.xlane.f32.xlu0 %v6375
    %v6393 = vpop.xlane.xlu0 %6392
    %v6394 = vsub.f32 %v6340, %v6379
    %v6395 = vsub.f32 %v6345, %v6381
    %v6396 = vsub.f32 %v6350, %v6383
    %v6397 = vsub.f32 %v6355, %v6385
    %v6398 = vsub.f32 %v6360, %v6387
    %v6399 = vsub.f32 %v6365, %v6389
    %v6400 = vsub.f32 %v6370, %v6391
    %v6401 = vsub.f32 %v6375, %v6393
    %v6402 = vmul.f32 %v6394, 1.442695
    %v6403 = vpow.pop %v6402
    %v6404 = vmul.f32 %v6395, 1.442695
    %v6405 = vpow.pop %v6404
    %v6406 = vmul.f32 %v6396, 1.442695
    %v6407 = vpow.pop %v6406
    %v6408 = vmul.f32 %v6397, 1.442695
    %v6409 = vpow.pop %v6408
    %v6410 = vmul.f32 %v6398, 1.442695
    %v6411 = vpow.pop %v6410
    %v6412 = vmul.f32 %v6399, 1.442695
    %v6413 = vpow.pop %v6412
    %v6414 = vmul.f32 %v6400, 1.442695
    %v6415 = vpow.pop %v6414
    %v6416 = vmul.f32 %v6401, 1.442695
    %v6417 = vpow.pop %v6416
    %6418 = vadd.xlane.f32.xlu0 %v6403
    %v6419 = vpop.xlane.xlu0 %6418
    %6420 = vadd.xlane.f32.xlu0 %v6405
    %v6421 = vpop.xlane.xlu0 %6420
    %6422 = vadd.xlane.f32.xlu0 %v6407
    %v6423 = vpop.xlane.xlu0 %6422
    %6424 = vadd.xlane.f32.xlu0 %v6409
    %v6425 = vpop.xlane.xlu0 %6424
    %6426 = vadd.xlane.f32.xlu0 %v6411
    %v6427 = vpop.xlane.xlu0 %6426
    %6428 = vadd.xlane.f32.xlu0 %v6413
    %v6429 = vpop.xlane.xlu0 %6428
    %6430 = vadd.xlane.f32.xlu0 %v6415
    %v6431 = vpop.xlane.xlu0 %6430
    %6432 = vadd.xlane.f32.xlu0 %v6417
    %v6433 = vpop.xlane.xlu0 %6432
    %v6434 = vlog2.pop %v6419
    %v6435 = vmul.f32 %v6434, 0.6931472
    %v6436 = vlog2.pop %v6421
    %v6437 = vmul.f32 %v6436, 0.6931472
    %v6438 = vlog2.pop %v6423
    %v6439 = vmul.f32 %v6438, 0.6931472
    %v6440 = vlog2.pop %v6425
    %v6441 = vmul.f32 %v6440, 0.6931472
    %v6442 = vlog2.pop %v6427
    %v6443 = vmul.f32 %v6442, 0.6931472
    %v6444 = vlog2.pop %v6429
    %v6445 = vmul.f32 %v6444, 0.6931472
    %v6446 = vlog2.pop %v6431
    %v6447 = vmul.f32 %v6446, 0.6931472
    %v6448 = vlog2.pop %v6433
    %v6449 = vmul.f32 %v6448, 0.6931472
    %v6450 = vsub.f32 %v6394, %v6435
    %v6451 = vsub.f32 %v6395, %v6437
    %v6452 = vsub.f32 %v6396, %v6439
    %v6453 = vsub.f32 %v6397, %v6441
    %v6454 = vsub.f32 %v6398, %v6443
    %v6455 = vsub.f32 %v6399, %v6445
    %v6456 = vsub.f32 %v6400, %v6447
    %v6457 = vsub.f32 %v6401, %v6449
    %6458 = vst [vmem:[#allocation12] sm:$0xff] %v6450
    %6459 = vst [vmem:[#allocation12 + $0x8] sm:$0xff] %v6451
    %6460 = vst [vmem:[#allocation12 + $0x10] sm:$0xff] %v6452
    %6461 = vst [vmem:[#allocation12 + $0x18] sm:$0xff] %v6453
    %6462 = vst [vmem:[#allocation12 + $0x20] sm:$0xff] %v6454
    %6463 = vst [vmem:[#allocation12 + $0x28] sm:$0xff] %v6455
    %6464 = vst [vmem:[#allocation12 + $0x30] sm:$0xff] %v6456
    %6465 = vst [vmem:[#allocation12 + $0x38] sm:$0xff] %v6457
    // Predicated region
    $region66: #{tpu_custom_call.1} parent=1 // pred_check
      _
    $region67: #{tpu_custom_call.1} parent=1 // pred_check_branch
      %6467 = sbr.rel (0) target = $region69
    $region68: #{tpu_custom_call.1} parent=1 // pred_region
      %s6469 = ssub.s32 1024, 1024
      %6470 = vsyncadd [#allocation5], %s6469
      %s6471 = sshll.u32 [#allocation12], 4
      %s6472 = int_to_ptr.vmem [resolvable:$true] %s6471
      %6477 = dma.vmem_to_hbm [thread:$0]  %s6472, 1024, %s11, [#allocation5], 128, 128, 8
    $region69: #{tpu_custom_call.1} parent=1 // pred_fallthru
      _
    // Predicated region
    $region70: #{tpu_custom_call.1} parent=1 // pred_check
      _
    $region71: #{tpu_custom_call.1} parent=1 // pred_check_branch
      %6479 = sbr.rel (0) target = $region73
    $region72: #{tpu_custom_call.1} parent=1 // pred_region
      %s6481 = ssub.s32 128, 128
      %6482 = vsyncadd [#allocation14], %s6481
      %s6484 = sshll.u32 [#allocation13], 4
      %s6485 = int_to_ptr.vmem [resolvable:$true] %s6484
      %6487 = dma.vmem_to_hbm [thread:$0]  %s6485, 128, %s12, [#allocation14]
    $region73: #{tpu_custom_call.1} parent=1 // pred_fallthru
      _
    // Predicated region
    $region74: #{tpu_custom_call.1} parent=1 // pred_check
      _
    $region75: #{tpu_custom_call.1} parent=1 // pred_check_branch
      %6489 = sbr.rel (0) target = $region77
    $region76: #{tpu_custom_call.1} parent=1 // pred_region
      %s6491 = ssub.s32 128, 128
      %6492 = vsyncadd [#allocation14], %s6491
      %s6494 = sshll.u32 [#allocation15], 4
      %s6495 = int_to_ptr.vmem [resolvable:$true] %s6494
      %6497 = dma.vmem_to_hbm [thread:$0]  %s6495, 128, %s13, [#allocation14]
    $region77: #{tpu_custom_call.1} parent=1 // pred_fallthru
      _
    // Predicated region
    $region78: #{tpu_custom_call.1} parent=1 // pred_check
      _
    $region79: #{tpu_custom_call.1} parent=1 // pred_check_branch
      %6499 = sbr.rel (0) target = $region81
    $region80: #{tpu_custom_call.1} parent=1 // pred_region
      %6500 = dma.done [#allocation5], 1024
    $region81: #{tpu_custom_call.1} parent=1 // pred_fallthru
      _
    // Predicated region
    $region82: #{tpu_custom_call.1} parent=1 // pred_check
      _
    $region83: #{tpu_custom_call.1} parent=1 // pred_check_branch
      %6502 = sbr.rel (0) target = $region85
    $region84: #{tpu_custom_call.1} parent=1 // pred_region
      %6503 = dma.done [#allocation14], 128
    $region85: #{tpu_custom_call.1} parent=1 // pred_fallthru
      _
    // Predicated region
    $region86: #{tpu_custom_call.1} parent=1 // pred_check
      _
    $region87: #{tpu_custom_call.1} parent=1 // pred_check_branch
      %6505 = sbr.rel (0) target = $region89
    $region88: #{tpu_custom_call.1} parent=1 // pred_region
      %6506 = dma.done [#allocation14], 128
    $region89: #{tpu_custom_call.1} parent=1 // pred_fallthru
      _
    %6507 = vsyncpa [#allocation4], 1
    %6508 = vsyncpa [#allocation7], 1
    %6509 = vsyncpa [#allocation10], 1
    %6510 = vsyncpa [#allocation5], 1
    %6511 = vsyncpa [#allocation14], 1

</llo_original>
